<compile_context>
chip_gen: v7x
topology: tpu7x:2x2x1
jax: 0.10.0
libtpu: 0.0.40
codegen_flags: <defaults>
</compile_context>

<pallas_src>
import functools

import jax
import jax.numpy as jnp
from jax import lax
from jax.experimental import pallas as pl
from jax.experimental.pallas import tpu as pltpu


# ------------------------------ fused BasicBlock kernel ------------------------------
def fused_basic_block_kernel(x_ref, hh_ref, ww_ref, w1_ref, w2_ref,
                             g1_ref, b1_ref, g2_ref, b2_ref,
                             sgw_ref, sgb_ref, m_ref, mt_ref,
                             sb_ref, sbt_ref, o_ref, *, H, W, groups):
    # x_ref  : (BHW, C)  f32   block input, NHWC flattened in the wrapper (also residual)
    # hh/ww  : (BHW, C)  i32   per-row spatial h / w coordinates (conv boundary masks)
    # w1/w2  : (9C, C)   bf16  conv weights, (kh, kw, cin)-major rows
    # g*/b*  : (1, C)    f32   BN affine params
    # sgw/sgb: (1, G)    f32   SGE weight / bias (per group)
    # m/mt   : (C, G)/(G, C)   0/1 channel->group selectors (unused when C == G)
    # sb/sbt : (B, BHW)/(BHW, B) 0/1 row->batch selectors (per-batch stats via MXU)
    # o_ref  : (BHW, C)  f32   block output
    BHW, C = o_ref.shape
    HW = H * W
    G = groups
    cg = C // G
    eps = 1e-5

    x = x_ref[...]
    hh = hh_ref[...]
    ww = ww_ref[...]

    def conv3x3(src):
        # In-register im2col: for tap (dh, dw) the flattened source row is i + dh*W + dw,
        # so each tap is one sublane rotation (XLU) + an H/W-boundary mask (VPU select).
        # One lane concat -> (BHW, 9C) bf16 -> single deep MXU matmul (f32 accumulate).
        cols = []
        for dh in (-1, 0, 1):
            for dw in (-1, 0, 1):
                off = dh * W + dw
                tap = src if off == 0 else pltpu.roll(src, (-off) % BHW, axis=0)
                if off != 0:
                    valid = ((hh + dh >= 0) & (hh + dh < H) &
                             (ww + dw >= 0) & (ww + dw < W))
                    tap = jnp.where(valid, tap, 0.0)
                cols.append(tap.astype(jnp.bfloat16))
        return jnp.concatenate(cols, axis=-1)                       # (BHW, 9C) bf16

    def batchnorm(v, g_ref, b_ref):
        # training-mode batch stats over N*H*W; two-pass centered variance (stable)
        mean = jnp.mean(v, axis=0, keepdims=True)
        d = v - mean
        var = jnp.mean(d * d, axis=0, keepdims=True)
        return d * (g_ref[...] * lax.rsqrt(var + eps)) + b_ref[...]

    # ---- conv1 (one K=9C MXU matmul) -> BN1 -> ReLU ----------------------------------
    h = jnp.dot(conv3x3(x), w1_ref[...], preferred_element_type=jnp.float32)
    h1 = jnp.maximum(batchnorm(h, g1_ref, b1_ref), 0.0)

    # ---- conv2 (one K=9C MXU matmul) -> BN2 ------------------------------------------
    h2 = jnp.dot(conv3x3(h1), w2_ref[...], preferred_element_type=jnp.float32)
    h2 = batchnorm(h2, g2_ref, b2_ref)

    # ---- SpatialGroupEnhance: per-batch spatial stats via 0/1 selector matmuls --------
    sb = sb_ref[...]                                                # (B, BHW)
    sbt = sbt_ref[...]                                              # (BHW, B)
    inv_hw = 1.0 / HW
    # avg_pool(x): per-(batch, channel) spatial mean, broadcast back to every pixel.
    avg = jnp.dot(sbt, jnp.dot(sb, h2, preferred_element_type=jnp.float32),
                  preferred_element_type=jnp.float32) * inv_hw      # (BHW, C)
    prod = h2 * avg                                                 # x * avg_pool(x)
    # group sum over channels-in-group (identity shortcut when groups == C)
    xn = prod if cg == 1 else jnp.dot(prod, m_ref[...],
                                      preferred_element_type=jnp.float32)   # (BHW, G)
    mu = jnp.dot(sb, xn, preferred_element_type=jnp.float32) * inv_hw        # (B, G)
    t0 = xn - jnp.dot(sbt, mu, preferred_element_type=jnp.float32)
    var_t = jnp.dot(sb, t0 * t0, preferred_element_type=jnp.float32) / (HW - 1)  # ddof=1
    inv_std = pl.reciprocal(jnp.sqrt(var_t) + eps, approx=True)     # EUP, ~1e-3 rel err
    t = t0 * jnp.dot(sbt, inv_std, preferred_element_type=jnp.float32)
    t = t * sgw_ref[...] + sgb_ref[...]
    s = jax.nn.sigmoid(t)                                           # (BHW, G)
    gate = s if cg == 1 else jnp.dot(s, mt_ref[...],
                                     preferred_element_type=jnp.float32)    # (BHW, C)

    # ---- residual add + ReLU -----------------------------------------------------------
    o_ref[...] = jnp.maximum(h2 * gate + x, 0.0)


# ------------------------------ wrapper --------------------------------------------------
def basic_block_forward(x_nchw, params, groups=16):
    # x_nchw: (B, C, H, W) like PyTorch; inplanes == planes, stride=1, downsample=None.
    B, C, H, W = x_nchw.shape
    G = groups
    cg = C // G
    HW = H * W
    BHW = B * HW

    # Wrapper-side layout plumbing (free XLA ops) keeps the kernel reshape-free.
    x2d = jnp.transpose(x_nchw, (0, 2, 3, 1)).reshape(BHW, C).astype(jnp.float32)
    # OIHW -> HWIO -> (9*Cin, Cout), (kh, kw)-major with cin fastest (matches patch order).
    w1 = jnp.transpose(params["w1"], (2, 3, 1, 0)).reshape(9 * C, C).astype(jnp.bfloat16)
    w2 = jnp.transpose(params["w2"], (2, 3, 1, 0)).reshape(9 * C, C).astype(jnp.bfloat16)
    # Per-row spatial coordinates (broadcast over lanes) for the conv boundary masks.
    row = jnp.arange(BHW, dtype=jnp.int32)
    hh = jnp.broadcast_to(((row % HW) // W)[:, None], (BHW, C))
    ww = jnp.broadcast_to((row % W)[:, None], (BHW, C))
    # 0/1 selectors: channel->group membership and row->batch membership.
    m = (jnp.arange(C)[:, None] // cg == jnp.arange(G)[None, :]).astype(jnp.float32)
    sb = (jnp.arange(B)[:, None] == (row[None, :] // HW)).astype(jnp.float32)

    kernel = functools.partial(fused_basic_block_kernel, H=H, W=W, groups=G)
    out2d = pl.pallas_call(
        kernel,
        out_shape=jax.ShapeDtypeStruct((BHW, C), jnp.float32),
    )(x2d, hh, ww, w1, w2,
      params["gamma1"].reshape(1, C).astype(jnp.float32),
      params["beta1"].reshape(1, C).astype(jnp.float32),
      params["gamma2"].reshape(1, C).astype(jnp.float32),
      params["beta2"].reshape(1, C).astype(jnp.float32),
      params["sge_w"].reshape(1, G).astype(jnp.float32),
      params["sge_b"].reshape(1, G).astype(jnp.float32),
      m, m.T, sb, sb.T)
    return jnp.transpose(out2d.reshape(B, H, W, C), (0, 3, 1, 2))    # NHWC -> NCHW


# ------------------------------ pure-JAX reference (mirrors PyTorch) ----------------------
def ref_forward(x, w1, w2, g1, b1, g2, b2, sge_w, sge_b, groups=16):
    def conv(x, w):
        return lax.conv_general_dilated(x, w, (1, 1), ((1, 1), (1, 1)),
                                        dimension_numbers=("NCHW", "OIHW", "NCHW"))

    def bn(x, gamma, beta, eps=1e-5):
        mean = jnp.mean(x, axis=(0, 2, 3), keepdims=True)
        var = jnp.mean((x - mean) ** 2, axis=(0, 2, 3), keepdims=True)
        return ((x - mean) / jnp.sqrt(var + eps)) * gamma.reshape(1, -1, 1, 1) \
            + beta.reshape(1, -1, 1, 1)

    def sge_ref(x, w, b):
        B, C, H, W = x.shape
        xg = x.reshape(B * groups, C // groups, H, W)
        avg = jnp.mean(xg, axis=(2, 3), keepdims=True)
        xn = jnp.sum(xg * avg, axis=1, keepdims=True)
        t = xn.reshape(B * groups, -1)
        t = t - jnp.mean(t, axis=1, keepdims=True)
        std = jnp.std(t, axis=1, keepdims=True, ddof=1) + 1e-5
        t = t / std
        t = t.reshape(B, groups, H, W) * w + b
        t = t.reshape(B * groups, 1, H, W)
        return (xg * jax.nn.sigmoid(t)).reshape(B, C, H, W)

    out = jax.nn.relu(bn(conv(x, w1), g1, b1))
    out = bn(conv(out, w2), g2, b2)
    out = sge_ref(out, sge_w, sge_b)
    return jax.nn.relu(out + x)


# ------------------------------ test ------------------------------------------------------
if __name__ == "__main__":
    def run_case(case_key, C):
        B, H, W, G = 2, 8, 8, 16
        ks = jax.random.split(case_key, 8)
        x = jax.random.normal(ks[0], (B, C, H, W), jnp.float32)
        w1 = 0.1 * jax.random.normal(ks[1], (C, C, 3, 3), jnp.float32)
        w2 = 0.1 * jax.random.normal(ks[2], (C, C, 3, 3), jnp.float32)
        gamma1 = 1.0 + 0.1 * jax.random.normal(ks[3], (C,), jnp.float32)
        beta1 = 0.1 * jax.random.normal(ks[4], (C,), jnp.float32)
        gamma2 = 1.0 + 0.1 * jax.random.normal(ks[5], (C,), jnp.float32)
        beta2 = 0.5 + 0.1 * jax.random.normal(ks[6], (C,), jnp.float32)
        # PyTorch init is weight=zeros, bias=ones; perturb the weight so the SGE
        # normalization path is actually exercised numerically.
        sge_w = 0.3 * jax.random.normal(ks[7], (1, G, 1, 1), jnp.float32)
        sge_b = jnp.ones((1, G, 1, 1), jnp.float32)

        params = dict(w1=w1, w2=w2, gamma1=gamma1, beta1=beta1,
                      gamma2=gamma2, beta2=beta2, sge_w=sge_w, sge_b=sge_b)

        fwd = jax.jit(functools.partial(basic_block_forward, groups=G))
        out = jax.block_until_ready(fwd(x, params))
        ref = ref_forward(x, w1, w2, gamma1, beta1, gamma2, beta2,
                          sge_w, sge_b, groups=G)
        assert out.shape == ref.shape == (B, C, H, W)
        err = float(jnp.max(jnp.abs(out - ref)))
        assert err < 5e-2, f"C={C}: max abs err {err}"

    k32, k16 = jax.random.split(jax.random.PRNGKey(0), 2)
    run_case(k32, 32)   # channels-per-group = 2 -> selector-matmul SGE path
    run_case(k16, 16)   # channels-per-group = 1 -> identity-shortcut SGE path
    print("KERNEL_OK")
</pallas_src>

<mosaic_0001>
module attributes {stable_mosaic.version = 11 : i64} {
  func.func @fused_basic_block_kernel(%arg0: memref<128x32xf32, #tpu.memory_space<vmem>>, %arg1: memref<128x32xi32, #tpu.memory_space<vmem>>, %arg2: memref<128x32xi32, #tpu.memory_space<vmem>>, %arg3: memref<288x32xbf16, #tpu.memory_space<vmem>>, %arg4: memref<288x32xbf16, #tpu.memory_space<vmem>>, %arg5: memref<1x32xf32, #tpu.memory_space<vmem>>, %arg6: memref<1x32xf32, #tpu.memory_space<vmem>>, %arg7: memref<1x32xf32, #tpu.memory_space<vmem>>, %arg8: memref<1x32xf32, #tpu.memory_space<vmem>>, %arg9: memref<1x16xf32, #tpu.memory_space<vmem>>, %arg10: memref<1x16xf32, #tpu.memory_space<vmem>>, %arg11: memref<32x16xf32, #tpu.memory_space<vmem>>, %arg12: memref<16x32xf32, #tpu.memory_space<vmem>>, %arg13: memref<2x128xf32, #tpu.memory_space<vmem>>, %arg14: memref<128x2xf32, #tpu.memory_space<vmem>>, %arg15: memref<128x32xf32, #tpu.memory_space<vmem>>) attributes {dimension_semantics = [], scalar_prefetch = 0 : i64, scratch_operands = 0 : i64, tpu.core_type = #tpu.core_type<tc>} {
    %c0 = arith.constant 0 : index
    %c0_0 = arith.constant 0 : index
    %0 = vector.load %arg0[%c0, %c0_0] : memref<128x32xf32, #tpu.memory_space<vmem>>, vector<128x32xf32>
    %c0_1 = arith.constant 0 : index
    %c0_2 = arith.constant 0 : index
    %1 = vector.load %arg1[%c0_1, %c0_2] : memref<128x32xi32, #tpu.memory_space<vmem>>, vector<128x32xi32>
    %c0_3 = arith.constant 0 : index
    %c0_4 = arith.constant 0 : index
    %2 = vector.load %arg2[%c0_3, %c0_4] : memref<128x32xi32, #tpu.memory_space<vmem>>, vector<128x32xi32>
    %c9_i32 = arith.constant 9 : i32
    %3 = tpu.dynamic_rotate %0 by %c9_i32 dim 0 : vector<128x32xf32>, i32 -> vector<128x32xf32>
    %c-1_i32 = arith.constant -1 : i32
    %4 = vector.broadcast %c-1_i32 : i32 to vector<128x32xi32>
    %5 = arith.addi %1, %4 : vector<128x32xi32>
    %c0_i32 = arith.constant 0 : i32
    %6 = vector.broadcast %c0_i32 : i32 to vector<128x32xi32>
    %7 = arith.cmpi sge, %5, %6 : vector<128x32xi32>
    %c-1_i32_5 = arith.constant -1 : i32
    %8 = vector.broadcast %c-1_i32_5 : i32 to vector<128x32xi32>
    %9 = arith.addi %1, %8 : vector<128x32xi32>
    %c8_i32 = arith.constant 8 : i32
    %10 = vector.broadcast %c8_i32 : i32 to vector<128x32xi32>
    %11 = arith.cmpi slt, %9, %10 : vector<128x32xi32>
    %12 = arith.andi %7, %11 : vector<128x32xi1>
    %c-1_i32_6 = arith.constant -1 : i32
    %13 = vector.broadcast %c-1_i32_6 : i32 to vector<128x32xi32>
    %14 = arith.addi %2, %13 : vector<128x32xi32>
    %c0_i32_7 = arith.constant 0 : i32
    %15 = vector.broadcast %c0_i32_7 : i32 to vector<128x32xi32>
    %16 = arith.cmpi sge, %14, %15 : vector<128x32xi32>
    %17 = arith.andi %12, %16 : vector<128x32xi1>
    %c-1_i32_8 = arith.constant -1 : i32
    %18 = vector.broadcast %c-1_i32_8 : i32 to vector<128x32xi32>
    %19 = arith.addi %2, %18 : vector<128x32xi32>
    %c8_i32_9 = arith.constant 8 : i32
    %20 = vector.broadcast %c8_i32_9 : i32 to vector<128x32xi32>
    %21 = arith.cmpi slt, %19, %20 : vector<128x32xi32>
    %22 = arith.andi %17, %21 : vector<128x32xi1>
    %cst = arith.constant 0.000000e+00 : f32
    %23 = vector.broadcast %cst : f32 to vector<128x32xf32>
    %24 = arith.select %22, %3, %23 : vector<128x32xi1>, vector<128x32xf32>
    %25 = arith.truncf %24 : vector<128x32xf32> to vector<128x32xbf16>
    %c8_i32_10 = arith.constant 8 : i32
    %26 = tpu.dynamic_rotate %0 by %c8_i32_10 dim 0 : vector<128x32xf32>, i32 -> vector<128x32xf32>
    %c-1_i32_11 = arith.constant -1 : i32
    %27 = vector.broadcast %c-1_i32_11 : i32 to vector<128x32xi32>
    %28 = arith.addi %1, %27 : vector<128x32xi32>
    %c0_i32_12 = arith.constant 0 : i32
    %29 = vector.broadcast %c0_i32_12 : i32 to vector<128x32xi32>
    %30 = arith.cmpi sge, %28, %29 : vector<128x32xi32>
    %c-1_i32_13 = arith.constant -1 : i32
    %31 = vector.broadcast %c-1_i32_13 : i32 to vector<128x32xi32>
    %32 = arith.addi %1, %31 : vector<128x32xi32>
    %c8_i32_14 = arith.constant 8 : i32
    %33 = vector.broadcast %c8_i32_14 : i32 to vector<128x32xi32>
    %34 = arith.cmpi slt, %32, %33 : vector<128x32xi32>
    %35 = arith.andi %30, %34 : vector<128x32xi1>
    %c0_i32_15 = arith.constant 0 : i32
    %36 = vector.broadcast %c0_i32_15 : i32 to vector<128x32xi32>
    %37 = arith.addi %2, %36 : vector<128x32xi32>
    %c0_i32_16 = arith.constant 0 : i32
    %38 = vector.broadcast %c0_i32_16 : i32 to vector<128x32xi32>
    %39 = arith.cmpi sge, %37, %38 : vector<128x32xi32>
    %40 = arith.andi %35, %39 : vector<128x32xi1>
    %c0_i32_17 = arith.constant 0 : i32
    %41 = vector.broadcast %c0_i32_17 : i32 to vector<128x32xi32>
    %42 = arith.addi %2, %41 : vector<128x32xi32>
    %c8_i32_18 = arith.constant 8 : i32
    %43 = vector.broadcast %c8_i32_18 : i32 to vector<128x32xi32>
    %44 = arith.cmpi slt, %42, %43 : vector<128x32xi32>
    %45 = arith.andi %40, %44 : vector<128x32xi1>
    %cst_19 = arith.constant 0.000000e+00 : f32
    %46 = vector.broadcast %cst_19 : f32 to vector<128x32xf32>
    %47 = arith.select %45, %26, %46 : vector<128x32xi1>, vector<128x32xf32>
    %48 = arith.truncf %47 : vector<128x32xf32> to vector<128x32xbf16>
    %c7_i32 = arith.constant 7 : i32
    %49 = tpu.dynamic_rotate %0 by %c7_i32 dim 0 : vector<128x32xf32>, i32 -> vector<128x32xf32>
    %c-1_i32_20 = arith.constant -1 : i32
    %50 = vector.broadcast %c-1_i32_20 : i32 to vector<128x32xi32>
    %51 = arith.addi %1, %50 : vector<128x32xi32>
    %c0_i32_21 = arith.constant 0 : i32
    %52 = vector.broadcast %c0_i32_21 : i32 to vector<128x32xi32>
    %53 = arith.cmpi sge, %51, %52 : vector<128x32xi32>
    %c-1_i32_22 = arith.constant -1 : i32
    %54 = vector.broadcast %c-1_i32_22 : i32 to vector<128x32xi32>
    %55 = arith.addi %1, %54 : vector<128x32xi32>
    %c8_i32_23 = arith.constant 8 : i32
    %56 = vector.broadcast %c8_i32_23 : i32 to vector<128x32xi32>
    %57 = arith.cmpi slt, %55, %56 : vector<128x32xi32>
    %58 = arith.andi %53, %57 : vector<128x32xi1>
    %c1_i32 = arith.constant 1 : i32
    %59 = vector.broadcast %c1_i32 : i32 to vector<128x32xi32>
    %60 = arith.addi %2, %59 : vector<128x32xi32>
    %c0_i32_24 = arith.constant 0 : i32
    %61 = vector.broadcast %c0_i32_24 : i32 to vector<128x32xi32>
    %62 = arith.cmpi sge, %60, %61 : vector<128x32xi32>
    %63 = arith.andi %58, %62 : vector<128x32xi1>
    %c1_i32_25 = arith.constant 1 : i32
    %64 = vector.broadcast %c1_i32_25 : i32 to vector<128x32xi32>
    %65 = arith.addi %2, %64 : vector<128x32xi32>
    %c8_i32_26 = arith.constant 8 : i32
    %66 = vector.broadcast %c8_i32_26 : i32 to vector<128x32xi32>
    %67 = arith.cmpi slt, %65, %66 : vector<128x32xi32>
    %68 = arith.andi %63, %67 : vector<128x32xi1>
    %cst_27 = arith.constant 0.000000e+00 : f32
    %69 = vector.broadcast %cst_27 : f32 to vector<128x32xf32>
    %70 = arith.select %68, %49, %69 : vector<128x32xi1>, vector<128x32xf32>
    %71 = arith.truncf %70 : vector<128x32xf32> to vector<128x32xbf16>
    %c1_i32_28 = arith.constant 1 : i32
    %72 = tpu.dynamic_rotate %0 by %c1_i32_28 dim 0 : vector<128x32xf32>, i32 -> vector<128x32xf32>
    %c0_i32_29 = arith.constant 0 : i32
    %73 = vector.broadcast %c0_i32_29 : i32 to vector<128x32xi32>
    %74 = arith.addi %1, %73 : vector<128x32xi32>
    %c0_i32_30 = arith.constant 0 : i32
    %75 = vector.broadcast %c0_i32_30 : i32 to vector<128x32xi32>
    %76 = arith.cmpi sge, %74, %75 : vector<128x32xi32>
    %c0_i32_31 = arith.constant 0 : i32
    %77 = vector.broadcast %c0_i32_31 : i32 to vector<128x32xi32>
    %78 = arith.addi %1, %77 : vector<128x32xi32>
    %c8_i32_32 = arith.constant 8 : i32
    %79 = vector.broadcast %c8_i32_32 : i32 to vector<128x32xi32>
    %80 = arith.cmpi slt, %78, %79 : vector<128x32xi32>
    %81 = arith.andi %76, %80 : vector<128x32xi1>
    %c-1_i32_33 = arith.constant -1 : i32
    %82 = vector.broadcast %c-1_i32_33 : i32 to vector<128x32xi32>
    %83 = arith.addi %2, %82 : vector<128x32xi32>
    %c0_i32_34 = arith.constant 0 : i32
    %84 = vector.broadcast %c0_i32_34 : i32 to vector<128x32xi32>
    %85 = arith.cmpi sge, %83, %84 : vector<128x32xi32>
    %86 = arith.andi %81, %85 : vector<128x32xi1>
    %c-1_i32_35 = arith.constant -1 : i32
    %87 = vector.broadcast %c-1_i32_35 : i32 to vector<128x32xi32>
    %88 = arith.addi %2, %87 : vector<128x32xi32>
    %c8_i32_36 = arith.constant 8 : i32
    %89 = vector.broadcast %c8_i32_36 : i32 to vector<128x32xi32>
    %90 = arith.cmpi slt, %88, %89 : vector<128x32xi32>
    %91 = arith.andi %86, %90 : vector<128x32xi1>
    %cst_37 = arith.constant 0.000000e+00 : f32
    %92 = vector.broadcast %cst_37 : f32 to vector<128x32xf32>
    %93 = arith.select %91, %72, %92 : vector<128x32xi1>, vector<128x32xf32>
    %94 = arith.truncf %93 : vector<128x32xf32> to vector<128x32xbf16>
    %95 = arith.truncf %0 : vector<128x32xf32> to vector<128x32xbf16>
    %c127_i32 = arith.constant 127 : i32
    %96 = tpu.dynamic_rotate %0 by %c127_i32 dim 0 : vector<128x32xf32>, i32 -> vector<128x32xf32>
    %c0_i32_38 = arith.constant 0 : i32
    %97 = vector.broadcast %c0_i32_38 : i32 to vector<128x32xi32>
    %98 = arith.addi %1, %97 : vector<128x32xi32>
    %c0_i32_39 = arith.constant 0 : i32
    %99 = vector.broadcast %c0_i32_39 : i32 to vector<128x32xi32>
    %100 = arith.cmpi sge, %98, %99 : vector<128x32xi32>
    %c0_i32_40 = arith.constant 0 : i32
    %101 = vector.broadcast %c0_i32_40 : i32 to vector<128x32xi32>
    %102 = arith.addi %1, %101 : vector<128x32xi32>
    %c8_i32_41 = arith.constant 8 : i32
    %103 = vector.broadcast %c8_i32_41 : i32 to vector<128x32xi32>
    %104 = arith.cmpi slt, %102, %103 : vector<128x32xi32>
    %105 = arith.andi %100, %104 : vector<128x32xi1>
    %c1_i32_42 = arith.constant 1 : i32
    %106 = vector.broadcast %c1_i32_42 : i32 to vector<128x32xi32>
    %107 = arith.addi %2, %106 : vector<128x32xi32>
    %c0_i32_43 = arith.constant 0 : i32
    %108 = vector.broadcast %c0_i32_43 : i32 to vector<128x32xi32>
    %109 = arith.cmpi sge, %107, %108 : vector<128x32xi32>
    %110 = arith.andi %105, %109 : vector<128x32xi1>
    %c1_i32_44 = arith.constant 1 : i32
    %111 = vector.broadcast %c1_i32_44 : i32 to vector<128x32xi32>
    %112 = arith.addi %2, %111 : vector<128x32xi32>
    %c8_i32_45 = arith.constant 8 : i32
    %113 = vector.broadcast %c8_i32_45 : i32 to vector<128x32xi32>
    %114 = arith.cmpi slt, %112, %113 : vector<128x32xi32>
    %115 = arith.andi %110, %114 : vector<128x32xi1>
    %cst_46 = arith.constant 0.000000e+00 : f32
    %116 = vector.broadcast %cst_46 : f32 to vector<128x32xf32>
    %117 = arith.select %115, %96, %116 : vector<128x32xi1>, vector<128x32xf32>
    %118 = arith.truncf %117 : vector<128x32xf32> to vector<128x32xbf16>
    %c121_i32 = arith.constant 121 : i32
    %119 = tpu.dynamic_rotate %0 by %c121_i32 dim 0 : vector<128x32xf32>, i32 -> vector<128x32xf32>
    %c1_i32_47 = arith.constant 1 : i32
    %120 = vector.broadcast %c1_i32_47 : i32 to vector<128x32xi32>
    %121 = arith.addi %1, %120 : vector<128x32xi32>
    %c0_i32_48 = arith.constant 0 : i32
    %122 = vector.broadcast %c0_i32_48 : i32 to vector<128x32xi32>
    %123 = arith.cmpi sge, %121, %122 : vector<128x32xi32>
    %c1_i32_49 = arith.constant 1 : i32
    %124 = vector.broadcast %c1_i32_49 : i32 to vector<128x32xi32>
    %125 = arith.addi %1, %124 : vector<128x32xi32>
    %c8_i32_50 = arith.constant 8 : i32
    %126 = vector.broadcast %c8_i32_50 : i32 to vector<128x32xi32>
    %127 = arith.cmpi slt, %125, %126 : vector<128x32xi32>
    %128 = arith.andi %123, %127 : vector<128x32xi1>
    %c-1_i32_51 = arith.constant -1 : i32
    %129 = vector.broadcast %c-1_i32_51 : i32 to vector<128x32xi32>
    %130 = arith.addi %2, %129 : vector<128x32xi32>
    %c0_i32_52 = arith.constant 0 : i32
    %131 = vector.broadcast %c0_i32_52 : i32 to vector<128x32xi32>
    %132 = arith.cmpi sge, %130, %131 : vector<128x32xi32>
    %133 = arith.andi %128, %132 : vector<128x32xi1>
    %c-1_i32_53 = arith.constant -1 : i32
    %134 = vector.broadcast %c-1_i32_53 : i32 to vector<128x32xi32>
    %135 = arith.addi %2, %134 : vector<128x32xi32>
    %c8_i32_54 = arith.constant 8 : i32
    %136 = vector.broadcast %c8_i32_54 : i32 to vector<128x32xi32>
    %137 = arith.cmpi slt, %135, %136 : vector<128x32xi32>
    %138 = arith.andi %133, %137 : vector<128x32xi1>
    %cst_55 = arith.constant 0.000000e+00 : f32
    %139 = vector.broadcast %cst_55 : f32 to vector<128x32xf32>
    %140 = arith.select %138, %119, %139 : vector<128x32xi1>, vector<128x32xf32>
    %141 = arith.truncf %140 : vector<128x32xf32> to vector<128x32xbf16>
    %c120_i32 = arith.constant 120 : i32
    %142 = tpu.dynamic_rotate %0 by %c120_i32 dim 0 : vector<128x32xf32>, i32 -> vector<128x32xf32>
    %c1_i32_56 = arith.constant 1 : i32
    %143 = vector.broadcast %c1_i32_56 : i32 to vector<128x32xi32>
    %144 = arith.addi %1, %143 : vector<128x32xi32>
    %c0_i32_57 = arith.constant 0 : i32
    %145 = vector.broadcast %c0_i32_57 : i32 to vector<128x32xi32>
    %146 = arith.cmpi sge, %144, %145 : vector<128x32xi32>
    %c1_i32_58 = arith.constant 1 : i32
    %147 = vector.broadcast %c1_i32_58 : i32 to vector<128x32xi32>
    %148 = arith.addi %1, %147 : vector<128x32xi32>
    %c8_i32_59 = arith.constant 8 : i32
    %149 = vector.broadcast %c8_i32_59 : i32 to vector<128x32xi32>
    %150 = arith.cmpi slt, %148, %149 : vector<128x32xi32>
    %151 = arith.andi %146, %150 : vector<128x32xi1>
    %c0_i32_60 = arith.constant 0 : i32
    %152 = vector.broadcast %c0_i32_60 : i32 to vector<128x32xi32>
    %153 = arith.addi %2, %152 : vector<128x32xi32>
    %c0_i32_61 = arith.constant 0 : i32
    %154 = vector.broadcast %c0_i32_61 : i32 to vector<128x32xi32>
    %155 = arith.cmpi sge, %153, %154 : vector<128x32xi32>
    %156 = arith.andi %151, %155 : vector<128x32xi1>
    %c0_i32_62 = arith.constant 0 : i32
    %157 = vector.broadcast %c0_i32_62 : i32 to vector<128x32xi32>
    %158 = arith.addi %2, %157 : vector<128x32xi32>
    %c8_i32_63 = arith.constant 8 : i32
    %159 = vector.broadcast %c8_i32_63 : i32 to vector<128x32xi32>
    %160 = arith.cmpi slt, %158, %159 : vector<128x32xi32>
    %161 = arith.andi %156, %160 : vector<128x32xi1>
    %cst_64 = arith.constant 0.000000e+00 : f32
    %162 = vector.broadcast %cst_64 : f32 to vector<128x32xf32>
    %163 = arith.select %161, %142, %162 : vector<128x32xi1>, vector<128x32xf32>
    %164 = arith.truncf %163 : vector<128x32xf32> to vector<128x32xbf16>
    %c119_i32 = arith.constant 119 : i32
    %165 = tpu.dynamic_rotate %0 by %c119_i32 dim 0 : vector<128x32xf32>, i32 -> vector<128x32xf32>
    %c1_i32_65 = arith.constant 1 : i32
    %166 = vector.broadcast %c1_i32_65 : i32 to vector<128x32xi32>
    %167 = arith.addi %1, %166 : vector<128x32xi32>
    %c0_i32_66 = arith.constant 0 : i32
    %168 = vector.broadcast %c0_i32_66 : i32 to vector<128x32xi32>
    %169 = arith.cmpi sge, %167, %168 : vector<128x32xi32>
    %c1_i32_67 = arith.constant 1 : i32
    %170 = vector.broadcast %c1_i32_67 : i32 to vector<128x32xi32>
    %171 = arith.addi %1, %170 : vector<128x32xi32>
    %c8_i32_68 = arith.constant 8 : i32
    %172 = vector.broadcast %c8_i32_68 : i32 to vector<128x32xi32>
    %173 = arith.cmpi slt, %171, %172 : vector<128x32xi32>
    %174 = arith.andi %169, %173 : vector<128x32xi1>
    %c1_i32_69 = arith.constant 1 : i32
    %175 = vector.broadcast %c1_i32_69 : i32 to vector<128x32xi32>
    %176 = arith.addi %2, %175 : vector<128x32xi32>
    %c0_i32_70 = arith.constant 0 : i32
    %177 = vector.broadcast %c0_i32_70 : i32 to vector<128x32xi32>
    %178 = arith.cmpi sge, %176, %177 : vector<128x32xi32>
    %179 = arith.andi %174, %178 : vector<128x32xi1>
    %c1_i32_71 = arith.constant 1 : i32
    %180 = vector.broadcast %c1_i32_71 : i32 to vector<128x32xi32>
    %181 = arith.addi %2, %180 : vector<128x32xi32>
    %c8_i32_72 = arith.constant 8 : i32
    %182 = vector.broadcast %c8_i32_72 : i32 to vector<128x32xi32>
    %183 = arith.cmpi slt, %181, %182 : vector<128x32xi32>
    %184 = arith.andi %179, %183 : vector<128x32xi1>
    %cst_73 = arith.constant 0.000000e+00 : f32
    %185 = vector.broadcast %cst_73 : f32 to vector<128x32xf32>
    %186 = arith.select %184, %165, %185 : vector<128x32xi1>, vector<128x32xf32>
    %187 = arith.truncf %186 : vector<128x32xf32> to vector<128x32xbf16>
    %188 = tpu.concatenate %25, %48, %71, %94, %95, %118, %141, %164, %187 in 1 : vector<128x32xbf16>, vector<128x32xbf16>, vector<128x32xbf16>, vector<128x32xbf16>, vector<128x32xbf16>, vector<128x32xbf16>, vector<128x32xbf16>, vector<128x32xbf16>, vector<128x32xbf16> -> vector<128x288xbf16>
    %c0_74 = arith.constant 0 : index
    %c0_75 = arith.constant 0 : index
    %189 = vector.load %arg3[%c0_74, %c0_75] : memref<288x32xbf16, #tpu.memory_space<vmem>>, vector<288x32xbf16>
    %cst_76 = arith.constant dense<0.000000e+00> : vector<128x32xf32>
    %190 = tpu.matmul %188, %189, %cst_76 {dimension_numbers = #tpu.dot_dimension_numbers<[1], [0], [0], [1], [0, 0, 1, 1], [], []>} : vector<128x288xbf16>, vector<288x32xbf16>, vector<128x32xf32> -> vector<128x32xf32>
    %cst_77 = arith.constant dense<0.000000e+00> : vector<32xf32>
    %191 = vector.multi_reduction <add>, %190, %cst_77 [0] : vector<128x32xf32> to vector<32xf32>
    %192 = vector.shape_cast %191 : vector<32xf32> to vector<1x32xf32>
    %cst_78 = arith.constant 1.280000e+02 : f32
    %193 = vector.broadcast %cst_78 : f32 to vector<1x32xf32>
    %194 = arith.divf %192, %193 : vector<1x32xf32>
    %195 = vector.broadcast %194 : vector<1x32xf32> to vector<128x32xf32>
    %196 = arith.subf %190, %195 : vector<128x32xf32>
    %197 = arith.mulf %196, %196 : vector<128x32xf32>
    %cst_79 = arith.constant dense<0.000000e+00> : vector<32xf32>
    %198 = vector.multi_reduction <add>, %197, %cst_79 [0] : vector<128x32xf32> to vector<32xf32>
    %199 = vector.shape_cast %198 : vector<32xf32> to vector<1x32xf32>
    %cst_80 = arith.constant 1.280000e+02 : f32
    %200 = vector.broadcast %cst_80 : f32 to vector<1x32xf32>
    %201 = arith.divf %199, %200 : vector<1x32xf32>
    %c0_81 = arith.constant 0 : index
    %c0_82 = arith.constant 0 : index
    %202 = vector.load %arg5[%c0_81, %c0_82] : memref<1x32xf32, #tpu.memory_space<vmem>>, vector<1x32xf32>
    %cst_83 = arith.constant 9.99999974E-6 : f32
    %203 = vector.broadcast %cst_83 : f32 to vector<1x32xf32>
    %204 = arith.addf %201, %203 : vector<1x32xf32>
    %205 = math.rsqrt %204 : vector<1x32xf32>
    %206 = arith.mulf %202, %205 : vector<1x32xf32>
    %207 = vector.broadcast %206 : vector<1x32xf32> to vector<128x32xf32>
    %208 = arith.mulf %196, %207 : vector<128x32xf32>
    %c0_84 = arith.constant 0 : index
    %c0_85 = arith.constant 0 : index
    %209 = vector.load %arg6[%c0_84, %c0_85] : memref<1x32xf32, #tpu.memory_space<vmem>>, vector<1x32xf32>
    %210 = vector.broadcast %209 : vector<1x32xf32> to vector<128x32xf32>
    %211 = arith.addf %208, %210 : vector<128x32xf32>
    %cst_86 = arith.constant 0.000000e+00 : f32
    %212 = vector.broadcast %cst_86 : f32 to vector<128x32xf32>
    %213 = arith.maximumf %211, %212 : vector<128x32xf32>
    %c9_i32_87 = arith.constant 9 : i32
    %214 = tpu.dynamic_rotate %213 by %c9_i32_87 dim 0 : vector<128x32xf32>, i32 -> vector<128x32xf32>
    %c-1_i32_88 = arith.constant -1 : i32
    %215 = vector.broadcast %c-1_i32_88 : i32 to vector<128x32xi32>
    %216 = arith.addi %1, %215 : vector<128x32xi32>
    %c0_i32_89 = arith.constant 0 : i32
    %217 = vector.broadcast %c0_i32_89 : i32 to vector<128x32xi32>
    %218 = arith.cmpi sge, %216, %217 : vector<128x32xi32>
    %c-1_i32_90 = arith.constant -1 : i32
    %219 = vector.broadcast %c-1_i32_90 : i32 to vector<128x32xi32>
    %220 = arith.addi %1, %219 : vector<128x32xi32>
    %c8_i32_91 = arith.constant 8 : i32
    %221 = vector.broadcast %c8_i32_91 : i32 to vector<128x32xi32>
    %222 = arith.cmpi slt, %220, %221 : vector<128x32xi32>
    %223 = arith.andi %218, %222 : vector<128x32xi1>
    %c-1_i32_92 = arith.constant -1 : i32
    %224 = vector.broadcast %c-1_i32_92 : i32 to vector<128x32xi32>
    %225 = arith.addi %2, %224 : vector<128x32xi32>
    %c0_i32_93 = arith.constant 0 : i32
    %226 = vector.broadcast %c0_i32_93 : i32 to vector<128x32xi32>
    %227 = arith.cmpi sge, %225, %226 : vector<128x32xi32>
    %228 = arith.andi %223, %227 : vector<128x32xi1>
    %c-1_i32_94 = arith.constant -1 : i32
    %229 = vector.broadcast %c-1_i32_94 : i32 to vector<128x32xi32>
    %230 = arith.addi %2, %229 : vector<128x32xi32>
    %c8_i32_95 = arith.constant 8 : i32
    %231 = vector.broadcast %c8_i32_95 : i32 to vector<128x32xi32>
    %232 = arith.cmpi slt, %230, %231 : vector<128x32xi32>
    %233 = arith.andi %228, %232 : vector<128x32xi1>
    %cst_96 = arith.constant 0.000000e+00 : f32
    %234 = vector.broadcast %cst_96 : f32 to vector<128x32xf32>
    %235 = arith.select %233, %214, %234 : vector<128x32xi1>, vector<128x32xf32>
    %236 = arith.truncf %235 : vector<128x32xf32> to vector<128x32xbf16>
    %c8_i32_97 = arith.constant 8 : i32
    %237 = tpu.dynamic_rotate %213 by %c8_i32_97 dim 0 : vector<128x32xf32>, i32 -> vector<128x32xf32>
    %c-1_i32_98 = arith.constant -1 : i32
    %238 = vector.broadcast %c-1_i32_98 : i32 to vector<128x32xi32>
    %239 = arith.addi %1, %238 : vector<128x32xi32>
    %c0_i32_99 = arith.constant 0 : i32
    %240 = vector.broadcast %c0_i32_99 : i32 to vector<128x32xi32>
    %241 = arith.cmpi sge, %239, %240 : vector<128x32xi32>
    %c-1_i32_100 = arith.constant -1 : i32
    %242 = vector.broadcast %c-1_i32_100 : i32 to vector<128x32xi32>
    %243 = arith.addi %1, %242 : vector<128x32xi32>
    %c8_i32_101 = arith.constant 8 : i32
    %244 = vector.broadcast %c8_i32_101 : i32 to vector<128x32xi32>
    %245 = arith.cmpi slt, %243, %244 : vector<128x32xi32>
    %246 = arith.andi %241, %245 : vector<128x32xi1>
    %c0_i32_102 = arith.constant 0 : i32
    %247 = vector.broadcast %c0_i32_102 : i32 to vector<128x32xi32>
    %248 = arith.addi %2, %247 : vector<128x32xi32>
    %c0_i32_103 = arith.constant 0 : i32
    %249 = vector.broadcast %c0_i32_103 : i32 to vector<128x32xi32>
    %250 = arith.cmpi sge, %248, %249 : vector<128x32xi32>
    %251 = arith.andi %246, %250 : vector<128x32xi1>
    %c0_i32_104 = arith.constant 0 : i32
    %252 = vector.broadcast %c0_i32_104 : i32 to vector<128x32xi32>
    %253 = arith.addi %2, %252 : vector<128x32xi32>
    %c8_i32_105 = arith.constant 8 : i32
    %254 = vector.broadcast %c8_i32_105 : i32 to vector<128x32xi32>
    %255 = arith.cmpi slt, %253, %254 : vector<128x32xi32>
    %256 = arith.andi %251, %255 : vector<128x32xi1>
    %cst_106 = arith.constant 0.000000e+00 : f32
    %257 = vector.broadcast %cst_106 : f32 to vector<128x32xf32>
    %258 = arith.select %256, %237, %257 : vector<128x32xi1>, vector<128x32xf32>
    %259 = arith.truncf %258 : vector<128x32xf32> to vector<128x32xbf16>
    %c7_i32_107 = arith.constant 7 : i32
    %260 = tpu.dynamic_rotate %213 by %c7_i32_107 dim 0 : vector<128x32xf32>, i32 -> vector<128x32xf32>
    %c-1_i32_108 = arith.constant -1 : i32
    %261 = vector.broadcast %c-1_i32_108 : i32 to vector<128x32xi32>
    %262 = arith.addi %1, %261 : vector<128x32xi32>
    %c0_i32_109 = arith.constant 0 : i32
    %263 = vector.broadcast %c0_i32_109 : i32 to vector<128x32xi32>
    %264 = arith.cmpi sge, %262, %263 : vector<128x32xi32>
    %c-1_i32_110 = arith.constant -1 : i32
    %265 = vector.broadcast %c-1_i32_110 : i32 to vector<128x32xi32>
    %266 = arith.addi %1, %265 : vector<128x32xi32>
    %c8_i32_111 = arith.constant 8 : i32
    %267 = vector.broadcast %c8_i32_111 : i32 to vector<128x32xi32>
    %268 = arith.cmpi slt, %266, %267 : vector<128x32xi32>
    %269 = arith.andi %264, %268 : vector<128x32xi1>
    %c1_i32_112 = arith.constant 1 : i32
    %270 = vector.broadcast %c1_i32_112 : i32 to vector<128x32xi32>
    %271 = arith.addi %2, %270 : vector<128x32xi32>
    %c0_i32_113 = arith.constant 0 : i32
    %272 = vector.broadcast %c0_i32_113 : i32 to vector<128x32xi32>
    %273 = arith.cmpi sge, %271, %272 : vector<128x32xi32>
    %274 = arith.andi %269, %273 : vector<128x32xi1>
    %c1_i32_114 = arith.constant 1 : i32
    %275 = vector.broadcast %c1_i32_114 : i32 to vector<128x32xi32>
    %276 = arith.addi %2, %275 : vector<128x32xi32>
    %c8_i32_115 = arith.constant 8 : i32
    %277 = vector.broadcast %c8_i32_115 : i32 to vector<128x32xi32>
    %278 = arith.cmpi slt, %276, %277 : vector<128x32xi32>
    %279 = arith.andi %274, %278 : vector<128x32xi1>
    %cst_116 = arith.constant 0.000000e+00 : f32
    %280 = vector.broadcast %cst_116 : f32 to vector<128x32xf32>
    %281 = arith.select %279, %260, %280 : vector<128x32xi1>, vector<128x32xf32>
    %282 = arith.truncf %281 : vector<128x32xf32> to vector<128x32xbf16>
    %c1_i32_117 = arith.constant 1 : i32
    %283 = tpu.dynamic_rotate %213 by %c1_i32_117 dim 0 : vector<128x32xf32>, i32 -> vector<128x32xf32>
    %c0_i32_118 = arith.constant 0 : i32
    %284 = vector.broadcast %c0_i32_118 : i32 to vector<128x32xi32>
    %285 = arith.addi %1, %284 : vector<128x32xi32>
    %c0_i32_119 = arith.constant 0 : i32
    %286 = vector.broadcast %c0_i32_119 : i32 to vector<128x32xi32>
    %287 = arith.cmpi sge, %285, %286 : vector<128x32xi32>
    %c0_i32_120 = arith.constant 0 : i32
    %288 = vector.broadcast %c0_i32_120 : i32 to vector<128x32xi32>
    %289 = arith.addi %1, %288 : vector<128x32xi32>
    %c8_i32_121 = arith.constant 8 : i32
    %290 = vector.broadcast %c8_i32_121 : i32 to vector<128x32xi32>
    %291 = arith.cmpi slt, %289, %290 : vector<128x32xi32>
    %292 = arith.andi %287, %291 : vector<128x32xi1>
    %c-1_i32_122 = arith.constant -1 : i32
    %293 = vector.broadcast %c-1_i32_122 : i32 to vector<128x32xi32>
    %294 = arith.addi %2, %293 : vector<128x32xi32>
    %c0_i32_123 = arith.constant 0 : i32
    %295 = vector.broadcast %c0_i32_123 : i32 to vector<128x32xi32>
    %296 = arith.cmpi sge, %294, %295 : vector<128x32xi32>
    %297 = arith.andi %292, %296 : vector<128x32xi1>
    %c-1_i32_124 = arith.constant -1 : i32
    %298 = vector.broadcast %c-1_i32_124 : i32 to vector<128x32xi32>
    %299 = arith.addi %2, %298 : vector<128x32xi32>
    %c8_i32_125 = arith.constant 8 : i32
    %300 = vector.broadcast %c8_i32_125 : i32 to vector<128x32xi32>
    %301 = arith.cmpi slt, %299, %300 : vector<128x32xi32>
    %302 = arith.andi %297, %301 : vector<128x32xi1>
    %cst_126 = arith.constant 0.000000e+00 : f32
    %303 = vector.broadcast %cst_126 : f32 to vector<128x32xf32>
    %304 = arith.select %302, %283, %303 : vector<128x32xi1>, vector<128x32xf32>
    %305 = arith.truncf %304 : vector<128x32xf32> to vector<128x32xbf16>
    %306 = arith.truncf %213 : vector<128x32xf32> to vector<128x32xbf16>
    %c127_i32_127 = arith.constant 127 : i32
    %307 = tpu.dynamic_rotate %213 by %c127_i32_127 dim 0 : vector<128x32xf32>, i32 -> vector<128x32xf32>
    %c0_i32_128 = arith.constant 0 : i32
    %308 = vector.broadcast %c0_i32_128 : i32 to vector<128x32xi32>
    %309 = arith.addi %1, %308 : vector<128x32xi32>
    %c0_i32_129 = arith.constant 0 : i32
    %310 = vector.broadcast %c0_i32_129 : i32 to vector<128x32xi32>
    %311 = arith.cmpi sge, %309, %310 : vector<128x32xi32>
    %c0_i32_130 = arith.constant 0 : i32
    %312 = vector.broadcast %c0_i32_130 : i32 to vector<128x32xi32>
    %313 = arith.addi %1, %312 : vector<128x32xi32>
    %c8_i32_131 = arith.constant 8 : i32
    %314 = vector.broadcast %c8_i32_131 : i32 to vector<128x32xi32>
    %315 = arith.cmpi slt, %313, %314 : vector<128x32xi32>
    %316 = arith.andi %311, %315 : vector<128x32xi1>
    %c1_i32_132 = arith.constant 1 : i32
    %317 = vector.broadcast %c1_i32_132 : i32 to vector<128x32xi32>
    %318 = arith.addi %2, %317 : vector<128x32xi32>
    %c0_i32_133 = arith.constant 0 : i32
    %319 = vector.broadcast %c0_i32_133 : i32 to vector<128x32xi32>
    %320 = arith.cmpi sge, %318, %319 : vector<128x32xi32>
    %321 = arith.andi %316, %320 : vector<128x32xi1>
    %c1_i32_134 = arith.constant 1 : i32
    %322 = vector.broadcast %c1_i32_134 : i32 to vector<128x32xi32>
    %323 = arith.addi %2, %322 : vector<128x32xi32>
    %c8_i32_135 = arith.constant 8 : i32
    %324 = vector.broadcast %c8_i32_135 : i32 to vector<128x32xi32>
    %325 = arith.cmpi slt, %323, %324 : vector<128x32xi32>
    %326 = arith.andi %321, %325 : vector<128x32xi1>
    %cst_136 = arith.constant 0.000000e+00 : f32
    %327 = vector.broadcast %cst_136 : f32 to vector<128x32xf32>
    %328 = arith.select %326, %307, %327 : vector<128x32xi1>, vector<128x32xf32>
    %329 = arith.truncf %328 : vector<128x32xf32> to vector<128x32xbf16>
    %c121_i32_137 = arith.constant 121 : i32
    %330 = tpu.dynamic_rotate %213 by %c121_i32_137 dim 0 : vector<128x32xf32>, i32 -> vector<128x32xf32>
    %c1_i32_138 = arith.constant 1 : i32
    %331 = vector.broadcast %c1_i32_138 : i32 to vector<128x32xi32>
    %332 = arith.addi %1, %331 : vector<128x32xi32>
    %c0_i32_139 = arith.constant 0 : i32
    %333 = vector.broadcast %c0_i32_139 : i32 to vector<128x32xi32>
    %334 = arith.cmpi sge, %332, %333 : vector<128x32xi32>
    %c1_i32_140 = arith.constant 1 : i32
    %335 = vector.broadcast %c1_i32_140 : i32 to vector<128x32xi32>
    %336 = arith.addi %1, %335 : vector<128x32xi32>
    %c8_i32_141 = arith.constant 8 : i32
    %337 = vector.broadcast %c8_i32_141 : i32 to vector<128x32xi32>
    %338 = arith.cmpi slt, %336, %337 : vector<128x32xi32>
    %339 = arith.andi %334, %338 : vector<128x32xi1>
    %c-1_i32_142 = arith.constant -1 : i32
    %340 = vector.broadcast %c-1_i32_142 : i32 to vector<128x32xi32>
    %341 = arith.addi %2, %340 : vector<128x32xi32>
    %c0_i32_143 = arith.constant 0 : i32
    %342 = vector.broadcast %c0_i32_143 : i32 to vector<128x32xi32>
    %343 = arith.cmpi sge, %341, %342 : vector<128x32xi32>
    %344 = arith.andi %339, %343 : vector<128x32xi1>
    %c-1_i32_144 = arith.constant -1 : i32
    %345 = vector.broadcast %c-1_i32_144 : i32 to vector<128x32xi32>
    %346 = arith.addi %2, %345 : vector<128x32xi32>
    %c8_i32_145 = arith.constant 8 : i32
    %347 = vector.broadcast %c8_i32_145 : i32 to vector<128x32xi32>
    %348 = arith.cmpi slt, %346, %347 : vector<128x32xi32>
    %349 = arith.andi %344, %348 : vector<128x32xi1>
    %cst_146 = arith.constant 0.000000e+00 : f32
    %350 = vector.broadcast %cst_146 : f32 to vector<128x32xf32>
    %351 = arith.select %349, %330, %350 : vector<128x32xi1>, vector<128x32xf32>
    %352 = arith.truncf %351 : vector<128x32xf32> to vector<128x32xbf16>
    %c120_i32_147 = arith.constant 120 : i32
    %353 = tpu.dynamic_rotate %213 by %c120_i32_147 dim 0 : vector<128x32xf32>, i32 -> vector<128x32xf32>
    %c1_i32_148 = arith.constant 1 : i32
    %354 = vector.broadcast %c1_i32_148 : i32 to vector<128x32xi32>
    %355 = arith.addi %1, %354 : vector<128x32xi32>
    %c0_i32_149 = arith.constant 0 : i32
    %356 = vector.broadcast %c0_i32_149 : i32 to vector<128x32xi32>
    %357 = arith.cmpi sge, %355, %356 : vector<128x32xi32>
    %c1_i32_150 = arith.constant 1 : i32
    %358 = vector.broadcast %c1_i32_150 : i32 to vector<128x32xi32>
    %359 = arith.addi %1, %358 : vector<128x32xi32>
    %c8_i32_151 = arith.constant 8 : i32
    %360 = vector.broadcast %c8_i32_151 : i32 to vector<128x32xi32>
    %361 = arith.cmpi slt, %359, %360 : vector<128x32xi32>
    %362 = arith.andi %357, %361 : vector<128x32xi1>
    %c0_i32_152 = arith.constant 0 : i32
    %363 = vector.broadcast %c0_i32_152 : i32 to vector<128x32xi32>
    %364 = arith.addi %2, %363 : vector<128x32xi32>
    %c0_i32_153 = arith.constant 0 : i32
    %365 = vector.broadcast %c0_i32_153 : i32 to vector<128x32xi32>
    %366 = arith.cmpi sge, %364, %365 : vector<128x32xi32>
    %367 = arith.andi %362, %366 : vector<128x32xi1>
    %c0_i32_154 = arith.constant 0 : i32
    %368 = vector.broadcast %c0_i32_154 : i32 to vector<128x32xi32>
    %369 = arith.addi %2, %368 : vector<128x32xi32>
    %c8_i32_155 = arith.constant 8 : i32
    %370 = vector.broadcast %c8_i32_155 : i32 to vector<128x32xi32>
    %371 = arith.cmpi slt, %369, %370 : vector<128x32xi32>
    %372 = arith.andi %367, %371 : vector<128x32xi1>
    %cst_156 = arith.constant 0.000000e+00 : f32
    %373 = vector.broadcast %cst_156 : f32 to vector<128x32xf32>
    %374 = arith.select %372, %353, %373 : vector<128x32xi1>, vector<128x32xf32>
    %375 = arith.truncf %374 : vector<128x32xf32> to vector<128x32xbf16>
    %c119_i32_157 = arith.constant 119 : i32
    %376 = tpu.dynamic_rotate %213 by %c119_i32_157 dim 0 : vector<128x32xf32>, i32 -> vector<128x32xf32>
    %c1_i32_158 = arith.constant 1 : i32
    %377 = vector.broadcast %c1_i32_158 : i32 to vector<128x32xi32>
    %378 = arith.addi %1, %377 : vector<128x32xi32>
    %c0_i32_159 = arith.constant 0 : i32
    %379 = vector.broadcast %c0_i32_159 : i32 to vector<128x32xi32>
    %380 = arith.cmpi sge, %378, %379 : vector<128x32xi32>
    %c1_i32_160 = arith.constant 1 : i32
    %381 = vector.broadcast %c1_i32_160 : i32 to vector<128x32xi32>
    %382 = arith.addi %1, %381 : vector<128x32xi32>
    %c8_i32_161 = arith.constant 8 : i32
    %383 = vector.broadcast %c8_i32_161 : i32 to vector<128x32xi32>
    %384 = arith.cmpi slt, %382, %383 : vector<128x32xi32>
    %385 = arith.andi %380, %384 : vector<128x32xi1>
    %c1_i32_162 = arith.constant 1 : i32
    %386 = vector.broadcast %c1_i32_162 : i32 to vector<128x32xi32>
    %387 = arith.addi %2, %386 : vector<128x32xi32>
    %c0_i32_163 = arith.constant 0 : i32
    %388 = vector.broadcast %c0_i32_163 : i32 to vector<128x32xi32>
    %389 = arith.cmpi sge, %387, %388 : vector<128x32xi32>
    %390 = arith.andi %385, %389 : vector<128x32xi1>
    %c1_i32_164 = arith.constant 1 : i32
    %391 = vector.broadcast %c1_i32_164 : i32 to vector<128x32xi32>
    %392 = arith.addi %2, %391 : vector<128x32xi32>
    %c8_i32_165 = arith.constant 8 : i32
    %393 = vector.broadcast %c8_i32_165 : i32 to vector<128x32xi32>
    %394 = arith.cmpi slt, %392, %393 : vector<128x32xi32>
    %395 = arith.andi %390, %394 : vector<128x32xi1>
    %cst_166 = arith.constant 0.000000e+00 : f32
    %396 = vector.broadcast %cst_166 : f32 to vector<128x32xf32>
    %397 = arith.select %395, %376, %396 : vector<128x32xi1>, vector<128x32xf32>
    %398 = arith.truncf %397 : vector<128x32xf32> to vector<128x32xbf16>
    %399 = tpu.concatenate %236, %259, %282, %305, %306, %329, %352, %375, %398 in 1 : vector<128x32xbf16>, vector<128x32xbf16>, vector<128x32xbf16>, vector<128x32xbf16>, vector<128x32xbf16>, vector<128x32xbf16>, vector<128x32xbf16>, vector<128x32xbf16>, vector<128x32xbf16> -> vector<128x288xbf16>
    %c0_167 = arith.constant 0 : index
    %c0_168 = arith.constant 0 : index
    %400 = vector.load %arg4[%c0_167, %c0_168] : memref<288x32xbf16, #tpu.memory_space<vmem>>, vector<288x32xbf16>
    %cst_169 = arith.constant dense<0.000000e+00> : vector<128x32xf32>
    %401 = tpu.matmul %399, %400, %cst_169 {dimension_numbers = #tpu.dot_dimension_numbers<[1], [0], [0], [1], [0, 0, 1, 1], [], []>} : vector<128x288xbf16>, vector<288x32xbf16>, vector<128x32xf32> -> vector<128x32xf32>
    %cst_170 = arith.constant dense<0.000000e+00> : vector<32xf32>
    %402 = vector.multi_reduction <add>, %401, %cst_170 [0] : vector<128x32xf32> to vector<32xf32>
    %403 = vector.shape_cast %402 : vector<32xf32> to vector<1x32xf32>
    %cst_171 = arith.constant 1.280000e+02 : f32
    %404 = vector.broadcast %cst_171 : f32 to vector<1x32xf32>
    %405 = arith.divf %403, %404 : vector<1x32xf32>
    %406 = vector.broadcast %405 : vector<1x32xf32> to vector<128x32xf32>
    %407 = arith.subf %401, %406 : vector<128x32xf32>
    %408 = arith.mulf %407, %407 : vector<128x32xf32>
    %cst_172 = arith.constant dense<0.000000e+00> : vector<32xf32>
    %409 = vector.multi_reduction <add>, %408, %cst_172 [0] : vector<128x32xf32> to vector<32xf32>
    %410 = vector.shape_cast %409 : vector<32xf32> to vector<1x32xf32>
    %cst_173 = arith.constant 1.280000e+02 : f32
    %411 = vector.broadcast %cst_173 : f32 to vector<1x32xf32>
    %412 = arith.divf %410, %411 : vector<1x32xf32>
    %c0_174 = arith.constant 0 : index
    %c0_175 = arith.constant 0 : index
    %413 = vector.load %arg7[%c0_174, %c0_175] : memref<1x32xf32, #tpu.memory_space<vmem>>, vector<1x32xf32>
    %cst_176 = arith.constant 9.99999974E-6 : f32
    %414 = vector.broadcast %cst_176 : f32 to vector<1x32xf32>
    %415 = arith.addf %412, %414 : vector<1x32xf32>
    %416 = math.rsqrt %415 : vector<1x32xf32>
    %417 = arith.mulf %413, %416 : vector<1x32xf32>
    %418 = vector.broadcast %417 : vector<1x32xf32> to vector<128x32xf32>
    %419 = arith.mulf %407, %418 : vector<128x32xf32>
    %c0_177 = arith.constant 0 : index
    %c0_178 = arith.constant 0 : index
    %420 = vector.load %arg8[%c0_177, %c0_178] : memref<1x32xf32, #tpu.memory_space<vmem>>, vector<1x32xf32>
    %421 = vector.broadcast %420 : vector<1x32xf32> to vector<128x32xf32>
    %422 = arith.addf %419, %421 : vector<128x32xf32>
    %c0_179 = arith.constant 0 : index
    %c0_180 = arith.constant 0 : index
    %423 = vector.load %arg13[%c0_179, %c0_180] : memref<2x128xf32, #tpu.memory_space<vmem>>, vector<2x128xf32>
    %c0_181 = arith.constant 0 : index
    %c0_182 = arith.constant 0 : index
    %424 = vector.load %arg14[%c0_181, %c0_182] : memref<128x2xf32, #tpu.memory_space<vmem>>, vector<128x2xf32>
    %cst_183 = arith.constant dense<0.000000e+00> : vector<2x32xf32>
    %425 = tpu.matmul %423, %422, %cst_183 {dimension_numbers = #tpu.dot_dimension_numbers<[1], [0], [0], [1], [0, 0, 1, 1], [], []>} : vector<2x128xf32>, vector<128x32xf32>, vector<2x32xf32> -> vector<2x32xf32>
    %cst_184 = arith.constant dense<0.000000e+00> : vector<128x32xf32>
    %426 = tpu.matmul %424, %425, %cst_184 {dimension_numbers = #tpu.dot_dimension_numbers<[1], [0], [0], [1], [0, 0, 1, 1], [], []>} : vector<128x2xf32>, vector<2x32xf32>, vector<128x32xf32> -> vector<128x32xf32>
    %cst_185 = arith.constant 1.562500e-02 : f32
    %427 = vector.broadcast %cst_185 : f32 to vector<128x32xf32>
    %428 = arith.mulf %426, %427 : vector<128x32xf32>
    %429 = arith.mulf %422, %428 : vector<128x32xf32>
    %c0_186 = arith.constant 0 : index
    %c0_187 = arith.constant 0 : index
    %430 = vector.load %arg11[%c0_186, %c0_187] : memref<32x16xf32, #tpu.memory_space<vmem>>, vector<32x16xf32>
    %cst_188 = arith.constant dense<0.000000e+00> : vector<128x16xf32>
    %431 = tpu.matmul %429, %430, %cst_188 {dimension_numbers = #tpu.dot_dimension_numbers<[1], [0], [0], [1], [0, 0, 1, 1], [], []>} : vector<128x32xf32>, vector<32x16xf32>, vector<128x16xf32> -> vector<128x16xf32>
    %cst_189 = arith.constant dense<0.000000e+00> : vector<2x16xf32>
    %432 = tpu.matmul %423, %431, %cst_189 {dimension_numbers = #tpu.dot_dimension_numbers<[1], [0], [0], [1], [0, 0, 1, 1], [], []>} : vector<2x128xf32>, vector<128x16xf32>, vector<2x16xf32> -> vector<2x16xf32>
    %cst_190 = arith.constant 1.562500e-02 : f32
    %433 = vector.broadcast %cst_190 : f32 to vector<2x16xf32>
    %434 = arith.mulf %432, %433 : vector<2x16xf32>
    %cst_191 = arith.constant dense<0.000000e+00> : vector<128x16xf32>
    %435 = tpu.matmul %424, %434, %cst_191 {dimension_numbers = #tpu.dot_dimension_numbers<[1], [0], [0], [1], [0, 0, 1, 1], [], []>} : vector<128x2xf32>, vector<2x16xf32>, vector<128x16xf32> -> vector<128x16xf32>
    %436 = arith.subf %431, %435 : vector<128x16xf32>
    %437 = arith.mulf %436, %436 : vector<128x16xf32>
    %cst_192 = arith.constant dense<0.000000e+00> : vector<2x16xf32>
    %438 = tpu.matmul %423, %437, %cst_192 {dimension_numbers = #tpu.dot_dimension_numbers<[1], [0], [0], [1], [0, 0, 1, 1], [], []>} : vector<2x128xf32>, vector<128x16xf32>, vector<2x16xf32> -> vector<2x16xf32>
    %cst_193 = arith.constant 6.300000e+01 : f32
    %439 = vector.broadcast %cst_193 : f32 to vector<2x16xf32>
    %440 = arith.divf %438, %439 : vector<2x16xf32>
    %441 = math.sqrt %440 : vector<2x16xf32>
    %cst_194 = arith.constant 9.99999974E-6 : f32
    %442 = vector.broadcast %cst_194 : f32 to vector<2x16xf32>
    %443 = arith.addf %441, %442 : vector<2x16xf32>
    %444 = tpu.reciprocal %443 {approx = true} : vector<2x16xf32> -> vector<2x16xf32>
    %cst_195 = arith.constant dense<0.000000e+00> : vector<128x16xf32>
    %445 = tpu.matmul %424, %444, %cst_195 {dimension_numbers = #tpu.dot_dimension_numbers<[1], [0], [0], [1], [0, 0, 1, 1], [], []>} : vector<128x2xf32>, vector<2x16xf32>, vector<128x16xf32> -> vector<128x16xf32>
    %446 = arith.mulf %436, %445 : vector<128x16xf32>
    %c0_196 = arith.constant 0 : index
    %c0_197 = arith.constant 0 : index
    %447 = vector.load %arg9[%c0_196, %c0_197] : memref<1x16xf32, #tpu.memory_space<vmem>>, vector<1x16xf32>
    %448 = vector.broadcast %447 : vector<1x16xf32> to vector<128x16xf32>
    %449 = arith.mulf %446, %448 : vector<128x16xf32>
    %c0_198 = arith.constant 0 : index
    %c0_199 = arith.constant 0 : index
    %450 = vector.load %arg10[%c0_198, %c0_199] : memref<1x16xf32, #tpu.memory_space<vmem>>, vector<1x16xf32>
    %451 = vector.broadcast %450 : vector<1x16xf32> to vector<128x16xf32>
    %452 = arith.addf %449, %451 : vector<128x16xf32>
    %453 = arith.negf %452 : vector<128x16xf32>
    %454 = math.exp %453 : vector<128x16xf32>
    %cst_200 = arith.constant 1.000000e+00 : f32
    %455 = vector.broadcast %cst_200 : f32 to vector<128x16xf32>
    %456 = arith.addf %455, %454 : vector<128x16xf32>
    %457 = arith.divf %455, %456 : vector<128x16xf32>
    %c0_201 = arith.constant 0 : index
    %c0_202 = arith.constant 0 : index
    %458 = vector.load %arg12[%c0_201, %c0_202] : memref<16x32xf32, #tpu.memory_space<vmem>>, vector<16x32xf32>
    %cst_203 = arith.constant dense<0.000000e+00> : vector<128x32xf32>
    %459 = tpu.matmul %457, %458, %cst_203 {dimension_numbers = #tpu.dot_dimension_numbers<[1], [0], [0], [1], [0, 0, 1, 1], [], []>} : vector<128x16xf32>, vector<16x32xf32>, vector<128x32xf32> -> vector<128x32xf32>
    %460 = arith.mulf %422, %459 : vector<128x32xf32>
    %461 = arith.addf %460, %0 : vector<128x32xf32>
    %cst_204 = arith.constant 0.000000e+00 : f32
    %462 = vector.broadcast %cst_204 : f32 to vector<128x32xf32>
    %463 = arith.maximumf %461, %462 : vector<128x32xf32>
    %c0_205 = arith.constant 0 : index
    %c0_206 = arith.constant 0 : index
    %464 = vector.load %arg15[%c0_205, %c0_206] : memref<128x32xf32, #tpu.memory_space<vmem>>, vector<128x32xf32>
    tpu.vector_store %arg15[%c0_205, %c0_206], %463 {strides = array<i32>} : memref<128x32xf32, #tpu.memory_space<vmem>>, vector<128x32xf32>,
    return
  }
}

</mosaic_0001>

<llo_original>
// kernel: basic_block_forward.1
$region0: #{basic_block_forward.1}
  #allocation0 [shape = 'u32[]', space=smem, size = 0x4, offset = 0x4, fixed_abs, tag = 'smem constant byte address 0x4 - core index']
  #allocation1 [shape = 'u32[144,128]{1,0:T(1,128)}', space=vmem, size = 0x12000, scoped, tag = 'internal scratch']
  %s0 = inlined_call_operand.vmem [shape: f32[128,32], index: 0, kind: input, shape index: {}]
  %s1 = inlined_call_operand.vmem [shape: s32[128,32], index: 1, kind: input, shape index: {}]
  %s2 = inlined_call_operand.vmem [shape: s32[128,32], index: 2, kind: input, shape index: {}]
  %s3 = inlined_call_operand.vmem [shape: bf16[288,32], index: 3, kind: input, shape index: {}]
  %s4 = inlined_call_operand.vmem [shape: bf16[288,32], index: 4, kind: input, shape index: {}]
  %s5 = inlined_call_operand.vmem [shape: f32[1,32], index: 5, kind: input, shape index: {}]
  %s6 = inlined_call_operand.vmem [shape: f32[1,32], index: 6, kind: input, shape index: {}]
  %s7 = inlined_call_operand.vmem [shape: f32[1,32], index: 7, kind: input, shape index: {}]
  %s8 = inlined_call_operand.vmem [shape: f32[1,32], index: 8, kind: input, shape index: {}]
  %s9 = inlined_call_operand.vmem [shape: f32[1,16], index: 9, kind: input, shape index: {}]
  %s10 = inlined_call_operand.vmem [shape: f32[1,16], index: 10, kind: input, shape index: {}]
  %s11 = inlined_call_operand.vmem [shape: f32[32,16], index: 11, kind: input, shape index: {}]
  %s12 = inlined_call_operand.vmem [shape: f32[16,32], index: 12, kind: input, shape index: {}]
  %s13 = inlined_call_operand.vmem [shape: f32[2,128], index: 13, kind: input, shape index: {}]
  %s14 = inlined_call_operand.vmem [shape: f32[128,2], index: 14, kind: input, shape index: {}]
  %s15 = inlined_call_operand.hbm [shape: f32[128,32], index: 15, kind: output, shape index: {}]
  %s16 = sld [smem:[#allocation0]]
  $region70: #{basic_block_forward.1} parent=0
    _
  %s18 = ssub.s32 1, %s16
  %s19 = scalar_select 0, %s18, %s16
  $region1: #{basic_block_forward.1} parent=0
    #allocation2 [shape = 'u8[65536]{0}', space=vmem, size = 0x10000, scoped, tag = 'output window, operand 0, single buffered']
    #allocation3 [shape = 's32[1]{0}', space=sflag, size = 0x4, scoped, tag = 'scoped memory for basic_block_forward.1']
    %20 = vsyncpa [#allocation3], 0
    // Predicated region
    $region2: #{basic_block_forward.1} parent=1 // pred_check
      _
    $region3: #{basic_block_forward.1} parent=1 // pred_check_branch
      %22 = sbr.rel (0) target = $region5
    $region4: #{basic_block_forward.1} parent=1 // pred_region
      _
    $region5: #{basic_block_forward.1} parent=1 // pred_fallthru
      _
    // Predicated region
    $region6: #{basic_block_forward.1} parent=1 // pred_check
      _
    $region7: #{basic_block_forward.1} parent=1 // pred_check_branch
      %24 = sbr.rel (0) target = $region9
    $region8: #{basic_block_forward.1} parent=1 // pred_region
      _
    $region9: #{basic_block_forward.1} parent=1 // pred_fallthru
      _
    // Predicated region
    $region10: #{basic_block_forward.1} parent=1 // pred_check
      _
    $region11: #{basic_block_forward.1} parent=1 // pred_check_branch
      %26 = sbr.rel (0) target = $region13
    $region12: #{basic_block_forward.1} parent=1 // pred_region
      _
    $region13: #{basic_block_forward.1} parent=1 // pred_fallthru
      _
    // Predicated region
    $region14: #{basic_block_forward.1} parent=1 // pred_check
      _
    $region15: #{basic_block_forward.1} parent=1 // pred_check_branch
      %28 = sbr.rel (0) target = $region17
    $region16: #{basic_block_forward.1} parent=1 // pred_region
      _
    $region17: #{basic_block_forward.1} parent=1 // pred_fallthru
      _
    // Predicated region
    $region18: #{basic_block_forward.1} parent=1 // pred_check
      _
    $region19: #{basic_block_forward.1} parent=1 // pred_check_branch
      %30 = sbr.rel (0) target = $region21
    $region20: #{basic_block_forward.1} parent=1 // pred_region
      _
    $region21: #{basic_block_forward.1} parent=1 // pred_fallthru
      _
    // Predicated region
    $region22: #{basic_block_forward.1} parent=1 // pred_check
      _
    $region23: #{basic_block_forward.1} parent=1 // pred_check_branch
      %32 = sbr.rel (0) target = $region25
    $region24: #{basic_block_forward.1} parent=1 // pred_region
      _
    $region25: #{basic_block_forward.1} parent=1 // pred_fallthru
      _
    // Predicated region
    $region26: #{basic_block_forward.1} parent=1 // pred_check
      _
    $region27: #{basic_block_forward.1} parent=1 // pred_check_branch
      %34 = sbr.rel (0) target = $region29
    $region28: #{basic_block_forward.1} parent=1 // pred_region
      _
    $region29: #{basic_block_forward.1} parent=1 // pred_fallthru
      _
    // Predicated region
    $region30: #{basic_block_forward.1} parent=1 // pred_check
      _
    $region31: #{basic_block_forward.1} parent=1 // pred_check_branch
      %36 = sbr.rel (0) target = $region33
    $region32: #{basic_block_forward.1} parent=1 // pred_region
      _
    $region33: #{basic_block_forward.1} parent=1 // pred_fallthru
      _
    // Predicated region
    $region34: #{basic_block_forward.1} parent=1 // pred_check
      _
    $region35: #{basic_block_forward.1} parent=1 // pred_check_branch
      %38 = sbr.rel (0) target = $region37
    $region36: #{basic_block_forward.1} parent=1 // pred_region
      _
    $region37: #{basic_block_forward.1} parent=1 // pred_fallthru
      _
    // Predicated region
    $region38: #{basic_block_forward.1} parent=1 // pred_check
      _
    $region39: #{basic_block_forward.1} parent=1 // pred_check_branch
      %40 = sbr.rel (0) target = $region41
    $region40: #{basic_block_forward.1} parent=1 // pred_region
      _
    $region41: #{basic_block_forward.1} parent=1 // pred_fallthru
      _
    // Predicated region
    $region42: #{basic_block_forward.1} parent=1 // pred_check
      _
    $region43: #{basic_block_forward.1} parent=1 // pred_check_branch
      %42 = sbr.rel (0) target = $region45
    $region44: #{basic_block_forward.1} parent=1 // pred_region
      _
    $region45: #{basic_block_forward.1} parent=1 // pred_fallthru
      _
    // Predicated region
    $region46: #{basic_block_forward.1} parent=1 // pred_check
      _
    $region47: #{basic_block_forward.1} parent=1 // pred_check_branch
      %44 = sbr.rel (0) target = $region49
    $region48: #{basic_block_forward.1} parent=1 // pred_region
      _
    $region49: #{basic_block_forward.1} parent=1 // pred_fallthru
      _
    // Predicated region
    $region50: #{basic_block_forward.1} parent=1 // pred_check
      _
    $region51: #{basic_block_forward.1} parent=1 // pred_check_branch
      %46 = sbr.rel (0) target = $region53
    $region52: #{basic_block_forward.1} parent=1 // pred_region
      _
    $region53: #{basic_block_forward.1} parent=1 // pred_fallthru
      _
    // Predicated region
    $region54: #{basic_block_forward.1} parent=1 // pred_check
      _
    $region55: #{basic_block_forward.1} parent=1 // pred_check_branch
      %48 = sbr.rel (0) target = $region57
    $region56: #{basic_block_forward.1} parent=1 // pred_region
      _
    $region57: #{basic_block_forward.1} parent=1 // pred_fallthru
      _
    // Predicated region
    $region58: #{basic_block_forward.1} parent=1 // pred_check
      _
    $region59: #{basic_block_forward.1} parent=1 // pred_check_branch
      %50 = sbr.rel (0) target = $region61
    $region60: #{basic_block_forward.1} parent=1 // pred_region
      _
    $region61: #{basic_block_forward.1} parent=1 // pred_fallthru
      _
    %v52 = vld [vmem:[%s0] sm:$0xff]
    %v53 = vld [vmem:[%s0 + $0x8] sm:$0xff]
    %v54 = vld [vmem:[%s0 + $0x10] sm:$0xff]
    %v55 = vld [vmem:[%s0 + $0x18] sm:$0xff]
    %v56 = vld [vmem:[%s0 + $0x20] sm:$0xff]
    %v57 = vld [vmem:[%s0 + $0x28] sm:$0xff]
    %v58 = vld [vmem:[%s0 + $0x30] sm:$0xff]
    %v59 = vld [vmem:[%s0 + $0x38] sm:$0xff]
    %v60 = vld [vmem:[%s0 + $0x40] sm:$0xff]
    %v61 = vld [vmem:[%s0 + $0x48] sm:$0xff]
    %v62 = vld [vmem:[%s0 + $0x50] sm:$0xff]
    %v63 = vld [vmem:[%s0 + $0x58] sm:$0xff]
    %v64 = vld [vmem:[%s0 + $0x60] sm:$0xff]
    %v65 = vld [vmem:[%s0 + $0x68] sm:$0xff]
    %v66 = vld [vmem:[%s0 + $0x70] sm:$0xff]
    %v67 = vld [vmem:[%s0 + $0x78] sm:$0xff]
    %v68 = vld [vmem:[%s1] sm:$0xff]
    %v69 = vld [vmem:[%s1 + $0x8] sm:$0xff]
    %v70 = vld [vmem:[%s1 + $0x10] sm:$0xff]
    %v71 = vld [vmem:[%s1 + $0x18] sm:$0xff]
    %v72 = vld [vmem:[%s1 + $0x20] sm:$0xff]
    %v73 = vld [vmem:[%s1 + $0x28] sm:$0xff]
    %v74 = vld [vmem:[%s1 + $0x30] sm:$0xff]
    %v75 = vld [vmem:[%s1 + $0x38] sm:$0xff]
    %v76 = vld [vmem:[%s1 + $0x40] sm:$0xff]
    %v77 = vld [vmem:[%s1 + $0x48] sm:$0xff]
    %v78 = vld [vmem:[%s1 + $0x50] sm:$0xff]
    %v79 = vld [vmem:[%s1 + $0x58] sm:$0xff]
    %v80 = vld [vmem:[%s1 + $0x60] sm:$0xff]
    %v81 = vld [vmem:[%s1 + $0x68] sm:$0xff]
    %v82 = vld [vmem:[%s1 + $0x70] sm:$0xff]
    %v83 = vld [vmem:[%s1 + $0x78] sm:$0xff]
    %v84 = vld [vmem:[%s2] sm:$0xff]
    %v85 = vld [vmem:[%s2 + $0x8] sm:$0xff]
    %v86 = vld [vmem:[%s2 + $0x10] sm:$0xff]
    %v87 = vld [vmem:[%s2 + $0x18] sm:$0xff]
    %v88 = vld [vmem:[%s2 + $0x20] sm:$0xff]
    %v89 = vld [vmem:[%s2 + $0x28] sm:$0xff]
    %v90 = vld [vmem:[%s2 + $0x30] sm:$0xff]
    %v91 = vld [vmem:[%s2 + $0x38] sm:$0xff]
    %v92 = vld [vmem:[%s2 + $0x40] sm:$0xff]
    %v93 = vld [vmem:[%s2 + $0x48] sm:$0xff]
    %v94 = vld [vmem:[%s2 + $0x50] sm:$0xff]
    %v95 = vld [vmem:[%s2 + $0x58] sm:$0xff]
    %v96 = vld [vmem:[%s2 + $0x60] sm:$0xff]
    %v97 = vld [vmem:[%s2 + $0x68] sm:$0xff]
    %v98 = vld [vmem:[%s2 + $0x70] sm:$0xff]
    %v99 = vld [vmem:[%s2 + $0x78] sm:$0xff]
    %v100 = vrot.slane %v52, 7
    %v101 = vrot.slane %v53, 7
    %v102 = vrot.slane %v54, 7
    %v103 = vrot.slane %v55, 7
    %v104 = vrot.slane %v56, 7
    %v105 = vrot.slane %v57, 7
    %v106 = vrot.slane %v58, 7
    %v107 = vrot.slane %v59, 7
    %v108 = vrot.slane %v60, 7
    %v109 = vrot.slane %v61, 7
    %v110 = vrot.slane %v62, 7
    %v111 = vrot.slane %v63, 7
    %v112 = vrot.slane %v64, 7
    %v113 = vrot.slane %v65, 7
    %v114 = vrot.slane %v66, 7
    %v115 = vrot.slane %v67, 7
    %v116 = vlaneseq
    %v117 = vshrl.u32 %v116, 7
    %vm118 = vcmp.lt.s32.totalorder %v117, 1
    %v119 = vsel %vm118, %v114, %v115
    %v120 = vsel %vm118, %v113, %v114
    %v121 = vsel %vm118, %v112, %v113
    %v122 = vsel %vm118, %v111, %v112
    %v123 = vsel %vm118, %v110, %v111
    %v124 = vsel %vm118, %v109, %v110
    %v125 = vsel %vm118, %v108, %v109
    %v126 = vsel %vm118, %v107, %v108
    %v127 = vsel %vm118, %v106, %v107
    %v128 = vsel %vm118, %v105, %v106
    %v129 = vsel %vm118, %v104, %v105
    %v130 = vsel %vm118, %v103, %v104
    %v131 = vsel %vm118, %v102, %v103
    %v132 = vsel %vm118, %v101, %v102
    %v133 = vsel %vm118, %v100, %v101
    %v134 = vsel %vm118, %v115, %v100
    %v135 = vadd.s32 %v68, 4294967295
    %v136 = vadd.s32 %v69, 4294967295
    %v137 = vadd.s32 %v70, 4294967295
    %v138 = vadd.s32 %v71, 4294967295
    %v139 = vadd.s32 %v72, 4294967295
    %v140 = vadd.s32 %v73, 4294967295
    %v141 = vadd.s32 %v74, 4294967295
    %v142 = vadd.s32 %v75, 4294967295
    %v143 = vadd.s32 %v76, 4294967295
    %v144 = vadd.s32 %v77, 4294967295
    %v145 = vadd.s32 %v78, 4294967295
    %v146 = vadd.s32 %v79, 4294967295
    %v147 = vadd.s32 %v80, 4294967295
    %v148 = vadd.s32 %v81, 4294967295
    %v149 = vadd.s32 %v82, 4294967295
    %v150 = vadd.s32 %v83, 4294967295
    %vm151 = vcmp.ge.s32.totalorder %v135, 0
    %vm152 = vcmp.ge.s32.totalorder %v136, 0
    %vm153 = vcmp.ge.s32.totalorder %v137, 0
    %vm154 = vcmp.ge.s32.totalorder %v138, 0
    %vm155 = vcmp.ge.s32.totalorder %v139, 0
    %vm156 = vcmp.ge.s32.totalorder %v140, 0
    %vm157 = vcmp.ge.s32.totalorder %v141, 0
    %vm158 = vcmp.ge.s32.totalorder %v142, 0
    %vm159 = vcmp.ge.s32.totalorder %v143, 0
    %vm160 = vcmp.ge.s32.totalorder %v144, 0
    %vm161 = vcmp.ge.s32.totalorder %v145, 0
    %vm162 = vcmp.ge.s32.totalorder %v146, 0
    %vm163 = vcmp.ge.s32.totalorder %v147, 0
    %vm164 = vcmp.ge.s32.totalorder %v148, 0
    %vm165 = vcmp.ge.s32.totalorder %v149, 0
    %vm166 = vcmp.ge.s32.totalorder %v150, 0
    %vm167 = vcmp.lt.s32.totalorder %v135, 8
    %vm168 = vcmp.lt.s32.totalorder %v136, 8
    %vm169 = vcmp.lt.s32.totalorder %v137, 8
    %vm170 = vcmp.lt.s32.totalorder %v138, 8
    %vm171 = vcmp.lt.s32.totalorder %v139, 8
    %vm172 = vcmp.lt.s32.totalorder %v140, 8
    %vm173 = vcmp.lt.s32.totalorder %v141, 8
    %vm174 = vcmp.lt.s32.totalorder %v142, 8
    %vm175 = vcmp.lt.s32.totalorder %v143, 8
    %vm176 = vcmp.lt.s32.totalorder %v144, 8
    %vm177 = vcmp.lt.s32.totalorder %v145, 8
    %vm178 = vcmp.lt.s32.totalorder %v146, 8
    %vm179 = vcmp.lt.s32.totalorder %v147, 8
    %vm180 = vcmp.lt.s32.totalorder %v148, 8
    %vm181 = vcmp.lt.s32.totalorder %v149, 8
    %vm182 = vcmp.lt.s32.totalorder %v150, 8
    %vm183 = vmand %vm151, %vm167
    %vm184 = vmand %vm152, %vm168
    %vm185 = vmand %vm153, %vm169
    %vm186 = vmand %vm154, %vm170
    %vm187 = vmand %vm155, %vm171
    %vm188 = vmand %vm156, %vm172
    %vm189 = vmand %vm157, %vm173
    %vm190 = vmand %vm158, %vm174
    %vm191 = vmand %vm159, %vm175
    %vm192 = vmand %vm160, %vm176
    %vm193 = vmand %vm161, %vm177
    %vm194 = vmand %vm162, %vm178
    %vm195 = vmand %vm163, %vm179
    %vm196 = vmand %vm164, %vm180
    %vm197 = vmand %vm165, %vm181
    %vm198 = vmand %vm166, %vm182
    %v199 = vadd.s32 %v84, 4294967295
    %v200 = vadd.s32 %v85, 4294967295
    %v201 = vadd.s32 %v86, 4294967295
    %v202 = vadd.s32 %v87, 4294967295
    %v203 = vadd.s32 %v88, 4294967295
    %v204 = vadd.s32 %v89, 4294967295
    %v205 = vadd.s32 %v90, 4294967295
    %v206 = vadd.s32 %v91, 4294967295
    %v207 = vadd.s32 %v92, 4294967295
    %v208 = vadd.s32 %v93, 4294967295
    %v209 = vadd.s32 %v94, 4294967295
    %v210 = vadd.s32 %v95, 4294967295
    %v211 = vadd.s32 %v96, 4294967295
    %v212 = vadd.s32 %v97, 4294967295
    %v213 = vadd.s32 %v98, 4294967295
    %v214 = vadd.s32 %v99, 4294967295
    %vm215 = vcmp.ge.s32.totalorder %v199, 0
    %vm216 = vcmp.ge.s32.totalorder %v200, 0
    %vm217 = vcmp.ge.s32.totalorder %v201, 0
    %vm218 = vcmp.ge.s32.totalorder %v202, 0
    %vm219 = vcmp.ge.s32.totalorder %v203, 0
    %vm220 = vcmp.ge.s32.totalorder %v204, 0
    %vm221 = vcmp.ge.s32.totalorder %v205, 0
    %vm222 = vcmp.ge.s32.totalorder %v206, 0
    %vm223 = vcmp.ge.s32.totalorder %v207, 0
    %vm224 = vcmp.ge.s32.totalorder %v208, 0
    %vm225 = vcmp.ge.s32.totalorder %v209, 0
    %vm226 = vcmp.ge.s32.totalorder %v210, 0
    %vm227 = vcmp.ge.s32.totalorder %v211, 0
    %vm228 = vcmp.ge.s32.totalorder %v212, 0
    %vm229 = vcmp.ge.s32.totalorder %v213, 0
    %vm230 = vcmp.ge.s32.totalorder %v214, 0
    %vm231 = vmand %vm183, %vm215
    %vm232 = vmand %vm184, %vm216
    %vm233 = vmand %vm185, %vm217
    %vm234 = vmand %vm186, %vm218
    %vm235 = vmand %vm187, %vm219
    %vm236 = vmand %vm188, %vm220
    %vm237 = vmand %vm189, %vm221
    %vm238 = vmand %vm190, %vm222
    %vm239 = vmand %vm191, %vm223
    %vm240 = vmand %vm192, %vm224
    %vm241 = vmand %vm193, %vm225
    %vm242 = vmand %vm194, %vm226
    %vm243 = vmand %vm195, %vm227
    %vm244 = vmand %vm196, %vm228
    %vm245 = vmand %vm197, %vm229
    %vm246 = vmand %vm198, %vm230
    %vm247 = vcmp.lt.s32.totalorder %v199, 8
    %vm248 = vcmp.lt.s32.totalorder %v200, 8
    %vm249 = vcmp.lt.s32.totalorder %v201, 8
    %vm250 = vcmp.lt.s32.totalorder %v202, 8
    %vm251 = vcmp.lt.s32.totalorder %v203, 8
    %vm252 = vcmp.lt.s32.totalorder %v204, 8
    %vm253 = vcmp.lt.s32.totalorder %v205, 8
    %vm254 = vcmp.lt.s32.totalorder %v206, 8
    %vm255 = vcmp.lt.s32.totalorder %v207, 8
    %vm256 = vcmp.lt.s32.totalorder %v208, 8
    %vm257 = vcmp.lt.s32.totalorder %v209, 8
    %vm258 = vcmp.lt.s32.totalorder %v210, 8
    %vm259 = vcmp.lt.s32.totalorder %v211, 8
    %vm260 = vcmp.lt.s32.totalorder %v212, 8
    %vm261 = vcmp.lt.s32.totalorder %v213, 8
    %vm262 = vcmp.lt.s32.totalorder %v214, 8
    %vm263 = vmand %vm231, %vm247
    %vm264 = vmand %vm232, %vm248
    %vm265 = vmand %vm233, %vm249
    %vm266 = vmand %vm234, %vm250
    %vm267 = vmand %vm235, %vm251
    %vm268 = vmand %vm236, %vm252
    %vm269 = vmand %vm237, %vm253
    %vm270 = vmand %vm238, %vm254
    %vm271 = vmand %vm239, %vm255
    %vm272 = vmand %vm240, %vm256
    %vm273 = vmand %vm241, %vm257
    %vm274 = vmand %vm242, %vm258
    %vm275 = vmand %vm243, %vm259
    %vm276 = vmand %vm244, %vm260
    %vm277 = vmand %vm245, %vm261
    %vm278 = vmand %vm246, %vm262
    %v279 = vsel %vm263, %v119, 0.0
    %v280 = vsel %vm264, %v134, 0.0
    %v281 = vsel %vm265, %v133, 0.0
    %v282 = vsel %vm266, %v132, 0.0
    %v283 = vsel %vm267, %v131, 0.0
    %v284 = vsel %vm268, %v130, 0.0
    %v285 = vsel %vm269, %v129, 0.0
    %v286 = vsel %vm270, %v128, 0.0
    %v287 = vsel %vm271, %v127, 0.0
    %v288 = vsel %vm272, %v126, 0.0
    %v289 = vsel %vm273, %v125, 0.0
    %v290 = vsel %vm274, %v124, 0.0
    %v291 = vsel %vm275, %v123, 0.0
    %v292 = vsel %vm276, %v122, 0.0
    %v293 = vsel %vm277, %v121, 0.0
    %v294 = vsel %vm278, %v120, 0.0
    %v295 = vpack.c.bf16 %v280, %v279
    %v296 = vpack.c.bf16 %v282, %v281
    %v297 = vpack.c.bf16 %v284, %v283
    %v298 = vpack.c.bf16 %v286, %v285
    %v299 = vpack.c.bf16 %v288, %v287
    %v300 = vpack.c.bf16 %v290, %v289
    %v301 = vpack.c.bf16 %v292, %v291
    %v302 = vpack.c.bf16 %v294, %v293
    %vm303 = vcmp.ge.s32.totalorder %v84, 0
    %vm304 = vcmp.ge.s32.totalorder %v85, 0
    %vm305 = vcmp.ge.s32.totalorder %v86, 0
    %vm306 = vcmp.ge.s32.totalorder %v87, 0
    %vm307 = vcmp.ge.s32.totalorder %v88, 0
    %vm308 = vcmp.ge.s32.totalorder %v89, 0
    %vm309 = vcmp.ge.s32.totalorder %v90, 0
    %vm310 = vcmp.ge.s32.totalorder %v91, 0
    %vm311 = vcmp.ge.s32.totalorder %v92, 0
    %vm312 = vcmp.ge.s32.totalorder %v93, 0
    %vm313 = vcmp.ge.s32.totalorder %v94, 0
    %vm314 = vcmp.ge.s32.totalorder %v95, 0
    %vm315 = vcmp.ge.s32.totalorder %v96, 0
    %vm316 = vcmp.ge.s32.totalorder %v97, 0
    %vm317 = vcmp.ge.s32.totalorder %v98, 0
    %vm318 = vcmp.ge.s32.totalorder %v99, 0
    %vm319 = vmand %vm183, %vm303
    %vm320 = vmand %vm184, %vm304
    %vm321 = vmand %vm185, %vm305
    %vm322 = vmand %vm186, %vm306
    %vm323 = vmand %vm187, %vm307
    %vm324 = vmand %vm188, %vm308
    %vm325 = vmand %vm189, %vm309
    %vm326 = vmand %vm190, %vm310
    %vm327 = vmand %vm191, %vm311
    %vm328 = vmand %vm192, %vm312
    %vm329 = vmand %vm193, %vm313
    %vm330 = vmand %vm194, %vm314
    %vm331 = vmand %vm195, %vm315
    %vm332 = vmand %vm196, %vm316
    %vm333 = vmand %vm197, %vm317
    %vm334 = vmand %vm198, %vm318
    %vm335 = vcmp.lt.s32.totalorder %v84, 8
    %vm336 = vcmp.lt.s32.totalorder %v85, 8
    %vm337 = vcmp.lt.s32.totalorder %v86, 8
    %vm338 = vcmp.lt.s32.totalorder %v87, 8
    %vm339 = vcmp.lt.s32.totalorder %v88, 8
    %vm340 = vcmp.lt.s32.totalorder %v89, 8
    %vm341 = vcmp.lt.s32.totalorder %v90, 8
    %vm342 = vcmp.lt.s32.totalorder %v91, 8
    %vm343 = vcmp.lt.s32.totalorder %v92, 8
    %vm344 = vcmp.lt.s32.totalorder %v93, 8
    %vm345 = vcmp.lt.s32.totalorder %v94, 8
    %vm346 = vcmp.lt.s32.totalorder %v95, 8
    %vm347 = vcmp.lt.s32.totalorder %v96, 8
    %vm348 = vcmp.lt.s32.totalorder %v97, 8
    %vm349 = vcmp.lt.s32.totalorder %v98, 8
    %vm350 = vcmp.lt.s32.totalorder %v99, 8
    %vm351 = vmand %vm319, %vm335
    %vm352 = vmand %vm320, %vm336
    %vm353 = vmand %vm321, %vm337
    %vm354 = vmand %vm322, %vm338
    %vm355 = vmand %vm323, %vm339
    %vm356 = vmand %vm324, %vm340
    %vm357 = vmand %vm325, %vm341
    %vm358 = vmand %vm326, %vm342
    %vm359 = vmand %vm327, %vm343
    %vm360 = vmand %vm328, %vm344
    %vm361 = vmand %vm329, %vm345
    %vm362 = vmand %vm330, %vm346
    %vm363 = vmand %vm331, %vm347
    %vm364 = vmand %vm332, %vm348
    %vm365 = vmand %vm333, %vm349
    %vm366 = vmand %vm334, %vm350
    %v367 = vsel %vm351, %v67, 0.0
    %v368 = vsel %vm352, %v52, 0.0
    %v369 = vsel %vm353, %v53, 0.0
    %v370 = vsel %vm354, %v54, 0.0
    %v371 = vsel %vm355, %v55, 0.0
    %v372 = vsel %vm356, %v56, 0.0
    %v373 = vsel %vm357, %v57, 0.0
    %v374 = vsel %vm358, %v58, 0.0
    %v375 = vsel %vm359, %v59, 0.0
    %v376 = vsel %vm360, %v60, 0.0
    %v377 = vsel %vm361, %v61, 0.0
    %v378 = vsel %vm362, %v62, 0.0
    %v379 = vsel %vm363, %v63, 0.0
    %v380 = vsel %vm364, %v64, 0.0
    %v381 = vsel %vm365, %v65, 0.0
    %v382 = vsel %vm366, %v66, 0.0
    %v383 = vpack.c.bf16 %v368, %v367
    %v384 = vpack.c.bf16 %v370, %v369
    %v385 = vpack.c.bf16 %v372, %v371
    %v386 = vpack.c.bf16 %v374, %v373
    %v387 = vpack.c.bf16 %v376, %v375
    %v388 = vpack.c.bf16 %v378, %v377
    %v389 = vpack.c.bf16 %v380, %v379
    %v390 = vpack.c.bf16 %v382, %v381
    %v391 = vrot.slane %v52, 1
    %v392 = vrot.slane %v53, 1
    %v393 = vrot.slane %v54, 1
    %v394 = vrot.slane %v55, 1
    %v395 = vrot.slane %v56, 1
    %v396 = vrot.slane %v57, 1
    %v397 = vrot.slane %v58, 1
    %v398 = vrot.slane %v59, 1
    %v399 = vrot.slane %v60, 1
    %v400 = vrot.slane %v61, 1
    %v401 = vrot.slane %v62, 1
    %v402 = vrot.slane %v63, 1
    %v403 = vrot.slane %v64, 1
    %v404 = vrot.slane %v65, 1
    %v405 = vrot.slane %v66, 1
    %v406 = vrot.slane %v67, 1
    %vm407 = vcmp.lt.s32.totalorder %v117, 7
    %v408 = vsel %vm407, %v405, %v406
    %v409 = vsel %vm407, %v404, %v405
    %v410 = vsel %vm407, %v403, %v404
    %v411 = vsel %vm407, %v402, %v403
    %v412 = vsel %vm407, %v401, %v402
    %v413 = vsel %vm407, %v400, %v401
    %v414 = vsel %vm407, %v399, %v400
    %v415 = vsel %vm407, %v398, %v399
    %v416 = vsel %vm407, %v397, %v398
    %v417 = vsel %vm407, %v396, %v397
    %v418 = vsel %vm407, %v395, %v396
    %v419 = vsel %vm407, %v394, %v395
    %v420 = vsel %vm407, %v393, %v394
    %v421 = vsel %vm407, %v392, %v393
    %v422 = vsel %vm407, %v391, %v392
    %v423 = vsel %vm407, %v406, %v391
    %v424 = vadd.s32 %v84, 1
    %v425 = vadd.s32 %v85, 1
    %v426 = vadd.s32 %v86, 1
    %v427 = vadd.s32 %v87, 1
    %v428 = vadd.s32 %v88, 1
    %v429 = vadd.s32 %v89, 1
    %v430 = vadd.s32 %v90, 1
    %v431 = vadd.s32 %v91, 1
    %v432 = vadd.s32 %v92, 1
    %v433 = vadd.s32 %v93, 1
    %v434 = vadd.s32 %v94, 1
    %v435 = vadd.s32 %v95, 1
    %v436 = vadd.s32 %v96, 1
    %v437 = vadd.s32 %v97, 1
    %v438 = vadd.s32 %v98, 1
    %v439 = vadd.s32 %v99, 1
    %vm440 = vcmp.ge.s32.totalorder %v424, 0
    %vm441 = vcmp.ge.s32.totalorder %v425, 0
    %vm442 = vcmp.ge.s32.totalorder %v426, 0
    %vm443 = vcmp.ge.s32.totalorder %v427, 0
    %vm444 = vcmp.ge.s32.totalorder %v428, 0
    %vm445 = vcmp.ge.s32.totalorder %v429, 0
    %vm446 = vcmp.ge.s32.totalorder %v430, 0
    %vm447 = vcmp.ge.s32.totalorder %v431, 0
    %vm448 = vcmp.ge.s32.totalorder %v432, 0
    %vm449 = vcmp.ge.s32.totalorder %v433, 0
    %vm450 = vcmp.ge.s32.totalorder %v434, 0
    %vm451 = vcmp.ge.s32.totalorder %v435, 0
    %vm452 = vcmp.ge.s32.totalorder %v436, 0
    %vm453 = vcmp.ge.s32.totalorder %v437, 0
    %vm454 = vcmp.ge.s32.totalorder %v438, 0
    %vm455 = vcmp.ge.s32.totalorder %v439, 0
    %vm456 = vmand %vm183, %vm440
    %vm457 = vmand %vm184, %vm441
    %vm458 = vmand %vm185, %vm442
    %vm459 = vmand %vm186, %vm443
    %vm460 = vmand %vm187, %vm444
    %vm461 = vmand %vm188, %vm445
    %vm462 = vmand %vm189, %vm446
    %vm463 = vmand %vm190, %vm447
    %vm464 = vmand %vm191, %vm448
    %vm465 = vmand %vm192, %vm449
    %vm466 = vmand %vm193, %vm450
    %vm467 = vmand %vm194, %vm451
    %vm468 = vmand %vm195, %vm452
    %vm469 = vmand %vm196, %vm453
    %vm470 = vmand %vm197, %vm454
    %vm471 = vmand %vm198, %vm455
    %vm472 = vcmp.lt.s32.totalorder %v424, 8
    %vm473 = vcmp.lt.s32.totalorder %v425, 8
    %vm474 = vcmp.lt.s32.totalorder %v426, 8
    %vm475 = vcmp.lt.s32.totalorder %v427, 8
    %vm476 = vcmp.lt.s32.totalorder %v428, 8
    %vm477 = vcmp.lt.s32.totalorder %v429, 8
    %vm478 = vcmp.lt.s32.totalorder %v430, 8
    %vm479 = vcmp.lt.s32.totalorder %v431, 8
    %vm480 = vcmp.lt.s32.totalorder %v432, 8
    %vm481 = vcmp.lt.s32.totalorder %v433, 8
    %vm482 = vcmp.lt.s32.totalorder %v434, 8
    %vm483 = vcmp.lt.s32.totalorder %v435, 8
    %vm484 = vcmp.lt.s32.totalorder %v436, 8
    %vm485 = vcmp.lt.s32.totalorder %v437, 8
    %vm486 = vcmp.lt.s32.totalorder %v438, 8
    %vm487 = vcmp.lt.s32.totalorder %v439, 8
    %vm488 = vmand %vm456, %vm472
    %vm489 = vmand %vm457, %vm473
    %vm490 = vmand %vm458, %vm474
    %vm491 = vmand %vm459, %vm475
    %vm492 = vmand %vm460, %vm476
    %vm493 = vmand %vm461, %vm477
    %vm494 = vmand %vm462, %vm478
    %vm495 = vmand %vm463, %vm479
    %vm496 = vmand %vm464, %vm480
    %vm497 = vmand %vm465, %vm481
    %vm498 = vmand %vm466, %vm482
    %vm499 = vmand %vm467, %vm483
    %vm500 = vmand %vm468, %vm484
    %vm501 = vmand %vm469, %vm485
    %vm502 = vmand %vm470, %vm486
    %vm503 = vmand %vm471, %vm487
    %v504 = vsel %vm488, %v423, 0.0
    %v505 = vsel %vm489, %v422, 0.0
    %v506 = vsel %vm490, %v421, 0.0
    %v507 = vsel %vm491, %v420, 0.0
    %v508 = vsel %vm492, %v419, 0.0
    %v509 = vsel %vm493, %v418, 0.0
    %v510 = vsel %vm494, %v417, 0.0
    %v511 = vsel %vm495, %v416, 0.0
    %v512 = vsel %vm496, %v415, 0.0
    %v513 = vsel %vm497, %v414, 0.0
    %v514 = vsel %vm498, %v413, 0.0
    %v515 = vsel %vm499, %v412, 0.0
    %v516 = vsel %vm500, %v411, 0.0
    %v517 = vsel %vm501, %v410, 0.0
    %v518 = vsel %vm502, %v409, 0.0
    %v519 = vsel %vm503, %v408, 0.0
    %v520 = vpack.c.bf16 %v505, %v504
    %v521 = vpack.c.bf16 %v507, %v506
    %v522 = vpack.c.bf16 %v509, %v508
    %v523 = vpack.c.bf16 %v511, %v510
    %v524 = vpack.c.bf16 %v513, %v512
    %v525 = vpack.c.bf16 %v515, %v514
    %v526 = vpack.c.bf16 %v517, %v516
    %v527 = vpack.c.bf16 %v519, %v518
    %vm528 = vcmp.ge.s32.totalorder %v68, 0
    %vm529 = vcmp.ge.s32.totalorder %v69, 0
    %vm530 = vcmp.ge.s32.totalorder %v70, 0
    %vm531 = vcmp.ge.s32.totalorder %v71, 0
    %vm532 = vcmp.ge.s32.totalorder %v72, 0
    %vm533 = vcmp.ge.s32.totalorder %v73, 0
    %vm534 = vcmp.ge.s32.totalorder %v74, 0
    %vm535 = vcmp.ge.s32.totalorder %v75, 0
    %vm536 = vcmp.ge.s32.totalorder %v76, 0
    %vm537 = vcmp.ge.s32.totalorder %v77, 0
    %vm538 = vcmp.ge.s32.totalorder %v78, 0
    %vm539 = vcmp.ge.s32.totalorder %v79, 0
    %vm540 = vcmp.ge.s32.totalorder %v80, 0
    %vm541 = vcmp.ge.s32.totalorder %v81, 0
    %vm542 = vcmp.ge.s32.totalorder %v82, 0
    %vm543 = vcmp.ge.s32.totalorder %v83, 0
    %vm544 = vcmp.lt.s32.totalorder %v68, 8
    %vm545 = vcmp.lt.s32.totalorder %v69, 8
    %vm546 = vcmp.lt.s32.totalorder %v70, 8
    %vm547 = vcmp.lt.s32.totalorder %v71, 8
    %vm548 = vcmp.lt.s32.totalorder %v72, 8
    %vm549 = vcmp.lt.s32.totalorder %v73, 8
    %vm550 = vcmp.lt.s32.totalorder %v74, 8
    %vm551 = vcmp.lt.s32.totalorder %v75, 8
    %vm552 = vcmp.lt.s32.totalorder %v76, 8
    %vm553 = vcmp.lt.s32.totalorder %v77, 8
    %vm554 = vcmp.lt.s32.totalorder %v78, 8
    %vm555 = vcmp.lt.s32.totalorder %v79, 8
    %vm556 = vcmp.lt.s32.totalorder %v80, 8
    %vm557 = vcmp.lt.s32.totalorder %v81, 8
    %vm558 = vcmp.lt.s32.totalorder %v82, 8
    %vm559 = vcmp.lt.s32.totalorder %v83, 8
    %vm560 = vmand %vm528, %vm544
    %vm561 = vmand %vm529, %vm545
    %vm562 = vmand %vm530, %vm546
    %vm563 = vmand %vm531, %vm547
    %vm564 = vmand %vm532, %vm548
    %vm565 = vmand %vm533, %vm549
    %vm566 = vmand %vm534, %vm550
    %vm567 = vmand %vm535, %vm551
    %vm568 = vmand %vm536, %vm552
    %vm569 = vmand %vm537, %vm553
    %vm570 = vmand %vm538, %vm554
    %vm571 = vmand %vm539, %vm555
    %vm572 = vmand %vm540, %vm556
    %vm573 = vmand %vm541, %vm557
    %vm574 = vmand %vm542, %vm558
    %vm575 = vmand %vm543, %vm559
    %vm576 = vmand %vm560, %vm215
    %vm577 = vmand %vm561, %vm216
    %vm578 = vmand %vm562, %vm217
    %vm579 = vmand %vm563, %vm218
    %vm580 = vmand %vm564, %vm219
    %vm581 = vmand %vm565, %vm220
    %vm582 = vmand %vm566, %vm221
    %vm583 = vmand %vm567, %vm222
    %vm584 = vmand %vm568, %vm223
    %vm585 = vmand %vm569, %vm224
    %vm586 = vmand %vm570, %vm225
    %vm587 = vmand %vm571, %vm226
    %vm588 = vmand %vm572, %vm227
    %vm589 = vmand %vm573, %vm228
    %vm590 = vmand %vm574, %vm229
    %vm591 = vmand %vm575, %vm230
    %vm592 = vmand %vm576, %vm247
    %vm593 = vmand %vm577, %vm248
    %vm594 = vmand %vm578, %vm249
    %vm595 = vmand %vm579, %vm250
    %vm596 = vmand %vm580, %vm251
    %vm597 = vmand %vm581, %vm252
    %vm598 = vmand %vm582, %vm253
    %vm599 = vmand %vm583, %vm254
    %vm600 = vmand %vm584, %vm255
    %vm601 = vmand %vm585, %vm256
    %vm602 = vmand %vm586, %vm257
    %vm603 = vmand %vm587, %vm258
    %vm604 = vmand %vm588, %vm259
    %vm605 = vmand %vm589, %vm260
    %vm606 = vmand %vm590, %vm261
    %vm607 = vmand %vm591, %vm262
    %v608 = vsel %vm592, %v134, 0.0
    %v609 = vsel %vm593, %v133, 0.0
    %v610 = vsel %vm594, %v132, 0.0
    %v611 = vsel %vm595, %v131, 0.0
    %v612 = vsel %vm596, %v130, 0.0
    %v613 = vsel %vm597, %v129, 0.0
    %v614 = vsel %vm598, %v128, 0.0
    %v615 = vsel %vm599, %v127, 0.0
    %v616 = vsel %vm600, %v126, 0.0
    %v617 = vsel %vm601, %v125, 0.0
    %v618 = vsel %vm602, %v124, 0.0
    %v619 = vsel %vm603, %v123, 0.0
    %v620 = vsel %vm604, %v122, 0.0
    %v621 = vsel %vm605, %v121, 0.0
    %v622 = vsel %vm606, %v120, 0.0
    %v623 = vsel %vm607, %v119, 0.0
    %v624 = vpack.c.bf16 %v609, %v608
    %v625 = vpack.c.bf16 %v611, %v610
    %v626 = vpack.c.bf16 %v613, %v612
    %v627 = vpack.c.bf16 %v615, %v614
    %v628 = vpack.c.bf16 %v617, %v616
    %v629 = vpack.c.bf16 %v619, %v618
    %v630 = vpack.c.bf16 %v621, %v620
    %v631 = vpack.c.bf16 %v623, %v622
    %v632 = vpack.c.bf16 %v53, %v52
    %v633 = vpack.c.bf16 %v55, %v54
    %v634 = vpack.c.bf16 %v57, %v56
    %v635 = vpack.c.bf16 %v59, %v58
    %v636 = vpack.c.bf16 %v61, %v60
    %v637 = vpack.c.bf16 %v63, %v62
    %v638 = vpack.c.bf16 %v65, %v64
    %v639 = vpack.c.bf16 %v67, %v66
    %vm640 = vmand %vm560, %vm440
    %vm641 = vmand %vm561, %vm441
    %vm642 = vmand %vm562, %vm442
    %vm643 = vmand %vm563, %vm443
    %vm644 = vmand %vm564, %vm444
    %vm645 = vmand %vm565, %vm445
    %vm646 = vmand %vm566, %vm446
    %vm647 = vmand %vm567, %vm447
    %vm648 = vmand %vm568, %vm448
    %vm649 = vmand %vm569, %vm449
    %vm650 = vmand %vm570, %vm450
    %vm651 = vmand %vm571, %vm451
    %vm652 = vmand %vm572, %vm452
    %vm653 = vmand %vm573, %vm453
    %vm654 = vmand %vm574, %vm454
    %vm655 = vmand %vm575, %vm455
    %vm656 = vmand %vm640, %vm472
    %vm657 = vmand %vm641, %vm473
    %vm658 = vmand %vm642, %vm474
    %vm659 = vmand %vm643, %vm475
    %vm660 = vmand %vm644, %vm476
    %vm661 = vmand %vm645, %vm477
    %vm662 = vmand %vm646, %vm478
    %vm663 = vmand %vm647, %vm479
    %vm664 = vmand %vm648, %vm480
    %vm665 = vmand %vm649, %vm481
    %vm666 = vmand %vm650, %vm482
    %vm667 = vmand %vm651, %vm483
    %vm668 = vmand %vm652, %vm484
    %vm669 = vmand %vm653, %vm485
    %vm670 = vmand %vm654, %vm486
    %vm671 = vmand %vm655, %vm487
    %v672 = vsel %vm656, %v422, 0.0
    %v673 = vsel %vm657, %v421, 0.0
    %v674 = vsel %vm658, %v420, 0.0
    %v675 = vsel %vm659, %v419, 0.0
    %v676 = vsel %vm660, %v418, 0.0
    %v677 = vsel %vm661, %v417, 0.0
    %v678 = vsel %vm662, %v416, 0.0
    %v679 = vsel %vm663, %v415, 0.0
    %v680 = vsel %vm664, %v414, 0.0
    %v681 = vsel %vm665, %v413, 0.0
    %v682 = vsel %vm666, %v412, 0.0
    %v683 = vsel %vm667, %v411, 0.0
    %v684 = vsel %vm668, %v410, 0.0
    %v685 = vsel %vm669, %v409, 0.0
    %v686 = vsel %vm670, %v408, 0.0
    %v687 = vsel %vm671, %v423, 0.0
    %v688 = vpack.c.bf16 %v673, %v672
    %v689 = vpack.c.bf16 %v675, %v674
    %v690 = vpack.c.bf16 %v677, %v676
    %v691 = vpack.c.bf16 %v679, %v678
    %v692 = vpack.c.bf16 %v681, %v680
    %v693 = vpack.c.bf16 %v683, %v682
    %v694 = vpack.c.bf16 %v685, %v684
    %v695 = vpack.c.bf16 %v687, %v686
    %v696 = vadd.s32 %v68, 1
    %v697 = vadd.s32 %v69, 1
    %v698 = vadd.s32 %v70, 1
    %v699 = vadd.s32 %v71, 1
    %v700 = vadd.s32 %v72, 1
    %v701 = vadd.s32 %v73, 1
    %v702 = vadd.s32 %v74, 1
    %v703 = vadd.s32 %v75, 1
    %v704 = vadd.s32 %v76, 1
    %v705 = vadd.s32 %v77, 1
    %v706 = vadd.s32 %v78, 1
    %v707 = vadd.s32 %v79, 1
    %v708 = vadd.s32 %v80, 1
    %v709 = vadd.s32 %v81, 1
    %v710 = vadd.s32 %v82, 1
    %v711 = vadd.s32 %v83, 1
    %vm712 = vcmp.ge.s32.totalorder %v696, 0
    %vm713 = vcmp.ge.s32.totalorder %v697, 0
    %vm714 = vcmp.ge.s32.totalorder %v698, 0
    %vm715 = vcmp.ge.s32.totalorder %v699, 0
    %vm716 = vcmp.ge.s32.totalorder %v700, 0
    %vm717 = vcmp.ge.s32.totalorder %v701, 0
    %vm718 = vcmp.ge.s32.totalorder %v702, 0
    %vm719 = vcmp.ge.s32.totalorder %v703, 0
    %vm720 = vcmp.ge.s32.totalorder %v704, 0
    %vm721 = vcmp.ge.s32.totalorder %v705, 0
    %vm722 = vcmp.ge.s32.totalorder %v706, 0
    %vm723 = vcmp.ge.s32.totalorder %v707, 0
    %vm724 = vcmp.ge.s32.totalorder %v708, 0
    %vm725 = vcmp.ge.s32.totalorder %v709, 0
    %vm726 = vcmp.ge.s32.totalorder %v710, 0
    %vm727 = vcmp.ge.s32.totalorder %v711, 0
    %vm728 = vcmp.lt.s32.totalorder %v696, 8
    %vm729 = vcmp.lt.s32.totalorder %v697, 8
    %vm730 = vcmp.lt.s32.totalorder %v698, 8
    %vm731 = vcmp.lt.s32.totalorder %v699, 8
    %vm732 = vcmp.lt.s32.totalorder %v700, 8
    %vm733 = vcmp.lt.s32.totalorder %v701, 8
    %vm734 = vcmp.lt.s32.totalorder %v702, 8
    %vm735 = vcmp.lt.s32.totalorder %v703, 8
    %vm736 = vcmp.lt.s32.totalorder %v704, 8
    %vm737 = vcmp.lt.s32.totalorder %v705, 8
    %vm738 = vcmp.lt.s32.totalorder %v706, 8
    %vm739 = vcmp.lt.s32.totalorder %v707, 8
    %vm740 = vcmp.lt.s32.totalorder %v708, 8
    %vm741 = vcmp.lt.s32.totalorder %v709, 8
    %vm742 = vcmp.lt.s32.totalorder %v710, 8
    %vm743 = vcmp.lt.s32.totalorder %v711, 8
    %vm744 = vmand %vm712, %vm728
    %vm745 = vmand %vm713, %vm729
    %vm746 = vmand %vm714, %vm730
    %vm747 = vmand %vm715, %vm731
    %vm748 = vmand %vm716, %vm732
    %vm749 = vmand %vm717, %vm733
    %vm750 = vmand %vm718, %vm734
    %vm751 = vmand %vm719, %vm735
    %vm752 = vmand %vm720, %vm736
    %vm753 = vmand %vm721, %vm737
    %vm754 = vmand %vm722, %vm738
    %vm755 = vmand %vm723, %vm739
    %vm756 = vmand %vm724, %vm740
    %vm757 = vmand %vm725, %vm741
    %vm758 = vmand %vm726, %vm742
    %vm759 = vmand %vm727, %vm743
    %vm760 = vmand %vm744, %vm215
    %vm761 = vmand %vm745, %vm216
    %vm762 = vmand %vm746, %vm217
    %vm763 = vmand %vm747, %vm218
    %vm764 = vmand %vm748, %vm219
    %vm765 = vmand %vm749, %vm220
    %vm766 = vmand %vm750, %vm221
    %vm767 = vmand %vm751, %vm222
    %vm768 = vmand %vm752, %vm223
    %vm769 = vmand %vm753, %vm224
    %vm770 = vmand %vm754, %vm225
    %vm771 = vmand %vm755, %vm226
    %vm772 = vmand %vm756, %vm227
    %vm773 = vmand %vm757, %vm228
    %vm774 = vmand %vm758, %vm229
    %vm775 = vmand %vm759, %vm230
    %vm776 = vmand %vm760, %vm247
    %vm777 = vmand %vm761, %vm248
    %vm778 = vmand %vm762, %vm249
    %vm779 = vmand %vm763, %vm250
    %vm780 = vmand %vm764, %vm251
    %vm781 = vmand %vm765, %vm252
    %vm782 = vmand %vm766, %vm253
    %vm783 = vmand %vm767, %vm254
    %vm784 = vmand %vm768, %vm255
    %vm785 = vmand %vm769, %vm256
    %vm786 = vmand %vm770, %vm257
    %vm787 = vmand %vm771, %vm258
    %vm788 = vmand %vm772, %vm259
    %vm789 = vmand %vm773, %vm260
    %vm790 = vmand %vm774, %vm261
    %vm791 = vmand %vm775, %vm262
    %v792 = vsel %vm776, %v133, 0.0
    %v793 = vsel %vm777, %v132, 0.0
    %v794 = vsel %vm778, %v131, 0.0
    %v795 = vsel %vm779, %v130, 0.0
    %v796 = vsel %vm780, %v129, 0.0
    %v797 = vsel %vm781, %v128, 0.0
    %v798 = vsel %vm782, %v127, 0.0
    %v799 = vsel %vm783, %v126, 0.0
    %v800 = vsel %vm784, %v125, 0.0
    %v801 = vsel %vm785, %v124, 0.0
    %v802 = vsel %vm786, %v123, 0.0
    %v803 = vsel %vm787, %v122, 0.0
    %v804 = vsel %vm788, %v121, 0.0
    %v805 = vsel %vm789, %v120, 0.0
    %v806 = vsel %vm790, %v119, 0.0
    %v807 = vsel %vm791, %v134, 0.0
    %v808 = vpack.c.bf16 %v793, %v792
    %v809 = vpack.c.bf16 %v795, %v794
    %v810 = vpack.c.bf16 %v797, %v796
    %v811 = vpack.c.bf16 %v799, %v798
    %v812 = vpack.c.bf16 %v801, %v800
    %v813 = vpack.c.bf16 %v803, %v802
    %v814 = vpack.c.bf16 %v805, %v804
    %v815 = vpack.c.bf16 %v807, %v806
    %vm816 = vmand %vm744, %vm303
    %vm817 = vmand %vm745, %vm304
    %vm818 = vmand %vm746, %vm305
    %vm819 = vmand %vm747, %vm306
    %vm820 = vmand %vm748, %vm307
    %vm821 = vmand %vm749, %vm308
    %vm822 = vmand %vm750, %vm309
    %vm823 = vmand %vm751, %vm310
    %vm824 = vmand %vm752, %vm311
    %vm825 = vmand %vm753, %vm312
    %vm826 = vmand %vm754, %vm313
    %vm827 = vmand %vm755, %vm314
    %vm828 = vmand %vm756, %vm315
    %vm829 = vmand %vm757, %vm316
    %vm830 = vmand %vm758, %vm317
    %vm831 = vmand %vm759, %vm318
    %vm832 = vmand %vm816, %vm335
    %vm833 = vmand %vm817, %vm336
    %vm834 = vmand %vm818, %vm337
    %vm835 = vmand %vm819, %vm338
    %vm836 = vmand %vm820, %vm339
    %vm837 = vmand %vm821, %vm340
    %vm838 = vmand %vm822, %vm341
    %vm839 = vmand %vm823, %vm342
    %vm840 = vmand %vm824, %vm343
    %vm841 = vmand %vm825, %vm344
    %vm842 = vmand %vm826, %vm345
    %vm843 = vmand %vm827, %vm346
    %vm844 = vmand %vm828, %vm347
    %vm845 = vmand %vm829, %vm348
    %vm846 = vmand %vm830, %vm349
    %vm847 = vmand %vm831, %vm350
    %v848 = vsel %vm832, %v53, 0.0
    %v849 = vsel %vm833, %v54, 0.0
    %v850 = vsel %vm834, %v55, 0.0
    %v851 = vsel %vm835, %v56, 0.0
    %v852 = vsel %vm836, %v57, 0.0
    %v853 = vsel %vm837, %v58, 0.0
    %v854 = vsel %vm838, %v59, 0.0
    %v855 = vsel %vm839, %v60, 0.0
    %v856 = vsel %vm840, %v61, 0.0
    %v857 = vsel %vm841, %v62, 0.0
    %v858 = vsel %vm842, %v63, 0.0
    %v859 = vsel %vm843, %v64, 0.0
    %v860 = vsel %vm844, %v65, 0.0
    %v861 = vsel %vm845, %v66, 0.0
    %v862 = vsel %vm846, %v67, 0.0
    %v863 = vsel %vm847, %v52, 0.0
    %v864 = vpack.c.bf16 %v849, %v848
    %v865 = vpack.c.bf16 %v851, %v850
    %v866 = vpack.c.bf16 %v853, %v852
    %v867 = vpack.c.bf16 %v855, %v854
    %v868 = vpack.c.bf16 %v857, %v856
    %v869 = vpack.c.bf16 %v859, %v858
    %v870 = vpack.c.bf16 %v861, %v860
    %v871 = vpack.c.bf16 %v863, %v862
    %vm872 = vmand %vm744, %vm440
    %vm873 = vmand %vm745, %vm441
    %vm874 = vmand %vm746, %vm442
    %vm875 = vmand %vm747, %vm443
    %vm876 = vmand %vm748, %vm444
    %vm877 = vmand %vm749, %vm445
    %vm878 = vmand %vm750, %vm446
    %vm879 = vmand %vm751, %vm447
    %vm880 = vmand %vm752, %vm448
    %vm881 = vmand %vm753, %vm449
    %vm882 = vmand %vm754, %vm450
    %vm883 = vmand %vm755, %vm451
    %vm884 = vmand %vm756, %vm452
    %vm885 = vmand %vm757, %vm453
    %vm886 = vmand %vm758, %vm454
    %vm887 = vmand %vm759, %vm455
    %vm888 = vmand %vm872, %vm472
    %vm889 = vmand %vm873, %vm473
    %vm890 = vmand %vm874, %vm474
    %vm891 = vmand %vm875, %vm475
    %vm892 = vmand %vm876, %vm476
    %vm893 = vmand %vm877, %vm477
    %vm894 = vmand %vm878, %vm478
    %vm895 = vmand %vm879, %vm479
    %vm896 = vmand %vm880, %vm480
    %vm897 = vmand %vm881, %vm481
    %vm898 = vmand %vm882, %vm482
    %vm899 = vmand %vm883, %vm483
    %vm900 = vmand %vm884, %vm484
    %vm901 = vmand %vm885, %vm485
    %vm902 = vmand %vm886, %vm486
    %vm903 = vmand %vm887, %vm487
    %v904 = vsel %vm888, %v421, 0.0
    %v905 = vsel %vm889, %v420, 0.0
    %v906 = vsel %vm890, %v419, 0.0
    %v907 = vsel %vm891, %v418, 0.0
    %v908 = vsel %vm892, %v417, 0.0
    %v909 = vsel %vm893, %v416, 0.0
    %v910 = vsel %vm894, %v415, 0.0
    %v911 = vsel %vm895, %v414, 0.0
    %v912 = vsel %vm896, %v413, 0.0
    %v913 = vsel %vm897, %v412, 0.0
    %v914 = vsel %vm898, %v411, 0.0
    %v915 = vsel %vm899, %v410, 0.0
    %v916 = vsel %vm900, %v409, 0.0
    %v917 = vsel %vm901, %v408, 0.0
    %v918 = vsel %vm902, %v423, 0.0
    %v919 = vsel %vm903, %v422, 0.0
    %v920 = vpack.c.bf16 %v905, %v904
    %v921 = vpack.c.bf16 %v907, %v906
    %v922 = vpack.c.bf16 %v909, %v908
    %v923 = vpack.c.bf16 %v911, %v910
    %v924 = vpack.c.bf16 %v913, %v912
    %v925 = vpack.c.bf16 %v915, %v914
    %v926 = vpack.c.bf16 %v917, %v916
    %v927 = vpack.c.bf16 %v919, %v918
    %936 = vrot.lane.b32.xlu0 %v383, 32
    %v937 = vpop.permute.xlu0 %936
    %938 = vrot.lane.b32.xlu0 %v384, 32
    %v939 = vpop.permute.xlu0 %938
    %940 = vrot.lane.b32.xlu0 %v385, 32
    %v941 = vpop.permute.xlu0 %940
    %942 = vrot.lane.b32.xlu0 %v386, 32
    %v943 = vpop.permute.xlu0 %942
    %944 = vrot.lane.b32.xlu0 %v387, 32
    %v945 = vpop.permute.xlu0 %944
    %946 = vrot.lane.b32.xlu0 %v388, 32
    %v947 = vpop.permute.xlu0 %946
    %948 = vrot.lane.b32.xlu0 %v389, 32
    %v949 = vpop.permute.xlu0 %948
    %950 = vrot.lane.b32.xlu0 %v390, 32
    %v951 = vpop.permute.xlu0 %950
    %960 = vrot.lane.b32.xlu0 %v520, 64
    %v961 = vpop.permute.xlu0 %960
    %962 = vrot.lane.b32.xlu0 %v521, 64
    %v963 = vpop.permute.xlu0 %962
    %964 = vrot.lane.b32.xlu0 %v522, 64
    %v965 = vpop.permute.xlu0 %964
    %966 = vrot.lane.b32.xlu0 %v523, 64
    %v967 = vpop.permute.xlu0 %966
    %968 = vrot.lane.b32.xlu0 %v524, 64
    %v969 = vpop.permute.xlu0 %968
    %970 = vrot.lane.b32.xlu0 %v525, 64
    %v971 = vpop.permute.xlu0 %970
    %972 = vrot.lane.b32.xlu0 %v526, 64
    %v973 = vpop.permute.xlu0 %972
    %974 = vrot.lane.b32.xlu0 %v527, 64
    %v975 = vpop.permute.xlu0 %974
    %984 = vrot.lane.b32.xlu0 %v624, 96
    %v985 = vpop.permute.xlu0 %984
    %986 = vrot.lane.b32.xlu0 %v625, 96
    %v987 = vpop.permute.xlu0 %986
    %988 = vrot.lane.b32.xlu0 %v626, 96
    %v989 = vpop.permute.xlu0 %988
    %990 = vrot.lane.b32.xlu0 %v627, 96
    %v991 = vpop.permute.xlu0 %990
    %992 = vrot.lane.b32.xlu0 %v628, 96
    %v993 = vpop.permute.xlu0 %992
    %994 = vrot.lane.b32.xlu0 %v629, 96
    %v995 = vpop.permute.xlu0 %994
    %996 = vrot.lane.b32.xlu0 %v630, 96
    %v997 = vpop.permute.xlu0 %996
    %998 = vrot.lane.b32.xlu0 %v631, 96
    %v999 = vpop.permute.xlu0 %998
    %1008 = vrot.lane.b32.xlu0 %v688, 32
    %v1009 = vpop.permute.xlu0 %1008
    %1010 = vrot.lane.b32.xlu0 %v689, 32
    %v1011 = vpop.permute.xlu0 %1010
    %1012 = vrot.lane.b32.xlu0 %v690, 32
    %v1013 = vpop.permute.xlu0 %1012
    %1014 = vrot.lane.b32.xlu0 %v691, 32
    %v1015 = vpop.permute.xlu0 %1014
    %1016 = vrot.lane.b32.xlu0 %v692, 32
    %v1017 = vpop.permute.xlu0 %1016
    %1018 = vrot.lane.b32.xlu0 %v693, 32
    %v1019 = vpop.permute.xlu0 %1018
    %1020 = vrot.lane.b32.xlu0 %v694, 32
    %v1021 = vpop.permute.xlu0 %1020
    %1022 = vrot.lane.b32.xlu0 %v695, 32
    %v1023 = vpop.permute.xlu0 %1022
    %1032 = vrot.lane.b32.xlu0 %v808, 64
    %v1033 = vpop.permute.xlu0 %1032
    %1034 = vrot.lane.b32.xlu0 %v809, 64
    %v1035 = vpop.permute.xlu0 %1034
    %1036 = vrot.lane.b32.xlu0 %v810, 64
    %v1037 = vpop.permute.xlu0 %1036
    %1038 = vrot.lane.b32.xlu0 %v811, 64
    %v1039 = vpop.permute.xlu0 %1038
    %1040 = vrot.lane.b32.xlu0 %v812, 64
    %v1041 = vpop.permute.xlu0 %1040
    %1042 = vrot.lane.b32.xlu0 %v813, 64
    %v1043 = vpop.permute.xlu0 %1042
    %1044 = vrot.lane.b32.xlu0 %v814, 64
    %v1045 = vpop.permute.xlu0 %1044
    %1046 = vrot.lane.b32.xlu0 %v815, 64
    %v1047 = vpop.permute.xlu0 %1046
    %1056 = vrot.lane.b32.xlu0 %v864, 96
    %v1057 = vpop.permute.xlu0 %1056
    %1058 = vrot.lane.b32.xlu0 %v865, 96
    %v1059 = vpop.permute.xlu0 %1058
    %1060 = vrot.lane.b32.xlu0 %v866, 96
    %v1061 = vpop.permute.xlu0 %1060
    %1062 = vrot.lane.b32.xlu0 %v867, 96
    %v1063 = vpop.permute.xlu0 %1062
    %1064 = vrot.lane.b32.xlu0 %v868, 96
    %v1065 = vpop.permute.xlu0 %1064
    %1066 = vrot.lane.b32.xlu0 %v869, 96
    %v1067 = vpop.permute.xlu0 %1066
    %1068 = vrot.lane.b32.xlu0 %v870, 96
    %v1069 = vpop.permute.xlu0 %1068
    %1070 = vrot.lane.b32.xlu0 %v871, 96
    %v1071 = vpop.permute.xlu0 %1070
    %vm1072 = vcmask 261120
    %v1075 = vsel %vm1072, %v295, %v937
    %v1078 = vsel %vm1072, %v296, %v939
    %v1081 = vsel %vm1072, %v297, %v941
    %v1084 = vsel %vm1072, %v298, %v943
    %v1087 = vsel %vm1072, %v299, %v945
    %v1090 = vsel %vm1072, %v300, %v947
    %v1093 = vsel %vm1072, %v301, %v949
    %v1096 = vsel %vm1072, %v302, %v951
    %vm1097 = vcmask 523264
    %v1099 = vsel %vm1097, %v1075, %v961
    %v1101 = vsel %vm1097, %v1078, %v963
    %v1103 = vsel %vm1097, %v1081, %v965
    %v1105 = vsel %vm1097, %v1084, %v967
    %v1107 = vsel %vm1097, %v1087, %v969
    %v1109 = vsel %vm1097, %v1090, %v971
    %v1111 = vsel %vm1097, %v1093, %v973
    %v1113 = vsel %vm1097, %v1096, %v975
    %vm1114 = vcmask 785408
    %v1116 = vsel %vm1114, %v1099, %v985
    %v1119 = vsel %vm1114, %v1101, %v987
    %v1122 = vsel %vm1114, %v1103, %v989
    %v1125 = vsel %vm1114, %v1105, %v991
    %v1128 = vsel %vm1114, %v1107, %v993
    %v1131 = vsel %vm1114, %v1109, %v995
    %v1134 = vsel %vm1114, %v1111, %v997
    %v1137 = vsel %vm1114, %v1113, %v999
    %v1141 = vsel %vm1072, %v632, %v1009
    %v1144 = vsel %vm1072, %v633, %v1011
    %v1147 = vsel %vm1072, %v634, %v1013
    %v1150 = vsel %vm1072, %v635, %v1015
    %v1153 = vsel %vm1072, %v636, %v1017
    %v1156 = vsel %vm1072, %v637, %v1019
    %v1159 = vsel %vm1072, %v638, %v1021
    %v1162 = vsel %vm1072, %v639, %v1023
    %v1164 = vsel %vm1097, %v1141, %v1033
    %v1166 = vsel %vm1097, %v1144, %v1035
    %v1168 = vsel %vm1097, %v1147, %v1037
    %v1170 = vsel %vm1097, %v1150, %v1039
    %v1172 = vsel %vm1097, %v1153, %v1041
    %v1174 = vsel %vm1097, %v1156, %v1043
    %v1176 = vsel %vm1097, %v1159, %v1045
    %v1178 = vsel %vm1097, %v1162, %v1047
    %v1180 = vsel %vm1114, %v1164, %v1057
    %v1183 = vsel %vm1114, %v1166, %v1059
    %v1186 = vsel %vm1114, %v1168, %v1061
    %v1189 = vsel %vm1114, %v1170, %v1063
    %v1192 = vsel %vm1114, %v1172, %v1065
    %v1195 = vsel %vm1114, %v1174, %v1067
    %v1198 = vsel %vm1114, %v1176, %v1069
    %v1201 = vsel %vm1114, %v1178, %v1071
    %v1203 = vld [vmem:[%s3] sm:$0xf]
    %v1204 = vld [vmem:[%s3 + $0x4] sm:$0xf]
    %v1205 = vld [vmem:[%s3 + $0x8] sm:$0xf]
    %v1206 = vld [vmem:[%s3 + $0xc] sm:$0xf]
    %v1207 = vld [vmem:[%s3 + $0x10] sm:$0xf]
    %v1208 = vld [vmem:[%s3 + $0x14] sm:$0xf]
    %v1209 = vld [vmem:[%s3 + $0x18] sm:$0xf]
    %v1210 = vld [vmem:[%s3 + $0x1c] sm:$0xf]
    %v1211 = vld [vmem:[%s3 + $0x20] sm:$0xf]
    %v1212 = vld [vmem:[%s3 + $0x24] sm:$0xf]
    %v1213 = vld [vmem:[%s3 + $0x28] sm:$0xf]
    %v1214 = vld [vmem:[%s3 + $0x2c] sm:$0xf]
    %v1215 = vld [vmem:[%s3 + $0x30] sm:$0xf]
    %v1216 = vld [vmem:[%s3 + $0x34] sm:$0xf]
    %v1217 = vld [vmem:[%s3 + $0x38] sm:$0xf]
    %v1218 = vld [vmem:[%s3 + $0x3c] sm:$0xf]
    %v1219 = vld [vmem:[%s3 + $0x40] sm:$0xf]
    %v1220 = vld [vmem:[%s3 + $0x44] sm:$0xf]
    %v1221 = vld [vmem:[%s3 + $0x48] sm:$0xf]
    %v1222 = vld [vmem:[%s3 + $0x4c] sm:$0xf]
    %v1223 = vld [vmem:[%s3 + $0x50] sm:$0xf]
    %v1224 = vld [vmem:[%s3 + $0x54] sm:$0xf]
    %v1225 = vld [vmem:[%s3 + $0x58] sm:$0xf]
    %v1226 = vld [vmem:[%s3 + $0x5c] sm:$0xf]
    %v1227 = vld [vmem:[%s3 + $0x60] sm:$0xf]
    %v1228 = vld [vmem:[%s3 + $0x64] sm:$0xf]
    %v1229 = vld [vmem:[%s3 + $0x68] sm:$0xf]
    %v1230 = vld [vmem:[%s3 + $0x6c] sm:$0xf]
    %v1231 = vld [vmem:[%s3 + $0x70] sm:$0xf]
    %v1232 = vld [vmem:[%s3 + $0x74] sm:$0xf]
    %v1233 = vld [vmem:[%s3 + $0x78] sm:$0xf]
    %v1234 = vld [vmem:[%s3 + $0x7c] sm:$0xf]
    %v1235 = vld [vmem:[%s3 + $0x80] sm:$0xf]
    %v1236 = vld [vmem:[%s3 + $0x84] sm:$0xf]
    %v1237 = vld [vmem:[%s3 + $0x88] sm:$0xf]
    %v1238 = vld [vmem:[%s3 + $0x8c] sm:$0xf]
    %v1275 = vunpack.c.l.b16 %v1203
    %v1276 = vunpack.c.l.b16 %v1204
    %v1277 = vunpack.c.l.b16 %v1205
    %v1278 = vunpack.c.l.b16 %v1206
    %v1279 = vunpack.c.l.b16 %v1207
    %v1280 = vunpack.c.l.b16 %v1208
    %v1281 = vunpack.c.l.b16 %v1209
    %v1282 = vunpack.c.l.b16 %v1210
    %v1283 = vunpack.c.l.b16 %v1211
    %v1284 = vunpack.c.l.b16 %v1212
    %v1285 = vunpack.c.l.b16 %v1213
    %v1286 = vunpack.c.l.b16 %v1214
    %v1287 = vunpack.c.l.b16 %v1215
    %v1288 = vunpack.c.l.b16 %v1216
    %v1289 = vunpack.c.l.b16 %v1217
    %v1290 = vunpack.c.l.b16 %v1218
    %v1291 = vunpack.c.l.b16 %v1219
    %v1292 = vunpack.c.l.b16 %v1220
    %v1293 = vunpack.c.l.b16 %v1221
    %v1294 = vunpack.c.l.b16 %v1222
    %v1295 = vunpack.c.l.b16 %v1223
    %v1296 = vunpack.c.l.b16 %v1224
    %v1297 = vunpack.c.l.b16 %v1225
    %v1298 = vunpack.c.l.b16 %v1226
    %v1299 = vunpack.c.l.b16 %v1227
    %v1300 = vunpack.c.l.b16 %v1228
    %v1301 = vunpack.c.l.b16 %v1229
    %v1302 = vunpack.c.l.b16 %v1230
    %v1303 = vunpack.c.l.b16 %v1231
    %v1304 = vunpack.c.l.b16 %v1232
    %v1305 = vunpack.c.l.b16 %v1233
    %v1306 = vunpack.c.l.b16 %v1234
    %v1307 = vunpack.c.l.b16 %v1235
    %v1308 = vunpack.c.l.b16 %v1236
    %v1309 = vunpack.c.l.b16 %v1237
    %v1310 = vunpack.c.l.b16 %v1238
    %v1311 = vpack.c.b16 %v1276, %v1275
    %v1312 = vpack.c.b16 %v1278, %v1277
    %v1313 = vpack.c.b16 %v1280, %v1279
    %v1314 = vpack.c.b16 %v1282, %v1281
    %v1315 = vpack.c.b16 %v1284, %v1283
    %v1316 = vpack.c.b16 %v1286, %v1285
    %v1317 = vpack.c.b16 %v1288, %v1287
    %v1318 = vpack.c.b16 %v1290, %v1289
    %v1319 = vpack.c.b16 %v1292, %v1291
    %v1320 = vpack.c.b16 %v1294, %v1293
    %v1321 = vpack.c.b16 %v1296, %v1295
    %v1322 = vpack.c.b16 %v1298, %v1297
    %v1323 = vpack.c.b16 %v1300, %v1299
    %v1324 = vpack.c.b16 %v1302, %v1301
    %v1325 = vpack.c.b16 %v1304, %v1303
    %v1326 = vpack.c.b16 %v1306, %v1305
    %v1327 = vpack.c.b16 %v1308, %v1307
    %v1328 = vpack.c.b16 %v1310, %v1309
    %v1348 = vsel %vm1072, %v920, 0
    %v1351 = vsel %vm1072, %v921, 0
    %v1354 = vsel %vm1072, %v922, 0
    %v1357 = vsel %vm1072, %v923, 0
    %v1360 = vsel %vm1072, %v924, 0
    %v1363 = vsel %vm1072, %v925, 0
    %v1366 = vsel %vm1072, %v926, 0
    %v1369 = vsel %vm1072, %v927, 0
    %1371 = vmatprep.subr.bf16.mxu0 0
    %1372 = vmatpush1.bf16.msra.mxu0 %v1311
    %1373 = vmatprep.subr.bf16.mxu0 0
    %1374 = vmatpush1.bf16.msra.mxu0 %v1312
    %1375 = vmatprep.subr.bf16.mxu0 0
    %1376 = vmatpush1.bf16.msra.mxu0 %v1313
    %1377 = vmatprep.subr.bf16.mxu0 0
    %1378 = vmatpush1.bf16.msra.mxu0 %v1314
    %1379 = vmatprep.subr.bf16.mxu0 0
    %1380 = vmatpush1.bf16.msra.mxu0 %v1315
    %1381 = vmatprep.subr.bf16.mxu0 0
    %1382 = vmatpush1.bf16.msra.mxu0 %v1316
    %1383 = vmatprep.subr.bf16.mxu0 0
    %1384 = vmatpush1.bf16.msra.mxu0 %v1317
    %1385 = vmatprep.subr.bf16.mxu0 0
    %1386 = vmatpush1.bf16.msra.mxu0 %v1318
    %1387 = vmatprep.subr.bf16.mxu0 0
    %1388 = vmatpush1.bf16.msra.mxu0 %v1319
    %1389 = vmatprep.subr.bf16.mxu0 0
    %1390 = vmatpush1.bf16.msra.mxu0 %v1320
    %1391 = vmatprep.subr.bf16.mxu0 0
    %1392 = vmatpush1.bf16.msra.mxu0 %v1321
    %1393 = vmatprep.subr.bf16.mxu0 0
    %1394 = vmatpush1.bf16.msra.mxu0 %v1322
    %1395 = vmatprep.subr.bf16.mxu0 0
    %1396 = vmatpush1.bf16.msra.mxu0 %v1323
    %1397 = vmatprep.subr.bf16.mxu0 0
    %1398 = vmatpush1.bf16.msra.mxu0 %v1324
    %1399 = vmatprep.subr.bf16.mxu0 0
    %1400 = vmatpush1.bf16.msra.mxu0 %v1325
    %1401 = vmatprep.subr.bf16.mxu0 0
    %1402 = vmatpush1.bf16.msra.mxu0 %v1326
    %1403 = vmatprep.mubr.bf16.mxu0 %v1180
    %1404 = vmatmul.mubr.bf16.gmra.mrb[0].mxu0 %v1116
    %v1405 = vpop.f32.mrb[0].mxu0
    %v1406 = vadd.f32 0.0, %v1405
    %v1407 = vpop.f32.mrb[0].mxu0
    %v1408 = vpop.f32.mrb[0].mxu0
    %v1409 = vadd.f32 0.0, %v1408
    %v1410 = vpop.f32.mrb[0].mxu0
    %1411 = vmatprep.mubr.bf16.mxu0 %v1183
    %1412 = vmatmul.mubr.bf16.gmra.mrb[0].mxu0 %v1119
    %v1413 = vpop.f32.mrb[0].mxu0
    %v1414 = vadd.f32 0.0, %v1413
    %v1415 = vpop.f32.mrb[0].mxu0
    %v1416 = vpop.f32.mrb[0].mxu0
    %v1417 = vadd.f32 0.0, %v1416
    %v1418 = vpop.f32.mrb[0].mxu0
    %1419 = vmatprep.mubr.bf16.mxu0 %v1186
    %1420 = vmatmul.mubr.bf16.gmra.mrb[0].mxu0 %v1122
    %v1421 = vpop.f32.mrb[0].mxu0
    %v1422 = vadd.f32 0.0, %v1421
    %v1423 = vpop.f32.mrb[0].mxu0
    %v1424 = vpop.f32.mrb[0].mxu0
    %v1425 = vadd.f32 0.0, %v1424
    %v1426 = vpop.f32.mrb[0].mxu0
    %1427 = vmatprep.mubr.bf16.mxu0 %v1189
    %1428 = vmatmul.mubr.bf16.gmra.mrb[0].mxu0 %v1125
    %v1429 = vpop.f32.mrb[0].mxu0
    %v1430 = vadd.f32 0.0, %v1429
    %v1431 = vpop.f32.mrb[0].mxu0
    %v1432 = vpop.f32.mrb[0].mxu0
    %v1433 = vadd.f32 0.0, %v1432
    %v1434 = vpop.f32.mrb[0].mxu0
    %1435 = vmatprep.mubr.bf16.mxu0 %v1192
    %1436 = vmatmul.mubr.bf16.gmra.mrb[0].mxu0 %v1128
    %v1437 = vpop.f32.mrb[0].mxu0
    %v1438 = vadd.f32 0.0, %v1437
    %v1439 = vpop.f32.mrb[0].mxu0
    %v1440 = vpop.f32.mrb[0].mxu0
    %v1441 = vadd.f32 0.0, %v1440
    %v1442 = vpop.f32.mrb[0].mxu0
    %1443 = vmatprep.mubr.bf16.mxu0 %v1195
    %1444 = vmatmul.mubr.bf16.gmra.mrb[0].mxu0 %v1131
    %v1445 = vpop.f32.mrb[0].mxu0
    %v1446 = vadd.f32 0.0, %v1445
    %v1447 = vpop.f32.mrb[0].mxu0
    %v1448 = vpop.f32.mrb[0].mxu0
    %v1449 = vadd.f32 0.0, %v1448
    %v1450 = vpop.f32.mrb[0].mxu0
    %1451 = vmatprep.mubr.bf16.mxu0 %v1198
    %1452 = vmatmul.mubr.bf16.gmra.mrb[0].mxu0 %v1134
    %v1453 = vpop.f32.mrb[0].mxu0
    %v1454 = vadd.f32 0.0, %v1453
    %v1455 = vpop.f32.mrb[0].mxu0
    %v1456 = vpop.f32.mrb[0].mxu0
    %v1457 = vadd.f32 0.0, %v1456
    %v1458 = vpop.f32.mrb[0].mxu0
    %1459 = vmatprep.mubr.bf16.mxu0 %v1201
    %1460 = vmatmul.mubr.bf16.gmra.mrb[0].mxu0 %v1137
    %v1461 = vpop.f32.mrb[0].mxu0
    %v1462 = vadd.f32 0.0, %v1461
    %v1463 = vpop.f32.mrb[0].mxu0
    %v1464 = vpop.f32.mrb[0].mxu0
    %v1465 = vadd.f32 0.0, %v1464
    %v1466 = vpop.f32.mrb[0].mxu0
    %1467 = vdwg.mxu0
    %1468 = vmatprep.subr.bf16.mxu0 0
    %1469 = vmatpush1.bf16.msra.mxu0 %v1327
    %1470 = vmatprep.subr.bf16.mxu0 0
    %1471 = vmatpush1.bf16.msra.mxu0 %v1328
    %1472 = vmatprep.subr.bf16.mxu0 0
    %1473 = vmatpush1.bf16.msra.mxu0 0
    %1474 = vmatprep.subr.bf16.mxu0 0
    %1475 = vmatpush1.bf16.msra.mxu0 0
    %1476 = vmatprep.subr.bf16.mxu0 0
    %1477 = vmatpush1.bf16.msra.mxu0 0
    %1478 = vmatprep.subr.bf16.mxu0 0
    %1479 = vmatpush1.bf16.msra.mxu0 0
    %1480 = vmatprep.subr.bf16.mxu0 0
    %1481 = vmatpush1.bf16.msra.mxu0 0
    %1482 = vmatprep.subr.bf16.mxu0 0
    %1483 = vmatpush1.bf16.msra.mxu0 0
    %1484 = vmatprep.subr.bf16.mxu0 0
    %1485 = vmatpush1.bf16.msra.mxu0 0
    %1486 = vmatprep.subr.bf16.mxu0 0
    %1487 = vmatpush1.bf16.msra.mxu0 0
    %1488 = vmatprep.subr.bf16.mxu0 0
    %1489 = vmatpush1.bf16.msra.mxu0 0
    %1490 = vmatprep.subr.bf16.mxu0 0
    %1491 = vmatpush1.bf16.msra.mxu0 0
    %1492 = vmatprep.subr.bf16.mxu0 0
    %1493 = vmatpush1.bf16.msra.mxu0 0
    %1494 = vmatprep.subr.bf16.mxu0 0
    %1495 = vmatpush1.bf16.msra.mxu0 0
    %1496 = vmatprep.subr.bf16.mxu0 0
    %1497 = vmatpush1.bf16.msra.mxu0 0
    %1498 = vmatprep.subr.bf16.mxu0 0
    %1499 = vmatpush1.bf16.msra.mxu0 0
    %1500 = vmatprep.mubr.bf16.mxu0 0
    %1501 = vmatmul.mubr.bf16.gmra.mrb[0].mxu0 %v1348
    %v1502 = vpop.f32.mrb[0].mxu0
    %v1503 = vadd.f32 %v1406, %v1502
    %v1504 = vpop.f32.mrb[0].mxu0
    %v1505 = vpop.f32.mrb[0].mxu0
    %v1506 = vadd.f32 %v1409, %v1505
    %v1507 = vpop.f32.mrb[0].mxu0
    %1508 = vmatprep.mubr.bf16.mxu0 0
    %1509 = vmatmul.mubr.bf16.gmra.mrb[0].mxu0 %v1351
    %v1510 = vpop.f32.mrb[0].mxu0
    %v1511 = vadd.f32 %v1414, %v1510
    %v1512 = vpop.f32.mrb[0].mxu0
    %v1513 = vpop.f32.mrb[0].mxu0
    %v1514 = vadd.f32 %v1417, %v1513
    %v1515 = vpop.f32.mrb[0].mxu0
    %1516 = vmatprep.mubr.bf16.mxu0 0
    %1517 = vmatmul.mubr.bf16.gmra.mrb[0].mxu0 %v1354
    %v1518 = vpop.f32.mrb[0].mxu0
    %v1519 = vadd.f32 %v1422, %v1518
    %v1520 = vpop.f32.mrb[0].mxu0
    %v1521 = vpop.f32.mrb[0].mxu0
    %v1522 = vadd.f32 %v1425, %v1521
    %v1523 = vpop.f32.mrb[0].mxu0
    %1524 = vmatprep.mubr.bf16.mxu0 0
    %1525 = vmatmul.mubr.bf16.gmra.mrb[0].mxu0 %v1357
    %v1526 = vpop.f32.mrb[0].mxu0
    %v1527 = vadd.f32 %v1430, %v1526
    %v1528 = vpop.f32.mrb[0].mxu0
    %v1529 = vpop.f32.mrb[0].mxu0
    %v1530 = vadd.f32 %v1433, %v1529
    %v1531 = vpop.f32.mrb[0].mxu0
    %1532 = vmatprep.mubr.bf16.mxu0 0
    %1533 = vmatmul.mubr.bf16.gmra.mrb[0].mxu0 %v1360
    %v1534 = vpop.f32.mrb[0].mxu0
    %v1535 = vadd.f32 %v1438, %v1534
    %v1536 = vpop.f32.mrb[0].mxu0
    %v1537 = vpop.f32.mrb[0].mxu0
    %v1538 = vadd.f32 %v1441, %v1537
    %v1539 = vpop.f32.mrb[0].mxu0
    %1540 = vmatprep.mubr.bf16.mxu0 0
    %1541 = vmatmul.mubr.bf16.gmra.mrb[0].mxu0 %v1363
    %v1542 = vpop.f32.mrb[0].mxu0
    %v1543 = vadd.f32 %v1446, %v1542
    %v1544 = vpop.f32.mrb[0].mxu0
    %v1545 = vpop.f32.mrb[0].mxu0
    %v1546 = vadd.f32 %v1449, %v1545
    %v1547 = vpop.f32.mrb[0].mxu0
    %1548 = vmatprep.mubr.bf16.mxu0 0
    %1549 = vmatmul.mubr.bf16.gmra.mrb[0].mxu0 %v1366
    %v1550 = vpop.f32.mrb[0].mxu0
    %v1551 = vadd.f32 %v1454, %v1550
    %v1552 = vpop.f32.mrb[0].mxu0
    %v1553 = vpop.f32.mrb[0].mxu0
    %v1554 = vadd.f32 %v1457, %v1553
    %v1555 = vpop.f32.mrb[0].mxu0
    %1556 = vmatprep.mubr.bf16.mxu0 0
    %1557 = vmatmul.mubr.bf16.gmra.mrb[0].mxu0 %v1369
    %v1558 = vpop.f32.mrb[0].mxu0
    %v1559 = vadd.f32 %v1462, %v1558
    %v1560 = vpop.f32.mrb[0].mxu0
    %v1561 = vpop.f32.mrb[0].mxu0
    %v1562 = vadd.f32 %v1465, %v1561
    %v1563 = vpop.f32.mrb[0].mxu0
    %1564 = vdwg.mxu0
    %v1565 = vsel %vm1072, %v1503, 0.0
    %v1566 = vsel %vm1072, %v1506, 0.0
    %v1567 = vadd.f32 %v1565, %v1566
    %v1568 = vsel %vm1072, %v1511, 0.0
    %v1569 = vadd.f32 %v1567, %v1568
    %v1570 = vsel %vm1072, %v1514, 0.0
    %v1571 = vadd.f32 %v1569, %v1570
    %v1572 = vsel %vm1072, %v1519, 0.0
    %v1573 = vadd.f32 %v1571, %v1572
    %v1574 = vsel %vm1072, %v1522, 0.0
    %v1575 = vadd.f32 %v1573, %v1574
    %v1576 = vsel %vm1072, %v1527, 0.0
    %v1577 = vadd.f32 %v1575, %v1576
    %v1578 = vsel %vm1072, %v1530, 0.0
    %v1579 = vadd.f32 %v1577, %v1578
    %v1580 = vsel %vm1072, %v1535, 0.0
    %v1581 = vadd.f32 %v1579, %v1580
    %v1582 = vsel %vm1072, %v1538, 0.0
    %v1583 = vadd.f32 %v1581, %v1582
    %v1584 = vsel %vm1072, %v1543, 0.0
    %v1585 = vadd.f32 %v1583, %v1584
    %v1586 = vsel %vm1072, %v1546, 0.0
    %v1587 = vadd.f32 %v1585, %v1586
    %v1588 = vsel %vm1072, %v1551, 0.0
    %v1589 = vadd.f32 %v1587, %v1588
    %v1590 = vsel %vm1072, %v1554, 0.0
    %v1591 = vadd.f32 %v1589, %v1590
    %v1592 = vsel %vm1072, %v1559, 0.0
    %v1593 = vadd.f32 %v1591, %v1592
    %v1594 = vsel %vm1072, %v1562, 0.0
    %v1595 = vadd.f32 %v1593, %v1594
    %v1596 = vrot.slane %v1595, 4
    %v1597 = vadd.f32 %v1595, %v1596
    %v1598 = vrot.slane %v1597, 2
    %v1599 = vadd.f32 %v1597, %v1598
    %v1600 = vrot.slane %v1599, 1
    %v1601 = vadd.f32 %v1599, %v1600
    %v1602 = vrcp.pop 128.0
    %v1603 = vmul.f32 %v1601, %v1602
    %v1604 = vsub.f32 %v1503, %v1603
    %v1605 = vsub.f32 %v1506, %v1603
    %v1606 = vsub.f32 %v1511, %v1603
    %v1607 = vsub.f32 %v1514, %v1603
    %v1608 = vsub.f32 %v1519, %v1603
    %v1609 = vsub.f32 %v1522, %v1603
    %v1610 = vsub.f32 %v1527, %v1603
    %v1611 = vsub.f32 %v1530, %v1603
    %v1612 = vsub.f32 %v1535, %v1603
    %v1613 = vsub.f32 %v1538, %v1603
    %v1614 = vsub.f32 %v1543, %v1603
    %v1615 = vsub.f32 %v1546, %v1603
    %v1616 = vsub.f32 %v1551, %v1603
    %v1617 = vsub.f32 %v1554, %v1603
    %v1618 = vsub.f32 %v1559, %v1603
    %v1619 = vsub.f32 %v1562, %v1603
    %v1620 = vmul.f32 %v1604, %v1604
    %v1621 = vmul.f32 %v1605, %v1605
    %v1622 = vmul.f32 %v1606, %v1606
    %v1623 = vmul.f32 %v1607, %v1607
    %v1624 = vmul.f32 %v1608, %v1608
    %v1625 = vmul.f32 %v1609, %v1609
    %v1626 = vmul.f32 %v1610, %v1610
    %v1627 = vmul.f32 %v1611, %v1611
    %v1628 = vmul.f32 %v1612, %v1612
    %v1629 = vmul.f32 %v1613, %v1613
    %v1630 = vmul.f32 %v1614, %v1614
    %v1631 = vmul.f32 %v1615, %v1615
    %v1632 = vmul.f32 %v1616, %v1616
    %v1633 = vmul.f32 %v1617, %v1617
    %v1634 = vmul.f32 %v1618, %v1618
    %v1635 = vmul.f32 %v1619, %v1619
    %v1636 = vsel %vm1072, %v1620, 0.0
    %v1637 = vsel %vm1072, %v1621, 0.0
    %v1638 = vadd.f32 %v1636, %v1637
    %v1639 = vsel %vm1072, %v1622, 0.0
    %v1640 = vadd.f32 %v1638, %v1639
    %v1641 = vsel %vm1072, %v1623, 0.0
    %v1642 = vadd.f32 %v1640, %v1641
    %v1643 = vsel %vm1072, %v1624, 0.0
    %v1644 = vadd.f32 %v1642, %v1643
    %v1645 = vsel %vm1072, %v1625, 0.0
    %v1646 = vadd.f32 %v1644, %v1645
    %v1647 = vsel %vm1072, %v1626, 0.0
    %v1648 = vadd.f32 %v1646, %v1647
    %v1649 = vsel %vm1072, %v1627, 0.0
    %v1650 = vadd.f32 %v1648, %v1649
    %v1651 = vsel %vm1072, %v1628, 0.0
    %v1652 = vadd.f32 %v1650, %v1651
    %v1653 = vsel %vm1072, %v1629, 0.0
    %v1654 = vadd.f32 %v1652, %v1653
    %v1655 = vsel %vm1072, %v1630, 0.0
    %v1656 = vadd.f32 %v1654, %v1655
    %v1657 = vsel %vm1072, %v1631, 0.0
    %v1658 = vadd.f32 %v1656, %v1657
    %v1659 = vsel %vm1072, %v1632, 0.0
    %v1660 = vadd.f32 %v1658, %v1659
    %v1661 = vsel %vm1072, %v1633, 0.0
    %v1662 = vadd.f32 %v1660, %v1661
    %v1663 = vsel %vm1072, %v1634, 0.0
    %v1664 = vadd.f32 %v1662, %v1663
    %v1665 = vsel %vm1072, %v1635, 0.0
    %v1666 = vadd.f32 %v1664, %v1665
    %v1667 = vrot.slane %v1666, 4
    %v1668 = vadd.f32 %v1666, %v1667
    %v1669 = vrot.slane %v1668, 2
    %v1670 = vadd.f32 %v1668, %v1669
    %v1671 = vrot.slane %v1670, 1
    %v1672 = vadd.f32 %v1670, %v1671
    %v1673 = vmul.f32 %v1672, %v1602
    %v1674 = vld [vmem:[%s5] sm:$0x1]
    %v1675 = vadd.f32 %v1673, 1e-05
    %v1676 = vrsqrt.pop %v1675
    %v1677 = vmul.f32 %v1674, %v1676
    %v1679 = vlaneseq
    %v1680 = vshrl.u32 %v1679, 7
    %v1681 = vsub.s32 0, %v1680
    %v1682 = vrot.slane %v1677, %v1681
    %v1684 = vmul.f32 %v1604, %v1682
    %v1685 = vmul.f32 %v1605, %v1682
    %v1686 = vmul.f32 %v1606, %v1682
    %v1687 = vmul.f32 %v1607, %v1682
    %v1688 = vmul.f32 %v1608, %v1682
    %v1689 = vmul.f32 %v1609, %v1682
    %v1690 = vmul.f32 %v1610, %v1682
    %v1691 = vmul.f32 %v1611, %v1682
    %v1692 = vmul.f32 %v1612, %v1682
    %v1693 = vmul.f32 %v1613, %v1682
    %v1694 = vmul.f32 %v1614, %v1682
    %v1695 = vmul.f32 %v1615, %v1682
    %v1696 = vmul.f32 %v1616, %v1682
    %v1697 = vmul.f32 %v1617, %v1682
    %v1698 = vmul.f32 %v1618, %v1682
    %v1699 = vmul.f32 %v1619, %v1682
    %v1700 = vld [vmem:[%s6] sm:$0x1]
    %v1702 = vlaneseq
    %v1703 = vshrl.u32 %v1702, 7
    %v1704 = vsub.s32 0, %v1703
    %v1705 = vrot.slane %v1700, %v1704
    %v1707 = vadd.f32 %v1684, %v1705
    %v1708 = vadd.f32 %v1685, %v1705
    %v1709 = vadd.f32 %v1686, %v1705
    %v1710 = vadd.f32 %v1687, %v1705
    %v1711 = vadd.f32 %v1688, %v1705
    %v1712 = vadd.f32 %v1689, %v1705
    %v1713 = vadd.f32 %v1690, %v1705
    %v1714 = vadd.f32 %v1691, %v1705
    %v1715 = vadd.f32 %v1692, %v1705
    %v1716 = vadd.f32 %v1693, %v1705
    %v1717 = vadd.f32 %v1694, %v1705
    %v1718 = vadd.f32 %v1695, %v1705
    %v1719 = vadd.f32 %v1696, %v1705
    %v1720 = vadd.f32 %v1697, %v1705
    %v1721 = vadd.f32 %v1698, %v1705
    %v1722 = vadd.f32 %v1699, %v1705
    %v1723 = vmax.f32 %v1707, 0.0
    %v1724 = vmax.f32 %v1708, 0.0
    %v1725 = vmax.f32 %v1709, 0.0
    %v1726 = vmax.f32 %v1710, 0.0
    %v1727 = vmax.f32 %v1711, 0.0
    %v1728 = vmax.f32 %v1712, 0.0
    %v1729 = vmax.f32 %v1713, 0.0
    %v1730 = vmax.f32 %v1714, 0.0
    %v1731 = vmax.f32 %v1715, 0.0
    %v1732 = vmax.f32 %v1716, 0.0
    %v1733 = vmax.f32 %v1717, 0.0
    %v1734 = vmax.f32 %v1718, 0.0
    %v1735 = vmax.f32 %v1719, 0.0
    %v1736 = vmax.f32 %v1720, 0.0
    %v1737 = vmax.f32 %v1721, 0.0
    %v1738 = vmax.f32 %v1722, 0.0
    %v1739 = vrot.slane %v1723, 7
    %v1740 = vrot.slane %v1724, 7
    %v1741 = vrot.slane %v1725, 7
    %v1742 = vrot.slane %v1726, 7
    %v1743 = vrot.slane %v1727, 7
    %v1744 = vrot.slane %v1728, 7
    %v1745 = vrot.slane %v1729, 7
    %v1746 = vrot.slane %v1730, 7
    %v1747 = vrot.slane %v1731, 7
    %v1748 = vrot.slane %v1732, 7
    %v1749 = vrot.slane %v1733, 7
    %v1750 = vrot.slane %v1734, 7
    %v1751 = vrot.slane %v1735, 7
    %v1752 = vrot.slane %v1736, 7
    %v1753 = vrot.slane %v1737, 7
    %v1754 = vrot.slane %v1738, 7
    %v1755 = vsel %vm118, %v1753, %v1754
    %v1756 = vsel %vm118, %v1752, %v1753
    %v1757 = vsel %vm118, %v1751, %v1752
    %v1758 = vsel %vm118, %v1750, %v1751
    %v1759 = vsel %vm118, %v1749, %v1750
    %v1760 = vsel %vm118, %v1748, %v1749
    %v1761 = vsel %vm118, %v1747, %v1748
    %v1762 = vsel %vm118, %v1746, %v1747
    %v1763 = vsel %vm118, %v1745, %v1746
    %v1764 = vsel %vm118, %v1744, %v1745
    %v1765 = vsel %vm118, %v1743, %v1744
    %v1766 = vsel %vm118, %v1742, %v1743
    %v1767 = vsel %vm118, %v1741, %v1742
    %v1768 = vsel %vm118, %v1740, %v1741
    %v1769 = vsel %vm118, %v1739, %v1740
    %v1770 = vsel %vm118, %v1754, %v1739
    %v1771 = vsel %vm263, %v1755, 0.0
    %v1772 = vsel %vm264, %v1770, 0.0
    %v1773 = vsel %vm265, %v1769, 0.0
    %v1774 = vsel %vm266, %v1768, 0.0
    %v1775 = vsel %vm267, %v1767, 0.0
    %v1776 = vsel %vm268, %v1766, 0.0
    %v1777 = vsel %vm269, %v1765, 0.0
    %v1778 = vsel %vm270, %v1764, 0.0
    %v1779 = vsel %vm271, %v1763, 0.0
    %v1780 = vsel %vm272, %v1762, 0.0
    %v1781 = vsel %vm273, %v1761, 0.0
    %v1782 = vsel %vm274, %v1760, 0.0
    %v1783 = vsel %vm275, %v1759, 0.0
    %v1784 = vsel %vm276, %v1758, 0.0
    %v1785 = vsel %vm277, %v1757, 0.0
    %v1786 = vsel %vm278, %v1756, 0.0
    %v1787 = vpack.c.bf16 %v1772, %v1771
    %v1788 = vpack.c.bf16 %v1774, %v1773
    %v1789 = vpack.c.bf16 %v1776, %v1775
    %v1790 = vpack.c.bf16 %v1778, %v1777
    %v1791 = vpack.c.bf16 %v1780, %v1779
    %v1792 = vpack.c.bf16 %v1782, %v1781
    %v1793 = vpack.c.bf16 %v1784, %v1783
    %v1794 = vpack.c.bf16 %v1786, %v1785
    %v1795 = vsel %vm351, %v1738, 0.0
    %v1796 = vsel %vm352, %v1723, 0.0
    %v1797 = vsel %vm353, %v1724, 0.0
    %v1798 = vsel %vm354, %v1725, 0.0
    %v1799 = vsel %vm355, %v1726, 0.0
    %v1800 = vsel %vm356, %v1727, 0.0
    %v1801 = vsel %vm357, %v1728, 0.0
    %v1802 = vsel %vm358, %v1729, 0.0
    %v1803 = vsel %vm359, %v1730, 0.0
    %v1804 = vsel %vm360, %v1731, 0.0
    %v1805 = vsel %vm361, %v1732, 0.0
    %v1806 = vsel %vm362, %v1733, 0.0
    %v1807 = vsel %vm363, %v1734, 0.0
    %v1808 = vsel %vm364, %v1735, 0.0
    %v1809 = vsel %vm365, %v1736, 0.0
    %v1810 = vsel %vm366, %v1737, 0.0
    %v1811 = vpack.c.bf16 %v1796, %v1795
    %v1812 = vpack.c.bf16 %v1798, %v1797
    %v1813 = vpack.c.bf16 %v1800, %v1799
    %v1814 = vpack.c.bf16 %v1802, %v1801
    %v1815 = vpack.c.bf16 %v1804, %v1803
    %v1816 = vpack.c.bf16 %v1806, %v1805
    %v1817 = vpack.c.bf16 %v1808, %v1807
    %v1818 = vpack.c.bf16 %v1810, %v1809
    %v1819 = vrot.slane %v1723, 1
    %v1820 = vrot.slane %v1724, 1
    %v1821 = vrot.slane %v1725, 1
    %v1822 = vrot.slane %v1726, 1
    %v1823 = vrot.slane %v1727, 1
    %v1824 = vrot.slane %v1728, 1
    %v1825 = vrot.slane %v1729, 1
    %v1826 = vrot.slane %v1730, 1
    %v1827 = vrot.slane %v1731, 1
    %v1828 = vrot.slane %v1732, 1
    %v1829 = vrot.slane %v1733, 1
    %v1830 = vrot.slane %v1734, 1
    %v1831 = vrot.slane %v1735, 1
    %v1832 = vrot.slane %v1736, 1
    %v1833 = vrot.slane %v1737, 1
    %v1834 = vrot.slane %v1738, 1
    %v1835 = vsel %vm407, %v1833, %v1834
    %v1836 = vsel %vm407, %v1832, %v1833
    %v1837 = vsel %vm407, %v1831, %v1832
    %v1838 = vsel %vm407, %v1830, %v1831
    %v1839 = vsel %vm407, %v1829, %v1830
    %v1840 = vsel %vm407, %v1828, %v1829
    %v1841 = vsel %vm407, %v1827, %v1828
    %v1842 = vsel %vm407, %v1826, %v1827
    %v1843 = vsel %vm407, %v1825, %v1826
    %v1844 = vsel %vm407, %v1824, %v1825
    %v1845 = vsel %vm407, %v1823, %v1824
    %v1846 = vsel %vm407, %v1822, %v1823
    %v1847 = vsel %vm407, %v1821, %v1822
    %v1848 = vsel %vm407, %v1820, %v1821
    %v1849 = vsel %vm407, %v1819, %v1820
    %v1850 = vsel %vm407, %v1834, %v1819
    %v1851 = vsel %vm488, %v1850, 0.0
    %v1852 = vsel %vm489, %v1849, 0.0
    %v1853 = vsel %vm490, %v1848, 0.0
    %v1854 = vsel %vm491, %v1847, 0.0
    %v1855 = vsel %vm492, %v1846, 0.0
    %v1856 = vsel %vm493, %v1845, 0.0
    %v1857 = vsel %vm494, %v1844, 0.0
    %v1858 = vsel %vm495, %v1843, 0.0
    %v1859 = vsel %vm496, %v1842, 0.0
    %v1860 = vsel %vm497, %v1841, 0.0
    %v1861 = vsel %vm498, %v1840, 0.0
    %v1862 = vsel %vm499, %v1839, 0.0
    %v1863 = vsel %vm500, %v1838, 0.0
    %v1864 = vsel %vm501, %v1837, 0.0
    %v1865 = vsel %vm502, %v1836, 0.0
    %v1866 = vsel %vm503, %v1835, 0.0
    %v1867 = vpack.c.bf16 %v1852, %v1851
    %v1868 = vpack.c.bf16 %v1854, %v1853
    %v1869 = vpack.c.bf16 %v1856, %v1855
    %v1870 = vpack.c.bf16 %v1858, %v1857
    %v1871 = vpack.c.bf16 %v1860, %v1859
    %v1872 = vpack.c.bf16 %v1862, %v1861
    %v1873 = vpack.c.bf16 %v1864, %v1863
    %v1874 = vpack.c.bf16 %v1866, %v1865
    %v1875 = vsel %vm592, %v1770, 0.0
    %v1876 = vsel %vm593, %v1769, 0.0
    %v1877 = vsel %vm594, %v1768, 0.0
    %v1878 = vsel %vm595, %v1767, 0.0
    %v1879 = vsel %vm596, %v1766, 0.0
    %v1880 = vsel %vm597, %v1765, 0.0
    %v1881 = vsel %vm598, %v1764, 0.0
    %v1882 = vsel %vm599, %v1763, 0.0
    %v1883 = vsel %vm600, %v1762, 0.0
    %v1884 = vsel %vm601, %v1761, 0.0
    %v1885 = vsel %vm602, %v1760, 0.0
    %v1886 = vsel %vm603, %v1759, 0.0
    %v1887 = vsel %vm604, %v1758, 0.0
    %v1888 = vsel %vm605, %v1757, 0.0
    %v1889 = vsel %vm606, %v1756, 0.0
    %v1890 = vsel %vm607, %v1755, 0.0
    %v1891 = vpack.c.bf16 %v1876, %v1875
    %v1892 = vpack.c.bf16 %v1878, %v1877
    %v1893 = vpack.c.bf16 %v1880, %v1879
    %v1894 = vpack.c.bf16 %v1882, %v1881
    %v1895 = vpack.c.bf16 %v1884, %v1883
    %v1896 = vpack.c.bf16 %v1886, %v1885
    %v1897 = vpack.c.bf16 %v1888, %v1887
    %v1898 = vpack.c.bf16 %v1890, %v1889
    %v1899 = vpack.c.bf16 %v1724, %v1723
    %v1900 = vpack.c.bf16 %v1726, %v1725
    %v1901 = vpack.c.bf16 %v1728, %v1727
    %v1902 = vpack.c.bf16 %v1730, %v1729
    %v1903 = vpack.c.bf16 %v1732, %v1731
    %v1904 = vpack.c.bf16 %v1734, %v1733
    %v1905 = vpack.c.bf16 %v1736, %v1735
    %v1906 = vpack.c.bf16 %v1738, %v1737
    %v1907 = vsel %vm656, %v1849, 0.0
    %v1908 = vsel %vm657, %v1848, 0.0
    %v1909 = vsel %vm658, %v1847, 0.0
    %v1910 = vsel %vm659, %v1846, 0.0
    %v1911 = vsel %vm660, %v1845, 0.0
    %v1912 = vsel %vm661, %v1844, 0.0
    %v1913 = vsel %vm662, %v1843, 0.0
    %v1914 = vsel %vm663, %v1842, 0.0
    %v1915 = vsel %vm664, %v1841, 0.0
    %v1916 = vsel %vm665, %v1840, 0.0
    %v1917 = vsel %vm666, %v1839, 0.0
    %v1918 = vsel %vm667, %v1838, 0.0
    %v1919 = vsel %vm668, %v1837, 0.0
    %v1920 = vsel %vm669, %v1836, 0.0
    %v1921 = vsel %vm670, %v1835, 0.0
    %v1922 = vsel %vm671, %v1850, 0.0
    %v1923 = vpack.c.bf16 %v1908, %v1907
    %v1924 = vpack.c.bf16 %v1910, %v1909
    %v1925 = vpack.c.bf16 %v1912, %v1911
    %v1926 = vpack.c.bf16 %v1914, %v1913
    %v1927 = vpack.c.bf16 %v1916, %v1915
    %v1928 = vpack.c.bf16 %v1918, %v1917
    %v1929 = vpack.c.bf16 %v1920, %v1919
    %v1930 = vpack.c.bf16 %v1922, %v1921
    %v1931 = vsel %vm776, %v1769, 0.0
    %v1932 = vsel %vm777, %v1768, 0.0
    %v1933 = vsel %vm778, %v1767, 0.0
    %v1934 = vsel %vm779, %v1766, 0.0
    %v1935 = vsel %vm780, %v1765, 0.0
    %v1936 = vsel %vm781, %v1764, 0.0
    %v1937 = vsel %vm782, %v1763, 0.0
    %v1938 = vsel %vm783, %v1762, 0.0
    %v1939 = vsel %vm784, %v1761, 0.0
    %v1940 = vsel %vm785, %v1760, 0.0
    %v1941 = vsel %vm786, %v1759, 0.0
    %v1942 = vsel %vm787, %v1758, 0.0
    %v1943 = vsel %vm788, %v1757, 0.0
    %v1944 = vsel %vm789, %v1756, 0.0
    %v1945 = vsel %vm790, %v1755, 0.0
    %v1946 = vsel %vm791, %v1770, 0.0
    %v1947 = vpack.c.bf16 %v1932, %v1931
    %v1948 = vpack.c.bf16 %v1934, %v1933
    %v1949 = vpack.c.bf16 %v1936, %v1935
    %v1950 = vpack.c.bf16 %v1938, %v1937
    %v1951 = vpack.c.bf16 %v1940, %v1939
    %v1952 = vpack.c.bf16 %v1942, %v1941
    %v1953 = vpack.c.bf16 %v1944, %v1943
    %v1954 = vpack.c.bf16 %v1946, %v1945
    %v1955 = vsel %vm832, %v1724, 0.0
    %v1956 = vsel %vm833, %v1725, 0.0
    %v1957 = vsel %vm834, %v1726, 0.0
    %v1958 = vsel %vm835, %v1727, 0.0
    %v1959 = vsel %vm836, %v1728, 0.0
    %v1960 = vsel %vm837, %v1729, 0.0
    %v1961 = vsel %vm838, %v1730, 0.0
    %v1962 = vsel %vm839, %v1731, 0.0
    %v1963 = vsel %vm840, %v1732, 0.0
    %v1964 = vsel %vm841, %v1733, 0.0
    %v1965 = vsel %vm842, %v1734, 0.0
    %v1966 = vsel %vm843, %v1735, 0.0
    %v1967 = vsel %vm844, %v1736, 0.0
    %v1968 = vsel %vm845, %v1737, 0.0
    %v1969 = vsel %vm846, %v1738, 0.0
    %v1970 = vsel %vm847, %v1723, 0.0
    %v1971 = vpack.c.bf16 %v1956, %v1955
    %v1972 = vpack.c.bf16 %v1958, %v1957
    %v1973 = vpack.c.bf16 %v1960, %v1959
    %v1974 = vpack.c.bf16 %v1962, %v1961
    %v1975 = vpack.c.bf16 %v1964, %v1963
    %v1976 = vpack.c.bf16 %v1966, %v1965
    %v1977 = vpack.c.bf16 %v1968, %v1967
    %v1978 = vpack.c.bf16 %v1970, %v1969
    %v1979 = vsel %vm888, %v1848, 0.0
    %v1980 = vsel %vm889, %v1847, 0.0
    %v1981 = vsel %vm890, %v1846, 0.0
    %v1982 = vsel %vm891, %v1845, 0.0
    %v1983 = vsel %vm892, %v1844, 0.0
    %v1984 = vsel %vm893, %v1843, 0.0
    %v1985 = vsel %vm894, %v1842, 0.0
    %v1986 = vsel %vm895, %v1841, 0.0
    %v1987 = vsel %vm896, %v1840, 0.0
    %v1988 = vsel %vm897, %v1839, 0.0
    %v1989 = vsel %vm898, %v1838, 0.0
    %v1990 = vsel %vm899, %v1837, 0.0
    %v1991 = vsel %vm900, %v1836, 0.0
    %v1992 = vsel %vm901, %v1835, 0.0
    %v1993 = vsel %vm902, %v1850, 0.0
    %v1994 = vsel %vm903, %v1849, 0.0
    %v1995 = vpack.c.bf16 %v1980, %v1979
    %v1996 = vpack.c.bf16 %v1982, %v1981
    %v1997 = vpack.c.bf16 %v1984, %v1983
    %v1998 = vpack.c.bf16 %v1986, %v1985
    %v1999 = vpack.c.bf16 %v1988, %v1987
    %v2000 = vpack.c.bf16 %v1990, %v1989
    %v2001 = vpack.c.bf16 %v1992, %v1991
    %v2002 = vpack.c.bf16 %v1994, %v1993
    %2011 = vrot.lane.b32.xlu0 %v1811, 32
    %v2012 = vpop.permute.xlu0 %2011
    %2013 = vrot.lane.b32.xlu0 %v1812, 32
    %v2014 = vpop.permute.xlu0 %2013
    %2015 = vrot.lane.b32.xlu0 %v1813, 32
    %v2016 = vpop.permute.xlu0 %2015
    %2017 = vrot.lane.b32.xlu0 %v1814, 32
    %v2018 = vpop.permute.xlu0 %2017
    %2019 = vrot.lane.b32.xlu0 %v1815, 32
    %v2020 = vpop.permute.xlu0 %2019
    %2021 = vrot.lane.b32.xlu0 %v1816, 32
    %v2022 = vpop.permute.xlu0 %2021
    %2023 = vrot.lane.b32.xlu0 %v1817, 32
    %v2024 = vpop.permute.xlu0 %2023
    %2025 = vrot.lane.b32.xlu0 %v1818, 32
    %v2026 = vpop.permute.xlu0 %2025
    %2035 = vrot.lane.b32.xlu0 %v1867, 64
    %v2036 = vpop.permute.xlu0 %2035
    %2037 = vrot.lane.b32.xlu0 %v1868, 64
    %v2038 = vpop.permute.xlu0 %2037
    %2039 = vrot.lane.b32.xlu0 %v1869, 64
    %v2040 = vpop.permute.xlu0 %2039
    %2041 = vrot.lane.b32.xlu0 %v1870, 64
    %v2042 = vpop.permute.xlu0 %2041
    %2043 = vrot.lane.b32.xlu0 %v1871, 64
    %v2044 = vpop.permute.xlu0 %2043
    %2045 = vrot.lane.b32.xlu0 %v1872, 64
    %v2046 = vpop.permute.xlu0 %2045
    %2047 = vrot.lane.b32.xlu0 %v1873, 64
    %v2048 = vpop.permute.xlu0 %2047
    %2049 = vrot.lane.b32.xlu0 %v1874, 64
    %v2050 = vpop.permute.xlu0 %2049
    %2059 = vrot.lane.b32.xlu0 %v1891, 96
    %v2060 = vpop.permute.xlu0 %2059
    %2061 = vrot.lane.b32.xlu0 %v1892, 96
    %v2062 = vpop.permute.xlu0 %2061
    %2063 = vrot.lane.b32.xlu0 %v1893, 96
    %v2064 = vpop.permute.xlu0 %2063
    %2065 = vrot.lane.b32.xlu0 %v1894, 96
    %v2066 = vpop.permute.xlu0 %2065
    %2067 = vrot.lane.b32.xlu0 %v1895, 96
    %v2068 = vpop.permute.xlu0 %2067
    %2069 = vrot.lane.b32.xlu0 %v1896, 96
    %v2070 = vpop.permute.xlu0 %2069
    %2071 = vrot.lane.b32.xlu0 %v1897, 96
    %v2072 = vpop.permute.xlu0 %2071
    %2073 = vrot.lane.b32.xlu0 %v1898, 96
    %v2074 = vpop.permute.xlu0 %2073
    %2083 = vrot.lane.b32.xlu0 %v1923, 32
    %v2084 = vpop.permute.xlu0 %2083
    %2085 = vrot.lane.b32.xlu0 %v1924, 32
    %v2086 = vpop.permute.xlu0 %2085
    %2087 = vrot.lane.b32.xlu0 %v1925, 32
    %v2088 = vpop.permute.xlu0 %2087
    %2089 = vrot.lane.b32.xlu0 %v1926, 32
    %v2090 = vpop.permute.xlu0 %2089
    %2091 = vrot.lane.b32.xlu0 %v1927, 32
    %v2092 = vpop.permute.xlu0 %2091
    %2093 = vrot.lane.b32.xlu0 %v1928, 32
    %v2094 = vpop.permute.xlu0 %2093
    %2095 = vrot.lane.b32.xlu0 %v1929, 32
    %v2096 = vpop.permute.xlu0 %2095
    %2097 = vrot.lane.b32.xlu0 %v1930, 32
    %v2098 = vpop.permute.xlu0 %2097
    %2107 = vrot.lane.b32.xlu0 %v1947, 64
    %v2108 = vpop.permute.xlu0 %2107
    %2109 = vrot.lane.b32.xlu0 %v1948, 64
    %v2110 = vpop.permute.xlu0 %2109
    %2111 = vrot.lane.b32.xlu0 %v1949, 64
    %v2112 = vpop.permute.xlu0 %2111
    %2113 = vrot.lane.b32.xlu0 %v1950, 64
    %v2114 = vpop.permute.xlu0 %2113
    %2115 = vrot.lane.b32.xlu0 %v1951, 64
    %v2116 = vpop.permute.xlu0 %2115
    %2117 = vrot.lane.b32.xlu0 %v1952, 64
    %v2118 = vpop.permute.xlu0 %2117
    %2119 = vrot.lane.b32.xlu0 %v1953, 64
    %v2120 = vpop.permute.xlu0 %2119
    %2121 = vrot.lane.b32.xlu0 %v1954, 64
    %v2122 = vpop.permute.xlu0 %2121
    %2131 = vrot.lane.b32.xlu0 %v1971, 96
    %v2132 = vpop.permute.xlu0 %2131
    %2133 = vrot.lane.b32.xlu0 %v1972, 96
    %v2134 = vpop.permute.xlu0 %2133
    %2135 = vrot.lane.b32.xlu0 %v1973, 96
    %v2136 = vpop.permute.xlu0 %2135
    %2137 = vrot.lane.b32.xlu0 %v1974, 96
    %v2138 = vpop.permute.xlu0 %2137
    %2139 = vrot.lane.b32.xlu0 %v1975, 96
    %v2140 = vpop.permute.xlu0 %2139
    %2141 = vrot.lane.b32.xlu0 %v1976, 96
    %v2142 = vpop.permute.xlu0 %2141
    %2143 = vrot.lane.b32.xlu0 %v1977, 96
    %v2144 = vpop.permute.xlu0 %2143
    %2145 = vrot.lane.b32.xlu0 %v1978, 96
    %v2146 = vpop.permute.xlu0 %2145
    %v2149 = vsel %vm1072, %v1787, %v2012
    %v2152 = vsel %vm1072, %v1788, %v2014
    %v2155 = vsel %vm1072, %v1789, %v2016
    %v2158 = vsel %vm1072, %v1790, %v2018
    %v2161 = vsel %vm1072, %v1791, %v2020
    %v2164 = vsel %vm1072, %v1792, %v2022
    %v2167 = vsel %vm1072, %v1793, %v2024
    %v2170 = vsel %vm1072, %v1794, %v2026
    %v2172 = vsel %vm1097, %v2149, %v2036
    %v2174 = vsel %vm1097, %v2152, %v2038
    %v2176 = vsel %vm1097, %v2155, %v2040
    %v2178 = vsel %vm1097, %v2158, %v2042
    %v2180 = vsel %vm1097, %v2161, %v2044
    %v2182 = vsel %vm1097, %v2164, %v2046
    %v2184 = vsel %vm1097, %v2167, %v2048
    %v2186 = vsel %vm1097, %v2170, %v2050
    %v2188 = vsel %vm1114, %v2172, %v2060
    %v2191 = vsel %vm1114, %v2174, %v2062
    %v2194 = vsel %vm1114, %v2176, %v2064
    %v2197 = vsel %vm1114, %v2178, %v2066
    %v2200 = vsel %vm1114, %v2180, %v2068
    %v2203 = vsel %vm1114, %v2182, %v2070
    %v2206 = vsel %vm1114, %v2184, %v2072
    %v2209 = vsel %vm1114, %v2186, %v2074
    %v2213 = vsel %vm1072, %v1899, %v2084
    %v2216 = vsel %vm1072, %v1900, %v2086
    %v2219 = vsel %vm1072, %v1901, %v2088
    %v2222 = vsel %vm1072, %v1902, %v2090
    %v2225 = vsel %vm1072, %v1903, %v2092
    %v2228 = vsel %vm1072, %v1904, %v2094
    %v2231 = vsel %vm1072, %v1905, %v2096
    %v2234 = vsel %vm1072, %v1906, %v2098
    %v2236 = vsel %vm1097, %v2213, %v2108
    %v2238 = vsel %vm1097, %v2216, %v2110
    %v2240 = vsel %vm1097, %v2219, %v2112
    %v2242 = vsel %vm1097, %v2222, %v2114
    %v2244 = vsel %vm1097, %v2225, %v2116
    %v2246 = vsel %vm1097, %v2228, %v2118
    %v2248 = vsel %vm1097, %v2231, %v2120
    %v2250 = vsel %vm1097, %v2234, %v2122
    %v2252 = vsel %vm1114, %v2236, %v2132
    %v2255 = vsel %vm1114, %v2238, %v2134
    %v2258 = vsel %vm1114, %v2240, %v2136
    %v2261 = vsel %vm1114, %v2242, %v2138
    %v2264 = vsel %vm1114, %v2244, %v2140
    %v2267 = vsel %vm1114, %v2246, %v2142
    %v2270 = vsel %vm1114, %v2248, %v2144
    %v2273 = vsel %vm1114, %v2250, %v2146
    %v2275 = vld [vmem:[%s4] sm:$0xf]
    %v2276 = vld [vmem:[%s4 + $0x4] sm:$0xf]
    %v2277 = vld [vmem:[%s4 + $0x8] sm:$0xf]
    %v2278 = vld [vmem:[%s4 + $0xc] sm:$0xf]
    %v2279 = vld [vmem:[%s4 + $0x10] sm:$0xf]
    %v2280 = vld [vmem:[%s4 + $0x14] sm:$0xf]
    %v2281 = vld [vmem:[%s4 + $0x18] sm:$0xf]
    %v2282 = vld [vmem:[%s4 + $0x1c] sm:$0xf]
    %v2283 = vld [vmem:[%s4 + $0x20] sm:$0xf]
    %v2284 = vld [vmem:[%s4 + $0x24] sm:$0xf]
    %v2285 = vld [vmem:[%s4 + $0x28] sm:$0xf]
    %v2286 = vld [vmem:[%s4 + $0x2c] sm:$0xf]
    %v2287 = vld [vmem:[%s4 + $0x30] sm:$0xf]
    %v2288 = vld [vmem:[%s4 + $0x34] sm:$0xf]
    %v2289 = vld [vmem:[%s4 + $0x38] sm:$0xf]
    %v2290 = vld [vmem:[%s4 + $0x3c] sm:$0xf]
    %v2291 = vld [vmem:[%s4 + $0x40] sm:$0xf]
    %v2292 = vld [vmem:[%s4 + $0x44] sm:$0xf]
    %v2293 = vld [vmem:[%s4 + $0x48] sm:$0xf]
    %v2294 = vld [vmem:[%s4 + $0x4c] sm:$0xf]
    %v2295 = vld [vmem:[%s4 + $0x50] sm:$0xf]
    %v2296 = vld [vmem:[%s4 + $0x54] sm:$0xf]
    %v2297 = vld [vmem:[%s4 + $0x58] sm:$0xf]
    %v2298 = vld [vmem:[%s4 + $0x5c] sm:$0xf]
    %v2299 = vld [vmem:[%s4 + $0x60] sm:$0xf]
    %v2300 = vld [vmem:[%s4 + $0x64] sm:$0xf]
    %v2301 = vld [vmem:[%s4 + $0x68] sm:$0xf]
    %v2302 = vld [vmem:[%s4 + $0x6c] sm:$0xf]
    %v2303 = vld [vmem:[%s4 + $0x70] sm:$0xf]
    %v2304 = vld [vmem:[%s4 + $0x74] sm:$0xf]
    %v2305 = vld [vmem:[%s4 + $0x78] sm:$0xf]
    %v2306 = vld [vmem:[%s4 + $0x7c] sm:$0xf]
    %v2307 = vld [vmem:[%s4 + $0x80] sm:$0xf]
    %v2308 = vld [vmem:[%s4 + $0x84] sm:$0xf]
    %v2309 = vld [vmem:[%s4 + $0x88] sm:$0xf]
    %v2310 = vld [vmem:[%s4 + $0x8c] sm:$0xf]
    %v2347 = vunpack.c.l.b16 %v2275
    %v2348 = vunpack.c.l.b16 %v2276
    %v2349 = vunpack.c.l.b16 %v2277
    %v2350 = vunpack.c.l.b16 %v2278
    %v2351 = vunpack.c.l.b16 %v2279
    %v2352 = vunpack.c.l.b16 %v2280
    %v2353 = vunpack.c.l.b16 %v2281
    %v2354 = vunpack.c.l.b16 %v2282
    %v2355 = vunpack.c.l.b16 %v2283
    %v2356 = vunpack.c.l.b16 %v2284
    %v2357 = vunpack.c.l.b16 %v2285
    %v2358 = vunpack.c.l.b16 %v2286
    %v2359 = vunpack.c.l.b16 %v2287
    %v2360 = vunpack.c.l.b16 %v2288
    %v2361 = vunpack.c.l.b16 %v2289
    %v2362 = vunpack.c.l.b16 %v2290
    %v2363 = vunpack.c.l.b16 %v2291
    %v2364 = vunpack.c.l.b16 %v2292
    %v2365 = vunpack.c.l.b16 %v2293
    %v2366 = vunpack.c.l.b16 %v2294
    %v2367 = vunpack.c.l.b16 %v2295
    %v2368 = vunpack.c.l.b16 %v2296
    %v2369 = vunpack.c.l.b16 %v2297
    %v2370 = vunpack.c.l.b16 %v2298
    %v2371 = vunpack.c.l.b16 %v2299
    %v2372 = vunpack.c.l.b16 %v2300
    %v2373 = vunpack.c.l.b16 %v2301
    %v2374 = vunpack.c.l.b16 %v2302
    %v2375 = vunpack.c.l.b16 %v2303
    %v2376 = vunpack.c.l.b16 %v2304
    %v2377 = vunpack.c.l.b16 %v2305
    %v2378 = vunpack.c.l.b16 %v2306
    %v2379 = vunpack.c.l.b16 %v2307
    %v2380 = vunpack.c.l.b16 %v2308
    %v2381 = vunpack.c.l.b16 %v2309
    %v2382 = vunpack.c.l.b16 %v2310
    %v2383 = vpack.c.b16 %v2348, %v2347
    %v2384 = vpack.c.b16 %v2350, %v2349
    %v2385 = vpack.c.b16 %v2352, %v2351
    %v2386 = vpack.c.b16 %v2354, %v2353
    %v2387 = vpack.c.b16 %v2356, %v2355
    %v2388 = vpack.c.b16 %v2358, %v2357
    %v2389 = vpack.c.b16 %v2360, %v2359
    %v2390 = vpack.c.b16 %v2362, %v2361
    %v2391 = vpack.c.b16 %v2364, %v2363
    %v2392 = vpack.c.b16 %v2366, %v2365
    %v2393 = vpack.c.b16 %v2368, %v2367
    %v2394 = vpack.c.b16 %v2370, %v2369
    %v2395 = vpack.c.b16 %v2372, %v2371
    %v2396 = vpack.c.b16 %v2374, %v2373
    %v2397 = vpack.c.b16 %v2376, %v2375
    %v2398 = vpack.c.b16 %v2378, %v2377
    %v2399 = vpack.c.b16 %v2380, %v2379
    %v2400 = vpack.c.b16 %v2382, %v2381
    %v2420 = vsel %vm1072, %v1995, 0
    %v2423 = vsel %vm1072, %v1996, 0
    %v2426 = vsel %vm1072, %v1997, 0
    %v2429 = vsel %vm1072, %v1998, 0
    %v2432 = vsel %vm1072, %v1999, 0
    %v2435 = vsel %vm1072, %v2000, 0
    %v2438 = vsel %vm1072, %v2001, 0
    %v2441 = vsel %vm1072, %v2002, 0
    %2443 = vmatprep.subr.bf16.mxu0 0
    %2444 = vmatpush1.bf16.msra.mxu0 %v2383
    %2445 = vmatprep.subr.bf16.mxu0 0
    %2446 = vmatpush1.bf16.msra.mxu0 %v2384
    %2447 = vmatprep.subr.bf16.mxu0 0
    %2448 = vmatpush1.bf16.msra.mxu0 %v2385
    %2449 = vmatprep.subr.bf16.mxu0 0
    %2450 = vmatpush1.bf16.msra.mxu0 %v2386
    %2451 = vmatprep.subr.bf16.mxu0 0
    %2452 = vmatpush1.bf16.msra.mxu0 %v2387
    %2453 = vmatprep.subr.bf16.mxu0 0
    %2454 = vmatpush1.bf16.msra.mxu0 %v2388
    %2455 = vmatprep.subr.bf16.mxu0 0
    %2456 = vmatpush1.bf16.msra.mxu0 %v2389
    %2457 = vmatprep.subr.bf16.mxu0 0
    %2458 = vmatpush1.bf16.msra.mxu0 %v2390
    %2459 = vmatprep.subr.bf16.mxu0 0
    %2460 = vmatpush1.bf16.msra.mxu0 %v2391
    %2461 = vmatprep.subr.bf16.mxu0 0
    %2462 = vmatpush1.bf16.msra.mxu0 %v2392
    %2463 = vmatprep.subr.bf16.mxu0 0
    %2464 = vmatpush1.bf16.msra.mxu0 %v2393
    %2465 = vmatprep.subr.bf16.mxu0 0
    %2466 = vmatpush1.bf16.msra.mxu0 %v2394
    %2467 = vmatprep.subr.bf16.mxu0 0
    %2468 = vmatpush1.bf16.msra.mxu0 %v2395
    %2469 = vmatprep.subr.bf16.mxu0 0
    %2470 = vmatpush1.bf16.msra.mxu0 %v2396
    %2471 = vmatprep.subr.bf16.mxu0 0
    %2472 = vmatpush1.bf16.msra.mxu0 %v2397
    %2473 = vmatprep.subr.bf16.mxu0 0
    %2474 = vmatpush1.bf16.msra.mxu0 %v2398
    %2475 = vmatprep.mubr.bf16.mxu0 %v2252
    %2476 = vmatmul.mubr.bf16.gmra.mrb[0].mxu0 %v2188
    %v2477 = vpop.f32.mrb[0].mxu0
    %v2478 = vadd.f32 0.0, %v2477
    %v2479 = vpop.f32.mrb[0].mxu0
    %v2480 = vpop.f32.mrb[0].mxu0
    %v2481 = vadd.f32 0.0, %v2480
    %v2482 = vpop.f32.mrb[0].mxu0
    %2483 = vmatprep.mubr.bf16.mxu0 %v2255
    %2484 = vmatmul.mubr.bf16.gmra.mrb[0].mxu0 %v2191
    %v2485 = vpop.f32.mrb[0].mxu0
    %v2486 = vadd.f32 0.0, %v2485
    %v2487 = vpop.f32.mrb[0].mxu0
    %v2488 = vpop.f32.mrb[0].mxu0
    %v2489 = vadd.f32 0.0, %v2488
    %v2490 = vpop.f32.mrb[0].mxu0
    %2491 = vmatprep.mubr.bf16.mxu0 %v2258
    %2492 = vmatmul.mubr.bf16.gmra.mrb[0].mxu0 %v2194
    %v2493 = vpop.f32.mrb[0].mxu0
    %v2494 = vadd.f32 0.0, %v2493
    %v2495 = vpop.f32.mrb[0].mxu0
    %v2496 = vpop.f32.mrb[0].mxu0
    %v2497 = vadd.f32 0.0, %v2496
    %v2498 = vpop.f32.mrb[0].mxu0
    %2499 = vmatprep.mubr.bf16.mxu0 %v2261
    %2500 = vmatmul.mubr.bf16.gmra.mrb[0].mxu0 %v2197
    %v2501 = vpop.f32.mrb[0].mxu0
    %v2502 = vadd.f32 0.0, %v2501
    %v2503 = vpop.f32.mrb[0].mxu0
    %v2504 = vpop.f32.mrb[0].mxu0
    %v2505 = vadd.f32 0.0, %v2504
    %v2506 = vpop.f32.mrb[0].mxu0
    %2507 = vmatprep.mubr.bf16.mxu0 %v2264
    %2508 = vmatmul.mubr.bf16.gmra.mrb[0].mxu0 %v2200
    %v2509 = vpop.f32.mrb[0].mxu0
    %v2510 = vadd.f32 0.0, %v2509
    %v2511 = vpop.f32.mrb[0].mxu0
    %v2512 = vpop.f32.mrb[0].mxu0
    %v2513 = vadd.f32 0.0, %v2512
    %v2514 = vpop.f32.mrb[0].mxu0
    %2515 = vmatprep.mubr.bf16.mxu0 %v2267
    %2516 = vmatmul.mubr.bf16.gmra.mrb[0].mxu0 %v2203
    %v2517 = vpop.f32.mrb[0].mxu0
    %v2518 = vadd.f32 0.0, %v2517
    %v2519 = vpop.f32.mrb[0].mxu0
    %v2520 = vpop.f32.mrb[0].mxu0
    %v2521 = vadd.f32 0.0, %v2520
    %v2522 = vpop.f32.mrb[0].mxu0
    %2523 = vmatprep.mubr.bf16.mxu0 %v2270
    %2524 = vmatmul.mubr.bf16.gmra.mrb[0].mxu0 %v2206
    %v2525 = vpop.f32.mrb[0].mxu0
    %v2526 = vadd.f32 0.0, %v2525
    %v2527 = vpop.f32.mrb[0].mxu0
    %v2528 = vpop.f32.mrb[0].mxu0
    %v2529 = vadd.f32 0.0, %v2528
    %v2530 = vpop.f32.mrb[0].mxu0
    %2531 = vmatprep.mubr.bf16.mxu0 %v2273
    %2532 = vmatmul.mubr.bf16.gmra.mrb[0].mxu0 %v2209
    %v2533 = vpop.f32.mrb[0].mxu0
    %v2534 = vadd.f32 0.0, %v2533
    %v2535 = vpop.f32.mrb[0].mxu0
    %v2536 = vpop.f32.mrb[0].mxu0
    %v2537 = vadd.f32 0.0, %v2536
    %v2538 = vpop.f32.mrb[0].mxu0
    %2539 = vdwg.mxu0
    %2540 = vmatprep.subr.bf16.mxu0 0
    %2541 = vmatpush1.bf16.msra.mxu0 %v2399
    %2542 = vmatprep.subr.bf16.mxu0 0
    %2543 = vmatpush1.bf16.msra.mxu0 %v2400
    %2544 = vmatprep.subr.bf16.mxu0 0
    %2545 = vmatpush1.bf16.msra.mxu0 0
    %2546 = vmatprep.subr.bf16.mxu0 0
    %2547 = vmatpush1.bf16.msra.mxu0 0
    %2548 = vmatprep.subr.bf16.mxu0 0
    %2549 = vmatpush1.bf16.msra.mxu0 0
    %2550 = vmatprep.subr.bf16.mxu0 0
    %2551 = vmatpush1.bf16.msra.mxu0 0
    %2552 = vmatprep.subr.bf16.mxu0 0
    %2553 = vmatpush1.bf16.msra.mxu0 0
    %2554 = vmatprep.subr.bf16.mxu0 0
    %2555 = vmatpush1.bf16.msra.mxu0 0
    %2556 = vmatprep.subr.bf16.mxu0 0
    %2557 = vmatpush1.bf16.msra.mxu0 0
    %2558 = vmatprep.subr.bf16.mxu0 0
    %2559 = vmatpush1.bf16.msra.mxu0 0
    %2560 = vmatprep.subr.bf16.mxu0 0
    %2561 = vmatpush1.bf16.msra.mxu0 0
    %2562 = vmatprep.subr.bf16.mxu0 0
    %2563 = vmatpush1.bf16.msra.mxu0 0
    %2564 = vmatprep.subr.bf16.mxu0 0
    %2565 = vmatpush1.bf16.msra.mxu0 0
    %2566 = vmatprep.subr.bf16.mxu0 0
    %2567 = vmatpush1.bf16.msra.mxu0 0
    %2568 = vmatprep.subr.bf16.mxu0 0
    %2569 = vmatpush1.bf16.msra.mxu0 0
    %2570 = vmatprep.subr.bf16.mxu0 0
    %2571 = vmatpush1.bf16.msra.mxu0 0
    %2572 = vmatprep.mubr.bf16.mxu0 0
    %2573 = vmatmul.mubr.bf16.gmra.mrb[0].mxu0 %v2420
    %v2574 = vpop.f32.mrb[0].mxu0
    %v2575 = vadd.f32 %v2478, %v2574
    %v2576 = vpop.f32.mrb[0].mxu0
    %v2577 = vpop.f32.mrb[0].mxu0
    %v2578 = vadd.f32 %v2481, %v2577
    %v2579 = vpop.f32.mrb[0].mxu0
    %2580 = vmatprep.mubr.bf16.mxu0 0
    %2581 = vmatmul.mubr.bf16.gmra.mrb[0].mxu0 %v2423
    %v2582 = vpop.f32.mrb[0].mxu0
    %v2583 = vadd.f32 %v2486, %v2582
    %v2584 = vpop.f32.mrb[0].mxu0
    %v2585 = vpop.f32.mrb[0].mxu0
    %v2586 = vadd.f32 %v2489, %v2585
    %v2587 = vpop.f32.mrb[0].mxu0
    %2588 = vmatprep.mubr.bf16.mxu0 0
    %2589 = vmatmul.mubr.bf16.gmra.mrb[0].mxu0 %v2426
    %v2590 = vpop.f32.mrb[0].mxu0
    %v2591 = vadd.f32 %v2494, %v2590
    %v2592 = vpop.f32.mrb[0].mxu0
    %v2593 = vpop.f32.mrb[0].mxu0
    %v2594 = vadd.f32 %v2497, %v2593
    %v2595 = vpop.f32.mrb[0].mxu0
    %2596 = vmatprep.mubr.bf16.mxu0 0
    %2597 = vmatmul.mubr.bf16.gmra.mrb[0].mxu0 %v2429
    %v2598 = vpop.f32.mrb[0].mxu0
    %v2599 = vadd.f32 %v2502, %v2598
    %v2600 = vpop.f32.mrb[0].mxu0
    %v2601 = vpop.f32.mrb[0].mxu0
    %v2602 = vadd.f32 %v2505, %v2601
    %v2603 = vpop.f32.mrb[0].mxu0
    %2604 = vmatprep.mubr.bf16.mxu0 0
    %2605 = vmatmul.mubr.bf16.gmra.mrb[0].mxu0 %v2432
    %v2606 = vpop.f32.mrb[0].mxu0
    %v2607 = vadd.f32 %v2510, %v2606
    %v2608 = vpop.f32.mrb[0].mxu0
    %v2609 = vpop.f32.mrb[0].mxu0
    %v2610 = vadd.f32 %v2513, %v2609
    %v2611 = vpop.f32.mrb[0].mxu0
    %2612 = vmatprep.mubr.bf16.mxu0 0
    %2613 = vmatmul.mubr.bf16.gmra.mrb[0].mxu0 %v2435
    %v2614 = vpop.f32.mrb[0].mxu0
    %v2615 = vadd.f32 %v2518, %v2614
    %v2616 = vpop.f32.mrb[0].mxu0
    %v2617 = vpop.f32.mrb[0].mxu0
    %v2618 = vadd.f32 %v2521, %v2617
    %v2619 = vpop.f32.mrb[0].mxu0
    %2620 = vmatprep.mubr.bf16.mxu0 0
    %2621 = vmatmul.mubr.bf16.gmra.mrb[0].mxu0 %v2438
    %v2622 = vpop.f32.mrb[0].mxu0
    %v2623 = vadd.f32 %v2526, %v2622
    %v2624 = vpop.f32.mrb[0].mxu0
    %v2625 = vpop.f32.mrb[0].mxu0
    %v2626 = vadd.f32 %v2529, %v2625
    %v2627 = vpop.f32.mrb[0].mxu0
    %2628 = vmatprep.mubr.bf16.mxu0 0
    %2629 = vmatmul.mubr.bf16.gmra.mrb[0].mxu0 %v2441
    %v2630 = vpop.f32.mrb[0].mxu0
    %v2631 = vadd.f32 %v2534, %v2630
    %v2632 = vpop.f32.mrb[0].mxu0
    %v2633 = vpop.f32.mrb[0].mxu0
    %v2634 = vadd.f32 %v2537, %v2633
    %v2635 = vpop.f32.mrb[0].mxu0
    %2636 = vdwg.mxu0
    %v2637 = vsel %vm1072, %v2575, 0.0
    %v2638 = vsel %vm1072, %v2578, 0.0
    %v2639 = vadd.f32 %v2637, %v2638
    %v2640 = vsel %vm1072, %v2583, 0.0
    %v2641 = vadd.f32 %v2639, %v2640
    %v2642 = vsel %vm1072, %v2586, 0.0
    %v2643 = vadd.f32 %v2641, %v2642
    %v2644 = vsel %vm1072, %v2591, 0.0
    %v2645 = vadd.f32 %v2643, %v2644
    %v2646 = vsel %vm1072, %v2594, 0.0
    %v2647 = vadd.f32 %v2645, %v2646
    %v2648 = vsel %vm1072, %v2599, 0.0
    %v2649 = vadd.f32 %v2647, %v2648
    %v2650 = vsel %vm1072, %v2602, 0.0
    %v2651 = vadd.f32 %v2649, %v2650
    %v2652 = vsel %vm1072, %v2607, 0.0
    %v2653 = vadd.f32 %v2651, %v2652
    %v2654 = vsel %vm1072, %v2610, 0.0
    %v2655 = vadd.f32 %v2653, %v2654
    %v2656 = vsel %vm1072, %v2615, 0.0
    %v2657 = vadd.f32 %v2655, %v2656
    %v2658 = vsel %vm1072, %v2618, 0.0
    %v2659 = vadd.f32 %v2657, %v2658
    %v2660 = vsel %vm1072, %v2623, 0.0
    %v2661 = vadd.f32 %v2659, %v2660
    %v2662 = vsel %vm1072, %v2626, 0.0
    %v2663 = vadd.f32 %v2661, %v2662
    %v2664 = vsel %vm1072, %v2631, 0.0
    %v2665 = vadd.f32 %v2663, %v2664
    %v2666 = vsel %vm1072, %v2634, 0.0
    %v2667 = vadd.f32 %v2665, %v2666
    %v2668 = vrot.slane %v2667, 4
    %v2669 = vadd.f32 %v2667, %v2668
    %v2670 = vrot.slane %v2669, 2
    %v2671 = vadd.f32 %v2669, %v2670
    %v2672 = vrot.slane %v2671, 1
    %v2673 = vadd.f32 %v2671, %v2672
    %v2674 = vmul.f32 %v2673, %v1602
    %v2675 = vsub.f32 %v2575, %v2674
    %v2676 = vsub.f32 %v2578, %v2674
    %v2677 = vsub.f32 %v2583, %v2674
    %v2678 = vsub.f32 %v2586, %v2674
    %v2679 = vsub.f32 %v2591, %v2674
    %v2680 = vsub.f32 %v2594, %v2674
    %v2681 = vsub.f32 %v2599, %v2674
    %v2682 = vsub.f32 %v2602, %v2674
    %v2683 = vsub.f32 %v2607, %v2674
    %v2684 = vsub.f32 %v2610, %v2674
    %v2685 = vsub.f32 %v2615, %v2674
    %v2686 = vsub.f32 %v2618, %v2674
    %v2687 = vsub.f32 %v2623, %v2674
    %v2688 = vsub.f32 %v2626, %v2674
    %v2689 = vsub.f32 %v2631, %v2674
    %v2690 = vsub.f32 %v2634, %v2674
    %v2691 = vmul.f32 %v2675, %v2675
    %v2692 = vmul.f32 %v2676, %v2676
    %v2693 = vmul.f32 %v2677, %v2677
    %v2694 = vmul.f32 %v2678, %v2678
    %v2695 = vmul.f32 %v2679, %v2679
    %v2696 = vmul.f32 %v2680, %v2680
    %v2697 = vmul.f32 %v2681, %v2681
    %v2698 = vmul.f32 %v2682, %v2682
    %v2699 = vmul.f32 %v2683, %v2683
    %v2700 = vmul.f32 %v2684, %v2684
    %v2701 = vmul.f32 %v2685, %v2685
    %v2702 = vmul.f32 %v2686, %v2686
    %v2703 = vmul.f32 %v2687, %v2687
    %v2704 = vmul.f32 %v2688, %v2688
    %v2705 = vmul.f32 %v2689, %v2689
    %v2706 = vmul.f32 %v2690, %v2690
    %v2707 = vsel %vm1072, %v2691, 0.0
    %v2708 = vsel %vm1072, %v2692, 0.0
    %v2709 = vadd.f32 %v2707, %v2708
    %v2710 = vsel %vm1072, %v2693, 0.0
    %v2711 = vadd.f32 %v2709, %v2710
    %v2712 = vsel %vm1072, %v2694, 0.0
    %v2713 = vadd.f32 %v2711, %v2712
    %v2714 = vsel %vm1072, %v2695, 0.0
    %v2715 = vadd.f32 %v2713, %v2714
    %v2716 = vsel %vm1072, %v2696, 0.0
    %v2717 = vadd.f32 %v2715, %v2716
    %v2718 = vsel %vm1072, %v2697, 0.0
    %v2719 = vadd.f32 %v2717, %v2718
    %v2720 = vsel %vm1072, %v2698, 0.0
    %v2721 = vadd.f32 %v2719, %v2720
    %v2722 = vsel %vm1072, %v2699, 0.0
    %v2723 = vadd.f32 %v2721, %v2722
    %v2724 = vsel %vm1072, %v2700, 0.0
    %v2725 = vadd.f32 %v2723, %v2724
    %v2726 = vsel %vm1072, %v2701, 0.0
    %v2727 = vadd.f32 %v2725, %v2726
    %v2728 = vsel %vm1072, %v2702, 0.0
    %v2729 = vadd.f32 %v2727, %v2728
    %v2730 = vsel %vm1072, %v2703, 0.0
    %v2731 = vadd.f32 %v2729, %v2730
    %v2732 = vsel %vm1072, %v2704, 0.0
    %v2733 = vadd.f32 %v2731, %v2732
    %v2734 = vsel %vm1072, %v2705, 0.0
    %v2735 = vadd.f32 %v2733, %v2734
    %v2736 = vsel %vm1072, %v2706, 0.0
    %v2737 = vadd.f32 %v2735, %v2736
    %v2738 = vrot.slane %v2737, 4
    %v2739 = vadd.f32 %v2737, %v2738
    %v2740 = vrot.slane %v2739, 2
    %v2741 = vadd.f32 %v2739, %v2740
    %v2742 = vrot.slane %v2741, 1
    %v2743 = vadd.f32 %v2741, %v2742
    %v2744 = vmul.f32 %v2743, %v1602
    %v2745 = vld [vmem:[%s7] sm:$0x1]
    %v2746 = vadd.f32 %v2744, 1e-05
    %v2747 = vrsqrt.pop %v2746
    %v2748 = vmul.f32 %v2745, %v2747
    %v2750 = vlaneseq
    %v2751 = vshrl.u32 %v2750, 7
    %v2752 = vsub.s32 0, %v2751
    %v2753 = vrot.slane %v2748, %v2752
    %v2755 = vmul.f32 %v2675, %v2753
    %v2756 = vmul.f32 %v2676, %v2753
    %v2757 = vmul.f32 %v2677, %v2753
    %v2758 = vmul.f32 %v2678, %v2753
    %v2759 = vmul.f32 %v2679, %v2753
    %v2760 = vmul.f32 %v2680, %v2753
    %v2761 = vmul.f32 %v2681, %v2753
    %v2762 = vmul.f32 %v2682, %v2753
    %v2763 = vmul.f32 %v2683, %v2753
    %v2764 = vmul.f32 %v2684, %v2753
    %v2765 = vmul.f32 %v2685, %v2753
    %v2766 = vmul.f32 %v2686, %v2753
    %v2767 = vmul.f32 %v2687, %v2753
    %v2768 = vmul.f32 %v2688, %v2753
    %v2769 = vmul.f32 %v2689, %v2753
    %v2770 = vmul.f32 %v2690, %v2753
    %v2771 = vld [vmem:[%s8] sm:$0x1]
    %v2773 = vlaneseq
    %v2774 = vshrl.u32 %v2773, 7
    %v2775 = vsub.s32 0, %v2774
    %v2776 = vrot.slane %v2771, %v2775
    %v2778 = vadd.f32 %v2755, %v2776
    %v2779 = vadd.f32 %v2756, %v2776
    %v2780 = vadd.f32 %v2757, %v2776
    %v2781 = vadd.f32 %v2758, %v2776
    %v2782 = vadd.f32 %v2759, %v2776
    %v2783 = vadd.f32 %v2760, %v2776
    %v2784 = vadd.f32 %v2761, %v2776
    %v2785 = vadd.f32 %v2762, %v2776
    %v2786 = vadd.f32 %v2763, %v2776
    %v2787 = vadd.f32 %v2764, %v2776
    %v2788 = vadd.f32 %v2765, %v2776
    %v2789 = vadd.f32 %v2766, %v2776
    %v2790 = vadd.f32 %v2767, %v2776
    %v2791 = vadd.f32 %v2768, %v2776
    %v2792 = vadd.f32 %v2769, %v2776
    %v2793 = vadd.f32 %v2770, %v2776
    %v2794 = vld [vmem:[%s13] sm:$0x3]
    %v2795 = vld [vmem:[%s14] sm:$0xff]
    %v2796 = vld [vmem:[%s14 + $0x8] sm:$0xff]
    %v2797 = vld [vmem:[%s14 + $0x10] sm:$0xff]
    %v2798 = vld [vmem:[%s14 + $0x18] sm:$0xff]
    %v2799 = vld [vmem:[%s14 + $0x20] sm:$0xff]
    %v2800 = vld [vmem:[%s14 + $0x28] sm:$0xff]
    %v2801 = vld [vmem:[%s14 + $0x30] sm:$0xff]
    %v2802 = vld [vmem:[%s14 + $0x38] sm:$0xff]
    %v2803 = vld [vmem:[%s14 + $0x40] sm:$0xff]
    %v2804 = vld [vmem:[%s14 + $0x48] sm:$0xff]
    %v2805 = vld [vmem:[%s14 + $0x50] sm:$0xff]
    %v2806 = vld [vmem:[%s14 + $0x58] sm:$0xff]
    %v2807 = vld [vmem:[%s14 + $0x60] sm:$0xff]
    %v2808 = vld [vmem:[%s14 + $0x68] sm:$0xff]
    %v2809 = vld [vmem:[%s14 + $0x70] sm:$0xff]
    %v2810 = vld [vmem:[%s14 + $0x78] sm:$0xff]
    %2811 = vmatprep.subr.mxu0 0.0
    %2812 = vmatpush1.msra.mxu0 %v2778
    %2813 = vmatprep.subr.mxu0 0.0
    %2814 = vmatpush1.msra.mxu0 %v2779
    %2815 = vmatprep.subr.mxu0 0.0
    %2816 = vmatpush1.msra.mxu0 %v2780
    %2817 = vmatprep.subr.mxu0 0.0
    %2818 = vmatpush1.msra.mxu0 %v2781
    %2819 = vmatprep.subr.mxu0 0.0
    %2820 = vmatpush1.msra.mxu0 %v2782
    %2821 = vmatprep.subr.mxu0 0.0
    %2822 = vmatpush1.msra.mxu0 %v2783
    %2823 = vmatprep.subr.mxu0 0.0
    %2824 = vmatpush1.msra.mxu0 %v2784
    %2825 = vmatprep.subr.mxu0 0.0
    %2826 = vmatpush1.msra.mxu0 %v2785
    %2827 = vmatprep.subr.mxu0 0.0
    %2828 = vmatpush1.msra.mxu0 %v2786
    %2829 = vmatprep.subr.mxu0 0.0
    %2830 = vmatpush1.msra.mxu0 %v2787
    %2831 = vmatprep.subr.mxu0 0.0
    %2832 = vmatpush1.msra.mxu0 %v2788
    %2833 = vmatprep.subr.mxu0 0.0
    %2834 = vmatpush1.msra.mxu0 %v2789
    %2835 = vmatprep.subr.mxu0 0.0
    %2836 = vmatpush1.msra.mxu0 %v2790
    %2837 = vmatprep.subr.mxu0 0.0
    %2838 = vmatpush1.msra.mxu0 %v2791
    %2839 = vmatprep.subr.mxu0 0.0
    %2840 = vmatpush1.msra.mxu0 %v2792
    %2841 = vmatprep.subr.mxu0 0.0
    %2842 = vmatpush1.msra.mxu0 %v2793
    %2843 = vmatprep.subr.mxu0 0.0
    %2844 = vmatpush1.msra.mxu0 0.0
    %2845 = vmatprep.subr.mxu0 0.0
    %2846 = vmatpush1.msra.mxu0 0.0
    %2847 = vmatprep.subr.mxu0 0.0
    %2848 = vmatpush1.msra.mxu0 0.0
    %2849 = vmatprep.subr.mxu0 0.0
    %2850 = vmatpush1.msra.mxu0 0.0
    %2851 = vmatprep.subr.mxu0 0.0
    %2852 = vmatpush1.msra.mxu0 0.0
    %2853 = vmatprep.subr.mxu0 0.0
    %2854 = vmatpush1.msra.mxu0 0.0
    %2855 = vmatprep.subr.mxu0 0.0
    %2856 = vmatpush1.msra.mxu0 0.0
    %2857 = vmatprep.subr.mxu0 0.0
    %2858 = vmatpush1.msra.mxu0 0.0
    %2859 = vmatprep.subr.mxu0 0.0
    %2860 = vmatpush1.msra.mxu0 0.0
    %2861 = vmatprep.subr.mxu0 0.0
    %2862 = vmatpush1.msra.mxu0 0.0
    %2863 = vmatprep.subr.mxu0 0.0
    %2864 = vmatpush1.msra.mxu0 0.0
    %2865 = vmatprep.subr.mxu0 0.0
    %2866 = vmatpush1.msra.mxu0 0.0
    %2867 = vmatprep.subr.mxu0 0.0
    %2868 = vmatpush1.msra.mxu0 0.0
    %2869 = vmatprep.subr.mxu0 0.0
    %2870 = vmatpush1.msra.mxu0 0.0
    %2871 = vmatprep.subr.mxu0 0.0
    %2872 = vmatpush1.msra.mxu0 0.0
    %2873 = vmatprep.subr.mxu0 0.0
    %2874 = vmatpush1.msra.mxu0 0.0
    %2875 = vmatprep.mubr.f32.mxu0 0.0
    %2876 = vmatmul.mubr.f32.gmra.mrb[0].mxu0 %v2794
    %v2877 = vpop.f32.mrb[0].mxu0
    %v2878 = vadd.f32 0.0, %v2877
    %v2879 = vpop.f32.mrb[0].mxu0
    %2880 = vdwg.mxu0
    %vm2881 = vcmask 15360
    %v2883 = vsel %vm2881, %v2795, 0
    %v2886 = vsel %vm2881, %v2796, 0
    %v2889 = vsel %vm2881, %v2797, 0
    %v2892 = vsel %vm2881, %v2798, 0
    %v2895 = vsel %vm2881, %v2799, 0
    %v2898 = vsel %vm2881, %v2800, 0
    %v2901 = vsel %vm2881, %v2801, 0
    %v2904 = vsel %vm2881, %v2802, 0
    %v2907 = vsel %vm2881, %v2803, 0
    %v2910 = vsel %vm2881, %v2804, 0
    %v2913 = vsel %vm2881, %v2805, 0
    %v2916 = vsel %vm2881, %v2806, 0
    %v2919 = vsel %vm2881, %v2807, 0
    %v2922 = vsel %vm2881, %v2808, 0
    %v2925 = vsel %vm2881, %v2809, 0
    %v2928 = vsel %vm2881, %v2810, 0
    %vm2930 = vcmask 1041408
    %v2932 = vsel %vm2930, %v2878, 0
    %2934 = vmatprep.subr.mxu0 0.0
    %2935 = vmatpush1.msra.mxu0 %v2932
    %2936 = vmatprep.subr.mxu0 0.0
    %2937 = vmatpush1.msra.mxu0 0.0
    %2938 = vmatprep.subr.mxu0 0.0
    %2939 = vmatpush1.msra.mxu0 0.0
    %2940 = vmatprep.subr.mxu0 0.0
    %2941 = vmatpush1.msra.mxu0 0.0
    %2942 = vmatprep.subr.mxu0 0.0
    %2943 = vmatpush1.msra.mxu0 0.0
    %2944 = vmatprep.subr.mxu0 0.0
    %2945 = vmatpush1.msra.mxu0 0.0
    %2946 = vmatprep.subr.mxu0 0.0
    %2947 = vmatpush1.msra.mxu0 0.0
    %2948 = vmatprep.subr.mxu0 0.0
    %2949 = vmatpush1.msra.mxu0 0.0
    %2950 = vmatprep.subr.mxu0 0.0
    %2951 = vmatpush1.msra.mxu0 0.0
    %2952 = vmatprep.subr.mxu0 0.0
    %2953 = vmatpush1.msra.mxu0 0.0
    %2954 = vmatprep.subr.mxu0 0.0
    %2955 = vmatpush1.msra.mxu0 0.0
    %2956 = vmatprep.subr.mxu0 0.0
    %2957 = vmatpush1.msra.mxu0 0.0
    %2958 = vmatprep.subr.mxu0 0.0
    %2959 = vmatpush1.msra.mxu0 0.0
    %2960 = vmatprep.subr.mxu0 0.0
    %2961 = vmatpush1.msra.mxu0 0.0
    %2962 = vmatprep.subr.mxu0 0.0
    %2963 = vmatpush1.msra.mxu0 0.0
    %2964 = vmatprep.subr.mxu0 0.0
    %2965 = vmatpush1.msra.mxu0 0.0
    %2966 = vmatprep.subr.mxu0 0.0
    %2967 = vmatpush1.msra.mxu0 0.0
    %2968 = vmatprep.subr.mxu0 0.0
    %2969 = vmatpush1.msra.mxu0 0.0
    %2970 = vmatprep.subr.mxu0 0.0
    %2971 = vmatpush1.msra.mxu0 0.0
    %2972 = vmatprep.subr.mxu0 0.0
    %2973 = vmatpush1.msra.mxu0 0.0
    %2974 = vmatprep.subr.mxu0 0.0
    %2975 = vmatpush1.msra.mxu0 0.0
    %2976 = vmatprep.subr.mxu0 0.0
    %2977 = vmatpush1.msra.mxu0 0.0
    %2978 = vmatprep.subr.mxu0 0.0
    %2979 = vmatpush1.msra.mxu0 0.0
    %2980 = vmatprep.subr.mxu0 0.0
    %2981 = vmatpush1.msra.mxu0 0.0
    %2982 = vmatprep.subr.mxu0 0.0
    %2983 = vmatpush1.msra.mxu0 0.0
    %2984 = vmatprep.subr.mxu0 0.0
    %2985 = vmatpush1.msra.mxu0 0.0
    %2986 = vmatprep.subr.mxu0 0.0
    %2987 = vmatpush1.msra.mxu0 0.0
    %2988 = vmatprep.subr.mxu0 0.0
    %2989 = vmatpush1.msra.mxu0 0.0
    %2990 = vmatprep.subr.mxu0 0.0
    %2991 = vmatpush1.msra.mxu0 0.0
    %2992 = vmatprep.subr.mxu0 0.0
    %2993 = vmatpush1.msra.mxu0 0.0
    %2994 = vmatprep.subr.mxu0 0.0
    %2995 = vmatpush1.msra.mxu0 0.0
    %2996 = vmatprep.subr.mxu0 0.0
    %2997 = vmatpush1.msra.mxu0 0.0
    %2998 = vmatprep.mubr.f32.mxu0 0.0
    %2999 = vmatmul.mubr.f32.gmra.mrb[0].mxu0 %v2883
    %v3000 = vpop.f32.mrb[0].mxu0
    %v3001 = vadd.f32 0.0, %v3000
    %v3002 = vpop.f32.mrb[0].mxu0
    %3003 = vmatprep.mubr.f32.mxu0 0.0
    %3004 = vmatmul.mubr.f32.gmra.mrb[0].mxu0 %v2886
    %v3005 = vpop.f32.mrb[0].mxu0
    %v3006 = vadd.f32 0.0, %v3005
    %v3007 = vpop.f32.mrb[0].mxu0
    %3008 = vmatprep.mubr.f32.mxu0 0.0
    %3009 = vmatmul.mubr.f32.gmra.mrb[0].mxu0 %v2889
    %v3010 = vpop.f32.mrb[0].mxu0
    %v3011 = vadd.f32 0.0, %v3010
    %v3012 = vpop.f32.mrb[0].mxu0
    %3013 = vmatprep.mubr.f32.mxu0 0.0
    %3014 = vmatmul.mubr.f32.gmra.mrb[0].mxu0 %v2892
    %v3015 = vpop.f32.mrb[0].mxu0
    %v3016 = vadd.f32 0.0, %v3015
    %v3017 = vpop.f32.mrb[0].mxu0
    %3018 = vmatprep.mubr.f32.mxu0 0.0
    %3019 = vmatmul.mubr.f32.gmra.mrb[0].mxu0 %v2895
    %v3020 = vpop.f32.mrb[0].mxu0
    %v3021 = vadd.f32 0.0, %v3020
    %v3022 = vpop.f32.mrb[0].mxu0
    %3023 = vmatprep.mubr.f32.mxu0 0.0
    %3024 = vmatmul.mubr.f32.gmra.mrb[0].mxu0 %v2898
    %v3025 = vpop.f32.mrb[0].mxu0
    %v3026 = vadd.f32 0.0, %v3025
    %v3027 = vpop.f32.mrb[0].mxu0
    %3028 = vmatprep.mubr.f32.mxu0 0.0
    %3029 = vmatmul.mubr.f32.gmra.mrb[0].mxu0 %v2901
    %v3030 = vpop.f32.mrb[0].mxu0
    %v3031 = vadd.f32 0.0, %v3030
    %v3032 = vpop.f32.mrb[0].mxu0
    %3033 = vmatprep.mubr.f32.mxu0 0.0
    %3034 = vmatmul.mubr.f32.gmra.mrb[0].mxu0 %v2904
    %v3035 = vpop.f32.mrb[0].mxu0
    %v3036 = vadd.f32 0.0, %v3035
    %v3037 = vpop.f32.mrb[0].mxu0
    %3038 = vmatprep.mubr.f32.mxu0 0.0
    %3039 = vmatmul.mubr.f32.gmra.mrb[0].mxu0 %v2907
    %v3040 = vpop.f32.mrb[0].mxu0
    %v3041 = vadd.f32 0.0, %v3040
    %v3042 = vpop.f32.mrb[0].mxu0
    %3043 = vmatprep.mubr.f32.mxu0 0.0
    %3044 = vmatmul.mubr.f32.gmra.mrb[0].mxu0 %v2910
    %v3045 = vpop.f32.mrb[0].mxu0
    %v3046 = vadd.f32 0.0, %v3045
    %v3047 = vpop.f32.mrb[0].mxu0
    %3048 = vmatprep.mubr.f32.mxu0 0.0
    %3049 = vmatmul.mubr.f32.gmra.mrb[0].mxu0 %v2913
    %v3050 = vpop.f32.mrb[0].mxu0
    %v3051 = vadd.f32 0.0, %v3050
    %v3052 = vpop.f32.mrb[0].mxu0
    %3053 = vmatprep.mubr.f32.mxu0 0.0
    %3054 = vmatmul.mubr.f32.gmra.mrb[0].mxu0 %v2916
    %v3055 = vpop.f32.mrb[0].mxu0
    %v3056 = vadd.f32 0.0, %v3055
    %v3057 = vpop.f32.mrb[0].mxu0
    %3058 = vmatprep.mubr.f32.mxu0 0.0
    %3059 = vmatmul.mubr.f32.gmra.mrb[0].mxu0 %v2919
    %v3060 = vpop.f32.mrb[0].mxu0
    %v3061 = vadd.f32 0.0, %v3060
    %v3062 = vpop.f32.mrb[0].mxu0
    %3063 = vmatprep.mubr.f32.mxu0 0.0
    %3064 = vmatmul.mubr.f32.gmra.mrb[0].mxu0 %v2922
    %v3065 = vpop.f32.mrb[0].mxu0
    %v3066 = vadd.f32 0.0, %v3065
    %v3067 = vpop.f32.mrb[0].mxu0
    %3068 = vmatprep.mubr.f32.mxu0 0.0
    %3069 = vmatmul.mubr.f32.gmra.mrb[0].mxu0 %v2925
    %v3070 = vpop.f32.mrb[0].mxu0
    %v3071 = vadd.f32 0.0, %v3070
    %v3072 = vpop.f32.mrb[0].mxu0
    %3073 = vmatprep.mubr.f32.mxu0 0.0
    %3074 = vmatmul.mubr.f32.gmra.mrb[0].mxu0 %v2928
    %v3075 = vpop.f32.mrb[0].mxu0
    %v3076 = vadd.f32 0.0, %v3075
    %v3077 = vpop.f32.mrb[0].mxu0
    %3078 = vdwg.mxu0
    %v3079 = vmul.f32 %v3001, 0.015625
    %v3080 = vmul.f32 %v3006, 0.015625
    %v3081 = vmul.f32 %v3011, 0.015625
    %v3082 = vmul.f32 %v3016, 0.015625
    %v3083 = vmul.f32 %v3021, 0.015625
    %v3084 = vmul.f32 %v3026, 0.015625
    %v3085 = vmul.f32 %v3031, 0.015625
    %v3086 = vmul.f32 %v3036, 0.015625
    %v3087 = vmul.f32 %v3041, 0.015625
    %v3088 = vmul.f32 %v3046, 0.015625
    %v3089 = vmul.f32 %v3051, 0.015625
    %v3090 = vmul.f32 %v3056, 0.015625
    %v3091 = vmul.f32 %v3061, 0.015625
    %v3092 = vmul.f32 %v3066, 0.015625
    %v3093 = vmul.f32 %v3071, 0.015625
    %v3094 = vmul.f32 %v3076, 0.015625
    %v3095 = vmul.f32 %v2778, %v3079
    %v3096 = vmul.f32 %v2779, %v3080
    %v3097 = vmul.f32 %v2780, %v3081
    %v3098 = vmul.f32 %v2781, %v3082
    %v3099 = vmul.f32 %v2782, %v3083
    %v3100 = vmul.f32 %v2783, %v3084
    %v3101 = vmul.f32 %v2784, %v3085
    %v3102 = vmul.f32 %v2785, %v3086
    %v3103 = vmul.f32 %v2786, %v3087
    %v3104 = vmul.f32 %v2787, %v3088
    %v3105 = vmul.f32 %v2788, %v3089
    %v3106 = vmul.f32 %v2789, %v3090
    %v3107 = vmul.f32 %v2790, %v3091
    %v3108 = vmul.f32 %v2791, %v3092
    %v3109 = vmul.f32 %v2792, %v3093
    %v3110 = vmul.f32 %v2793, %v3094
    %v3111 = vld [vmem:[%s11] sm:$0xff]
    %v3112 = vld [vmem:[%s11 + $0x8] sm:$0xff]
    %v3113 = vld [vmem:[%s11 + $0x10] sm:$0xff]
    %v3114 = vld [vmem:[%s11 + $0x18] sm:$0xff]
    %v3116 = vsel %vm1072, %v3095, 0
    %v3119 = vsel %vm1072, %v3096, 0
    %v3122 = vsel %vm1072, %v3097, 0
    %v3125 = vsel %vm1072, %v3098, 0
    %v3128 = vsel %vm1072, %v3099, 0
    %v3131 = vsel %vm1072, %v3100, 0
    %v3134 = vsel %vm1072, %v3101, 0
    %v3137 = vsel %vm1072, %v3102, 0
    %v3140 = vsel %vm1072, %v3103, 0
    %v3143 = vsel %vm1072, %v3104, 0
    %v3146 = vsel %vm1072, %v3105, 0
    %v3149 = vsel %vm1072, %v3106, 0
    %v3152 = vsel %vm1072, %v3107, 0
    %v3155 = vsel %vm1072, %v3108, 0
    %v3158 = vsel %vm1072, %v3109, 0
    %v3161 = vsel %vm1072, %v3110, 0
    %3163 = vmatprep.subr.mxu0 0.0
    %3164 = vmatpush1.msra.mxu0 %v3111
    %3165 = vmatprep.subr.mxu0 0.0
    %3166 = vmatpush1.msra.mxu0 %v3112
    %3167 = vmatprep.subr.mxu0 0.0
    %3168 = vmatpush1.msra.mxu0 %v3113
    %3169 = vmatprep.subr.mxu0 0.0
    %3170 = vmatpush1.msra.mxu0 %v3114
    %3171 = vmatprep.subr.mxu0 0.0
    %3172 = vmatpush1.msra.mxu0 0.0
    %3173 = vmatprep.subr.mxu0 0.0
    %3174 = vmatpush1.msra.mxu0 0.0
    %3175 = vmatprep.subr.mxu0 0.0
    %3176 = vmatpush1.msra.mxu0 0.0
    %3177 = vmatprep.subr.mxu0 0.0
    %3178 = vmatpush1.msra.mxu0 0.0
    %3179 = vmatprep.subr.mxu0 0.0
    %3180 = vmatpush1.msra.mxu0 0.0
    %3181 = vmatprep.subr.mxu0 0.0
    %3182 = vmatpush1.msra.mxu0 0.0
    %3183 = vmatprep.subr.mxu0 0.0
    %3184 = vmatpush1.msra.mxu0 0.0
    %3185 = vmatprep.subr.mxu0 0.0
    %3186 = vmatpush1.msra.mxu0 0.0
    %3187 = vmatprep.subr.mxu0 0.0
    %3188 = vmatpush1.msra.mxu0 0.0
    %3189 = vmatprep.subr.mxu0 0.0
    %3190 = vmatpush1.msra.mxu0 0.0
    %3191 = vmatprep.subr.mxu0 0.0
    %3192 = vmatpush1.msra.mxu0 0.0
    %3193 = vmatprep.subr.mxu0 0.0
    %3194 = vmatpush1.msra.mxu0 0.0
    %3195 = vmatprep.subr.mxu0 0.0
    %3196 = vmatpush1.msra.mxu0 0.0
    %3197 = vmatprep.subr.mxu0 0.0
    %3198 = vmatpush1.msra.mxu0 0.0
    %3199 = vmatprep.subr.mxu0 0.0
    %3200 = vmatpush1.msra.mxu0 0.0
    %3201 = vmatprep.subr.mxu0 0.0
    %3202 = vmatpush1.msra.mxu0 0.0
    %3203 = vmatprep.subr.mxu0 0.0
    %3204 = vmatpush1.msra.mxu0 0.0
    %3205 = vmatprep.subr.mxu0 0.0
    %3206 = vmatpush1.msra.mxu0 0.0
    %3207 = vmatprep.subr.mxu0 0.0
    %3208 = vmatpush1.msra.mxu0 0.0
    %3209 = vmatprep.subr.mxu0 0.0
    %3210 = vmatpush1.msra.mxu0 0.0
    %3211 = vmatprep.subr.mxu0 0.0
    %3212 = vmatpush1.msra.mxu0 0.0
    %3213 = vmatprep.subr.mxu0 0.0
    %3214 = vmatpush1.msra.mxu0 0.0
    %3215 = vmatprep.subr.mxu0 0.0
    %3216 = vmatpush1.msra.mxu0 0.0
    %3217 = vmatprep.subr.mxu0 0.0
    %3218 = vmatpush1.msra.mxu0 0.0
    %3219 = vmatprep.subr.mxu0 0.0
    %3220 = vmatpush1.msra.mxu0 0.0
    %3221 = vmatprep.subr.mxu0 0.0
    %3222 = vmatpush1.msra.mxu0 0.0
    %3223 = vmatprep.subr.mxu0 0.0
    %3224 = vmatpush1.msra.mxu0 0.0
    %3225 = vmatprep.subr.mxu0 0.0
    %3226 = vmatpush1.msra.mxu0 0.0
    %3227 = vmatprep.mubr.f32.mxu0 0.0
    %3228 = vmatmul.mubr.f32.gmra.mrb[0].mxu0 %v3116
    %v3229 = vpop.f32.mrb[0].mxu0
    %v3230 = vadd.f32 0.0, %v3229
    %v3231 = vpop.f32.mrb[0].mxu0
    %3232 = vmatprep.mubr.f32.mxu0 0.0
    %3233 = vmatmul.mubr.f32.gmra.mrb[0].mxu0 %v3119
    %v3234 = vpop.f32.mrb[0].mxu0
    %v3235 = vadd.f32 0.0, %v3234
    %v3236 = vpop.f32.mrb[0].mxu0
    %3237 = vmatprep.mubr.f32.mxu0 0.0
    %3238 = vmatmul.mubr.f32.gmra.mrb[0].mxu0 %v3122
    %v3239 = vpop.f32.mrb[0].mxu0
    %v3240 = vadd.f32 0.0, %v3239
    %v3241 = vpop.f32.mrb[0].mxu0
    %3242 = vmatprep.mubr.f32.mxu0 0.0
    %3243 = vmatmul.mubr.f32.gmra.mrb[0].mxu0 %v3125
    %v3244 = vpop.f32.mrb[0].mxu0
    %v3245 = vadd.f32 0.0, %v3244
    %v3246 = vpop.f32.mrb[0].mxu0
    %3247 = vmatprep.mubr.f32.mxu0 0.0
    %3248 = vmatmul.mubr.f32.gmra.mrb[0].mxu0 %v3128
    %v3249 = vpop.f32.mrb[0].mxu0
    %v3250 = vadd.f32 0.0, %v3249
    %v3251 = vpop.f32.mrb[0].mxu0
    %3252 = vmatprep.mubr.f32.mxu0 0.0
    %3253 = vmatmul.mubr.f32.gmra.mrb[0].mxu0 %v3131
    %v3254 = vpop.f32.mrb[0].mxu0
    %v3255 = vadd.f32 0.0, %v3254
    %v3256 = vpop.f32.mrb[0].mxu0
    %3257 = vmatprep.mubr.f32.mxu0 0.0
    %3258 = vmatmul.mubr.f32.gmra.mrb[0].mxu0 %v3134
    %v3259 = vpop.f32.mrb[0].mxu0
    %v3260 = vadd.f32 0.0, %v3259
    %v3261 = vpop.f32.mrb[0].mxu0
    %3262 = vmatprep.mubr.f32.mxu0 0.0
    %3263 = vmatmul.mubr.f32.gmra.mrb[0].mxu0 %v3137
    %v3264 = vpop.f32.mrb[0].mxu0
    %v3265 = vadd.f32 0.0, %v3264
    %v3266 = vpop.f32.mrb[0].mxu0
    %3267 = vmatprep.mubr.f32.mxu0 0.0
    %3268 = vmatmul.mubr.f32.gmra.mrb[0].mxu0 %v3140
    %v3269 = vpop.f32.mrb[0].mxu0
    %v3270 = vadd.f32 0.0, %v3269
    %v3271 = vpop.f32.mrb[0].mxu0
    %3272 = vmatprep.mubr.f32.mxu0 0.0
    %3273 = vmatmul.mubr.f32.gmra.mrb[0].mxu0 %v3143
    %v3274 = vpop.f32.mrb[0].mxu0
    %v3275 = vadd.f32 0.0, %v3274
    %v3276 = vpop.f32.mrb[0].mxu0
    %3277 = vmatprep.mubr.f32.mxu0 0.0
    %3278 = vmatmul.mubr.f32.gmra.mrb[0].mxu0 %v3146
    %v3279 = vpop.f32.mrb[0].mxu0
    %v3280 = vadd.f32 0.0, %v3279
    %v3281 = vpop.f32.mrb[0].mxu0
    %3282 = vmatprep.mubr.f32.mxu0 0.0
    %3283 = vmatmul.mubr.f32.gmra.mrb[0].mxu0 %v3149
    %v3284 = vpop.f32.mrb[0].mxu0
    %v3285 = vadd.f32 0.0, %v3284
    %v3286 = vpop.f32.mrb[0].mxu0
    %3287 = vmatprep.mubr.f32.mxu0 0.0
    %3288 = vmatmul.mubr.f32.gmra.mrb[0].mxu0 %v3152
    %v3289 = vpop.f32.mrb[0].mxu0
    %v3290 = vadd.f32 0.0, %v3289
    %v3291 = vpop.f32.mrb[0].mxu0
    %3292 = vmatprep.mubr.f32.mxu0 0.0
    %3293 = vmatmul.mubr.f32.gmra.mrb[0].mxu0 %v3155
    %v3294 = vpop.f32.mrb[0].mxu0
    %v3295 = vadd.f32 0.0, %v3294
    %v3296 = vpop.f32.mrb[0].mxu0
    %3297 = vmatprep.mubr.f32.mxu0 0.0
    %3298 = vmatmul.mubr.f32.gmra.mrb[0].mxu0 %v3158
    %v3299 = vpop.f32.mrb[0].mxu0
    %v3300 = vadd.f32 0.0, %v3299
    %v3301 = vpop.f32.mrb[0].mxu0
    %3302 = vmatprep.mubr.f32.mxu0 0.0
    %3303 = vmatmul.mubr.f32.gmra.mrb[0].mxu0 %v3161
    %v3304 = vpop.f32.mrb[0].mxu0
    %v3305 = vadd.f32 0.0, %v3304
    %v3306 = vpop.f32.mrb[0].mxu0
    %3307 = vdwg.mxu0
    %3308 = vmatprep.subr.mxu0 0.0
    %3309 = vmatpush1.msra.mxu0 %v3230
    %3310 = vmatprep.subr.mxu0 0.0
    %3311 = vmatpush1.msra.mxu0 %v3235
    %3312 = vmatprep.subr.mxu0 0.0
    %3313 = vmatpush1.msra.mxu0 %v3240
    %3314 = vmatprep.subr.mxu0 0.0
    %3315 = vmatpush1.msra.mxu0 %v3245
    %3316 = vmatprep.subr.mxu0 0.0
    %3317 = vmatpush1.msra.mxu0 %v3250
    %3318 = vmatprep.subr.mxu0 0.0
    %3319 = vmatpush1.msra.mxu0 %v3255
    %3320 = vmatprep.subr.mxu0 0.0
    %3321 = vmatpush1.msra.mxu0 %v3260
    %3322 = vmatprep.subr.mxu0 0.0
    %3323 = vmatpush1.msra.mxu0 %v3265
    %3324 = vmatprep.subr.mxu0 0.0
    %3325 = vmatpush1.msra.mxu0 %v3270
    %3326 = vmatprep.subr.mxu0 0.0
    %3327 = vmatpush1.msra.mxu0 %v3275
    %3328 = vmatprep.subr.mxu0 0.0
    %3329 = vmatpush1.msra.mxu0 %v3280
    %3330 = vmatprep.subr.mxu0 0.0
    %3331 = vmatpush1.msra.mxu0 %v3285
    %3332 = vmatprep.subr.mxu0 0.0
    %3333 = vmatpush1.msra.mxu0 %v3290
    %3334 = vmatprep.subr.mxu0 0.0
    %3335 = vmatpush1.msra.mxu0 %v3295
    %3336 = vmatprep.subr.mxu0 0.0
    %3337 = vmatpush1.msra.mxu0 %v3300
    %3338 = vmatprep.subr.mxu0 0.0
    %3339 = vmatpush1.msra.mxu0 %v3305
    %3340 = vmatprep.subr.mxu0 0.0
    %3341 = vmatpush1.msra.mxu0 0.0
    %3342 = vmatprep.subr.mxu0 0.0
    %3343 = vmatpush1.msra.mxu0 0.0
    %3344 = vmatprep.subr.mxu0 0.0
    %3345 = vmatpush1.msra.mxu0 0.0
    %3346 = vmatprep.subr.mxu0 0.0
    %3347 = vmatpush1.msra.mxu0 0.0
    %3348 = vmatprep.subr.mxu0 0.0
    %3349 = vmatpush1.msra.mxu0 0.0
    %3350 = vmatprep.subr.mxu0 0.0
    %3351 = vmatpush1.msra.mxu0 0.0
    %3352 = vmatprep.subr.mxu0 0.0
    %3353 = vmatpush1.msra.mxu0 0.0
    %3354 = vmatprep.subr.mxu0 0.0
    %3355 = vmatpush1.msra.mxu0 0.0
    %3356 = vmatprep.subr.mxu0 0.0
    %3357 = vmatpush1.msra.mxu0 0.0
    %3358 = vmatprep.subr.mxu0 0.0
    %3359 = vmatpush1.msra.mxu0 0.0
    %3360 = vmatprep.subr.mxu0 0.0
    %3361 = vmatpush1.msra.mxu0 0.0
    %3362 = vmatprep.subr.mxu0 0.0
    %3363 = vmatpush1.msra.mxu0 0.0
    %3364 = vmatprep.subr.mxu0 0.0
    %3365 = vmatpush1.msra.mxu0 0.0
    %3366 = vmatprep.subr.mxu0 0.0
    %3367 = vmatpush1.msra.mxu0 0.0
    %3368 = vmatprep.subr.mxu0 0.0
    %3369 = vmatpush1.msra.mxu0 0.0
    %3370 = vmatprep.subr.mxu0 0.0
    %3371 = vmatpush1.msra.mxu0 0.0
    %3372 = vmatprep.mubr.f32.mxu0 0.0
    %3373 = vmatmul.mubr.f32.gmra.mrb[0].mxu0 %v2794
    %v3374 = vpop.f32.mrb[0].mxu0
    %v3375 = vadd.f32 0.0, %v3374
    %v3376 = vpop.f32.mrb[0].mxu0
    %3377 = vdwg.mxu0
    %v3378 = vmul.f32 %v3375, 0.015625
    %v3380 = vsel %vm2930, %v3378, 0
    %3382 = vmatprep.subr.mxu0 0.0
    %3383 = vmatpush1.msra.mxu0 %v3380
    %3384 = vmatprep.subr.mxu0 0.0
    %3385 = vmatpush1.msra.mxu0 0.0
    %3386 = vmatprep.subr.mxu0 0.0
    %3387 = vmatpush1.msra.mxu0 0.0
    %3388 = vmatprep.subr.mxu0 0.0
    %3389 = vmatpush1.msra.mxu0 0.0
    %3390 = vmatprep.subr.mxu0 0.0
    %3391 = vmatpush1.msra.mxu0 0.0
    %3392 = vmatprep.subr.mxu0 0.0
    %3393 = vmatpush1.msra.mxu0 0.0
    %3394 = vmatprep.subr.mxu0 0.0
    %3395 = vmatpush1.msra.mxu0 0.0
    %3396 = vmatprep.subr.mxu0 0.0
    %3397 = vmatpush1.msra.mxu0 0.0
    %3398 = vmatprep.subr.mxu0 0.0
    %3399 = vmatpush1.msra.mxu0 0.0
    %3400 = vmatprep.subr.mxu0 0.0
    %3401 = vmatpush1.msra.mxu0 0.0
    %3402 = vmatprep.subr.mxu0 0.0
    %3403 = vmatpush1.msra.mxu0 0.0
    %3404 = vmatprep.subr.mxu0 0.0
    %3405 = vmatpush1.msra.mxu0 0.0
    %3406 = vmatprep.subr.mxu0 0.0
    %3407 = vmatpush1.msra.mxu0 0.0
    %3408 = vmatprep.subr.mxu0 0.0
    %3409 = vmatpush1.msra.mxu0 0.0
    %3410 = vmatprep.subr.mxu0 0.0
    %3411 = vmatpush1.msra.mxu0 0.0
    %3412 = vmatprep.subr.mxu0 0.0
    %3413 = vmatpush1.msra.mxu0 0.0
    %3414 = vmatprep.subr.mxu0 0.0
    %3415 = vmatpush1.msra.mxu0 0.0
    %3416 = vmatprep.subr.mxu0 0.0
    %3417 = vmatpush1.msra.mxu0 0.0
    %3418 = vmatprep.subr.mxu0 0.0
    %3419 = vmatpush1.msra.mxu0 0.0
    %3420 = vmatprep.subr.mxu0 0.0
    %3421 = vmatpush1.msra.mxu0 0.0
    %3422 = vmatprep.subr.mxu0 0.0
    %3423 = vmatpush1.msra.mxu0 0.0
    %3424 = vmatprep.subr.mxu0 0.0
    %3425 = vmatpush1.msra.mxu0 0.0
    %3426 = vmatprep.subr.mxu0 0.0
    %3427 = vmatpush1.msra.mxu0 0.0
    %3428 = vmatprep.subr.mxu0 0.0
    %3429 = vmatpush1.msra.mxu0 0.0
    %3430 = vmatprep.subr.mxu0 0.0
    %3431 = vmatpush1.msra.mxu0 0.0
    %3432 = vmatprep.subr.mxu0 0.0
    %3433 = vmatpush1.msra.mxu0 0.0
    %3434 = vmatprep.subr.mxu0 0.0
    %3435 = vmatpush1.msra.mxu0 0.0
    %3436 = vmatprep.subr.mxu0 0.0
    %3437 = vmatpush1.msra.mxu0 0.0
    %3438 = vmatprep.subr.mxu0 0.0
    %3439 = vmatpush1.msra.mxu0 0.0
    %3440 = vmatprep.subr.mxu0 0.0
    %3441 = vmatpush1.msra.mxu0 0.0
    %3442 = vmatprep.subr.mxu0 0.0
    %3443 = vmatpush1.msra.mxu0 0.0
    %3444 = vmatprep.subr.mxu0 0.0
    %3445 = vmatpush1.msra.mxu0 0.0
    %3446 = vmatprep.mubr.f32.mxu0 0.0
    %3447 = vmatmul.mubr.f32.gmra.mrb[0].mxu0 %v2883
    %v3448 = vpop.f32.mrb[0].mxu0
    %v3449 = vadd.f32 0.0, %v3448
    %v3450 = vpop.f32.mrb[0].mxu0
    %3451 = vmatprep.mubr.f32.mxu0 0.0
    %3452 = vmatmul.mubr.f32.gmra.mrb[0].mxu0 %v2886
    %v3453 = vpop.f32.mrb[0].mxu0
    %v3454 = vadd.f32 0.0, %v3453
    %v3455 = vpop.f32.mrb[0].mxu0
    %3456 = vmatprep.mubr.f32.mxu0 0.0
    %3457 = vmatmul.mubr.f32.gmra.mrb[0].mxu0 %v2889
    %v3458 = vpop.f32.mrb[0].mxu0
    %v3459 = vadd.f32 0.0, %v3458
    %v3460 = vpop.f32.mrb[0].mxu0
    %3461 = vmatprep.mubr.f32.mxu0 0.0
    %3462 = vmatmul.mubr.f32.gmra.mrb[0].mxu0 %v2892
    %v3463 = vpop.f32.mrb[0].mxu0
    %v3464 = vadd.f32 0.0, %v3463
    %v3465 = vpop.f32.mrb[0].mxu0
    %3466 = vmatprep.mubr.f32.mxu0 0.0
    %3467 = vmatmul.mubr.f32.gmra.mrb[0].mxu0 %v2895
    %v3468 = vpop.f32.mrb[0].mxu0
    %v3469 = vadd.f32 0.0, %v3468
    %v3470 = vpop.f32.mrb[0].mxu0
    %3471 = vmatprep.mubr.f32.mxu0 0.0
    %3472 = vmatmul.mubr.f32.gmra.mrb[0].mxu0 %v2898
    %v3473 = vpop.f32.mrb[0].mxu0
    %v3474 = vadd.f32 0.0, %v3473
    %v3475 = vpop.f32.mrb[0].mxu0
    %3476 = vmatprep.mubr.f32.mxu0 0.0
    %3477 = vmatmul.mubr.f32.gmra.mrb[0].mxu0 %v2901
    %v3478 = vpop.f32.mrb[0].mxu0
    %v3479 = vadd.f32 0.0, %v3478
    %v3480 = vpop.f32.mrb[0].mxu0
    %3481 = vmatprep.mubr.f32.mxu0 0.0
    %3482 = vmatmul.mubr.f32.gmra.mrb[0].mxu0 %v2904
    %v3483 = vpop.f32.mrb[0].mxu0
    %v3484 = vadd.f32 0.0, %v3483
    %v3485 = vpop.f32.mrb[0].mxu0
    %3486 = vmatprep.mubr.f32.mxu0 0.0
    %3487 = vmatmul.mubr.f32.gmra.mrb[0].mxu0 %v2907
    %v3488 = vpop.f32.mrb[0].mxu0
    %v3489 = vadd.f32 0.0, %v3488
    %v3490 = vpop.f32.mrb[0].mxu0
    %3491 = vmatprep.mubr.f32.mxu0 0.0
    %3492 = vmatmul.mubr.f32.gmra.mrb[0].mxu0 %v2910
    %v3493 = vpop.f32.mrb[0].mxu0
    %v3494 = vadd.f32 0.0, %v3493
    %v3495 = vpop.f32.mrb[0].mxu0
    %3496 = vmatprep.mubr.f32.mxu0 0.0
    %3497 = vmatmul.mubr.f32.gmra.mrb[0].mxu0 %v2913
    %v3498 = vpop.f32.mrb[0].mxu0
    %v3499 = vadd.f32 0.0, %v3498
    %v3500 = vpop.f32.mrb[0].mxu0
    %3501 = vmatprep.mubr.f32.mxu0 0.0
    %3502 = vmatmul.mubr.f32.gmra.mrb[0].mxu0 %v2916
    %v3503 = vpop.f32.mrb[0].mxu0
    %v3504 = vadd.f32 0.0, %v3503
    %v3505 = vpop.f32.mrb[0].mxu0
    %3506 = vmatprep.mubr.f32.mxu0 0.0
    %3507 = vmatmul.mubr.f32.gmra.mrb[0].mxu0 %v2919
    %v3508 = vpop.f32.mrb[0].mxu0
    %v3509 = vadd.f32 0.0, %v3508
    %v3510 = vpop.f32.mrb[0].mxu0
    %3511 = vmatprep.mubr.f32.mxu0 0.0
    %3512 = vmatmul.mubr.f32.gmra.mrb[0].mxu0 %v2922
    %v3513 = vpop.f32.mrb[0].mxu0
    %v3514 = vadd.f32 0.0, %v3513
    %v3515 = vpop.f32.mrb[0].mxu0
    %3516 = vmatprep.mubr.f32.mxu0 0.0
    %3517 = vmatmul.mubr.f32.gmra.mrb[0].mxu0 %v2925
    %v3518 = vpop.f32.mrb[0].mxu0
    %v3519 = vadd.f32 0.0, %v3518
    %v3520 = vpop.f32.mrb[0].mxu0
    %3521 = vmatprep.mubr.f32.mxu0 0.0
    %3522 = vmatmul.mubr.f32.gmra.mrb[0].mxu0 %v2928
    %v3523 = vpop.f32.mrb[0].mxu0
    %v3524 = vadd.f32 0.0, %v3523
    %v3525 = vpop.f32.mrb[0].mxu0
    %3526 = vdwg.mxu0
    %v3527 = vsub.f32 %v3230, %v3449
    %v3528 = vsub.f32 %v3235, %v3454
    %v3529 = vsub.f32 %v3240, %v3459
    %v3530 = vsub.f32 %v3245, %v3464
    %v3531 = vsub.f32 %v3250, %v3469
    %v3532 = vsub.f32 %v3255, %v3474
    %v3533 = vsub.f32 %v3260, %v3479
    %v3534 = vsub.f32 %v3265, %v3484
    %v3535 = vsub.f32 %v3270, %v3489
    %v3536 = vsub.f32 %v3275, %v3494
    %v3537 = vsub.f32 %v3280, %v3499
    %v3538 = vsub.f32 %v3285, %v3504
    %v3539 = vsub.f32 %v3290, %v3509
    %v3540 = vsub.f32 %v3295, %v3514
    %v3541 = vsub.f32 %v3300, %v3519
    %v3542 = vsub.f32 %v3305, %v3524
    %v3543 = vmul.f32 %v3527, %v3527
    %v3544 = vmul.f32 %v3528, %v3528
    %v3545 = vmul.f32 %v3529, %v3529
    %v3546 = vmul.f32 %v3530, %v3530
    %v3547 = vmul.f32 %v3531, %v3531
    %v3548 = vmul.f32 %v3532, %v3532
    %v3549 = vmul.f32 %v3533, %v3533
    %v3550 = vmul.f32 %v3534, %v3534
    %v3551 = vmul.f32 %v3535, %v3535
    %v3552 = vmul.f32 %v3536, %v3536
    %v3553 = vmul.f32 %v3537, %v3537
    %v3554 = vmul.f32 %v3538, %v3538
    %v3555 = vmul.f32 %v3539, %v3539
    %v3556 = vmul.f32 %v3540, %v3540
    %v3557 = vmul.f32 %v3541, %v3541
    %v3558 = vmul.f32 %v3542, %v3542
    %3559 = vmatprep.subr.mxu0 0.0
    %3560 = vmatpush1.msra.mxu0 %v3543
    %3561 = vmatprep.subr.mxu0 0.0
    %3562 = vmatpush1.msra.mxu0 %v3544
    %3563 = vmatprep.subr.mxu0 0.0
    %3564 = vmatpush1.msra.mxu0 %v3545
    %3565 = vmatprep.subr.mxu0 0.0
    %3566 = vmatpush1.msra.mxu0 %v3546
    %3567 = vmatprep.subr.mxu0 0.0
    %3568 = vmatpush1.msra.mxu0 %v3547
    %3569 = vmatprep.subr.mxu0 0.0
    %3570 = vmatpush1.msra.mxu0 %v3548
    %3571 = vmatprep.subr.mxu0 0.0
    %3572 = vmatpush1.msra.mxu0 %v3549
    %3573 = vmatprep.subr.mxu0 0.0
    %3574 = vmatpush1.msra.mxu0 %v3550
    %3575 = vmatprep.subr.mxu0 0.0
    %3576 = vmatpush1.msra.mxu0 %v3551
    %3577 = vmatprep.subr.mxu0 0.0
    %3578 = vmatpush1.msra.mxu0 %v3552
    %3579 = vmatprep.subr.mxu0 0.0
    %3580 = vmatpush1.msra.mxu0 %v3553
    %3581 = vmatprep.subr.mxu0 0.0
    %3582 = vmatpush1.msra.mxu0 %v3554
    %3583 = vmatprep.subr.mxu0 0.0
    %3584 = vmatpush1.msra.mxu0 %v3555
    %3585 = vmatprep.subr.mxu0 0.0
    %3586 = vmatpush1.msra.mxu0 %v3556
    %3587 = vmatprep.subr.mxu0 0.0
    %3588 = vmatpush1.msra.mxu0 %v3557
    %3589 = vmatprep.subr.mxu0 0.0
    %3590 = vmatpush1.msra.mxu0 %v3558
    %3591 = vmatprep.subr.mxu0 0.0
    %3592 = vmatpush1.msra.mxu0 0.0
    %3593 = vmatprep.subr.mxu0 0.0
    %3594 = vmatpush1.msra.mxu0 0.0
    %3595 = vmatprep.subr.mxu0 0.0
    %3596 = vmatpush1.msra.mxu0 0.0
    %3597 = vmatprep.subr.mxu0 0.0
    %3598 = vmatpush1.msra.mxu0 0.0
    %3599 = vmatprep.subr.mxu0 0.0
    %3600 = vmatpush1.msra.mxu0 0.0
    %3601 = vmatprep.subr.mxu0 0.0
    %3602 = vmatpush1.msra.mxu0 0.0
    %3603 = vmatprep.subr.mxu0 0.0
    %3604 = vmatpush1.msra.mxu0 0.0
    %3605 = vmatprep.subr.mxu0 0.0
    %3606 = vmatpush1.msra.mxu0 0.0
    %3607 = vmatprep.subr.mxu0 0.0
    %3608 = vmatpush1.msra.mxu0 0.0
    %3609 = vmatprep.subr.mxu0 0.0
    %3610 = vmatpush1.msra.mxu0 0.0
    %3611 = vmatprep.subr.mxu0 0.0
    %3612 = vmatpush1.msra.mxu0 0.0
    %3613 = vmatprep.subr.mxu0 0.0
    %3614 = vmatpush1.msra.mxu0 0.0
    %3615 = vmatprep.subr.mxu0 0.0
    %3616 = vmatpush1.msra.mxu0 0.0
    %3617 = vmatprep.subr.mxu0 0.0
    %3618 = vmatpush1.msra.mxu0 0.0
    %3619 = vmatprep.subr.mxu0 0.0
    %3620 = vmatpush1.msra.mxu0 0.0
    %3621 = vmatprep.subr.mxu0 0.0
    %3622 = vmatpush1.msra.mxu0 0.0
    %3623 = vmatprep.mubr.f32.mxu0 0.0
    %3624 = vmatmul.mubr.f32.gmra.mrb[0].mxu0 %v2794
    %v3625 = vpop.f32.mrb[0].mxu0
    %v3626 = vadd.f32 0.0, %v3625
    %v3627 = vpop.f32.mrb[0].mxu0
    %3628 = vdwg.mxu0
    %v3629 = vrcp.pop 63.0
    %v3630 = vmul.f32 %v3626, %v3629
    %v3631 = vrsqrt.pop %v3630
    %v3632 = vmul.f32 %v3630, %v3631
    %vm3633 = vcmp.eq.f32.partialorder %v3630, inf
    %v3634 = vsel %vm3633, %v3630, %v3632
    %vm3635 = vcmp.eq.f32.partialorder %v3630, 0.0
    %v3636 = vand.u32 %v3630, 2147483648
    %v3637 = vsel %vm3635, %v3636, %v3634
    %v3638 = vadd.f32 %v3637, 1e-05
    %v3639 = vrcp.pop %v3638
    %v3641 = vsel %vm2930, %v3639, 0
    %3643 = vmatprep.subr.mxu0 0.0
    %3644 = vmatpush1.msra.mxu0 %v3641
    %3645 = vmatprep.subr.mxu0 0.0
    %3646 = vmatpush1.msra.mxu0 0.0
    %3647 = vmatprep.subr.mxu0 0.0
    %3648 = vmatpush1.msra.mxu0 0.0
    %3649 = vmatprep.subr.mxu0 0.0
    %3650 = vmatpush1.msra.mxu0 0.0
    %3651 = vmatprep.subr.mxu0 0.0
    %3652 = vmatpush1.msra.mxu0 0.0
    %3653 = vmatprep.subr.mxu0 0.0
    %3654 = vmatpush1.msra.mxu0 0.0
    %3655 = vmatprep.subr.mxu0 0.0
    %3656 = vmatpush1.msra.mxu0 0.0
    %3657 = vmatprep.subr.mxu0 0.0
    %3658 = vmatpush1.msra.mxu0 0.0
    %3659 = vmatprep.subr.mxu0 0.0
    %3660 = vmatpush1.msra.mxu0 0.0
    %3661 = vmatprep.subr.mxu0 0.0
    %3662 = vmatpush1.msra.mxu0 0.0
    %3663 = vmatprep.subr.mxu0 0.0
    %3664 = vmatpush1.msra.mxu0 0.0
    %3665 = vmatprep.subr.mxu0 0.0
    %3666 = vmatpush1.msra.mxu0 0.0
    %3667 = vmatprep.subr.mxu0 0.0
    %3668 = vmatpush1.msra.mxu0 0.0
    %3669 = vmatprep.subr.mxu0 0.0
    %3670 = vmatpush1.msra.mxu0 0.0
    %3671 = vmatprep.subr.mxu0 0.0
    %3672 = vmatpush1.msra.mxu0 0.0
    %3673 = vmatprep.subr.mxu0 0.0
    %3674 = vmatpush1.msra.mxu0 0.0
    %3675 = vmatprep.subr.mxu0 0.0
    %3676 = vmatpush1.msra.mxu0 0.0
    %3677 = vmatprep.subr.mxu0 0.0
    %3678 = vmatpush1.msra.mxu0 0.0
    %3679 = vmatprep.subr.mxu0 0.0
    %3680 = vmatpush1.msra.mxu0 0.0
    %3681 = vmatprep.subr.mxu0 0.0
    %3682 = vmatpush1.msra.mxu0 0.0
    %3683 = vmatprep.subr.mxu0 0.0
    %3684 = vmatpush1.msra.mxu0 0.0
    %3685 = vmatprep.subr.mxu0 0.0
    %3686 = vmatpush1.msra.mxu0 0.0
    %3687 = vmatprep.subr.mxu0 0.0
    %3688 = vmatpush1.msra.mxu0 0.0
    %3689 = vmatprep.subr.mxu0 0.0
    %3690 = vmatpush1.msra.mxu0 0.0
    %3691 = vmatprep.subr.mxu0 0.0
    %3692 = vmatpush1.msra.mxu0 0.0
    %3693 = vmatprep.subr.mxu0 0.0
    %3694 = vmatpush1.msra.mxu0 0.0
    %3695 = vmatprep.subr.mxu0 0.0
    %3696 = vmatpush1.msra.mxu0 0.0
    %3697 = vmatprep.subr.mxu0 0.0
    %3698 = vmatpush1.msra.mxu0 0.0
    %3699 = vmatprep.subr.mxu0 0.0
    %3700 = vmatpush1.msra.mxu0 0.0
    %3701 = vmatprep.subr.mxu0 0.0
    %3702 = vmatpush1.msra.mxu0 0.0
    %3703 = vmatprep.subr.mxu0 0.0
    %3704 = vmatpush1.msra.mxu0 0.0
    %3705 = vmatprep.subr.mxu0 0.0
    %3706 = vmatpush1.msra.mxu0 0.0
    %3707 = vmatprep.mubr.f32.mxu0 0.0
    %3708 = vmatmul.mubr.f32.gmra.mrb[0].mxu0 %v2883
    %v3709 = vpop.f32.mrb[0].mxu0
    %v3710 = vadd.f32 0.0, %v3709
    %v3711 = vpop.f32.mrb[0].mxu0
    %3712 = vmatprep.mubr.f32.mxu0 0.0
    %3713 = vmatmul.mubr.f32.gmra.mrb[0].mxu0 %v2886
    %v3714 = vpop.f32.mrb[0].mxu0
    %v3715 = vadd.f32 0.0, %v3714
    %v3716 = vpop.f32.mrb[0].mxu0
    %3717 = vmatprep.mubr.f32.mxu0 0.0
    %3718 = vmatmul.mubr.f32.gmra.mrb[0].mxu0 %v2889
    %v3719 = vpop.f32.mrb[0].mxu0
    %v3720 = vadd.f32 0.0, %v3719
    %v3721 = vpop.f32.mrb[0].mxu0
    %3722 = vmatprep.mubr.f32.mxu0 0.0
    %3723 = vmatmul.mubr.f32.gmra.mrb[0].mxu0 %v2892
    %v3724 = vpop.f32.mrb[0].mxu0
    %v3725 = vadd.f32 0.0, %v3724
    %v3726 = vpop.f32.mrb[0].mxu0
    %3727 = vmatprep.mubr.f32.mxu0 0.0
    %3728 = vmatmul.mubr.f32.gmra.mrb[0].mxu0 %v2895
    %v3729 = vpop.f32.mrb[0].mxu0
    %v3730 = vadd.f32 0.0, %v3729
    %v3731 = vpop.f32.mrb[0].mxu0
    %3732 = vmatprep.mubr.f32.mxu0 0.0
    %3733 = vmatmul.mubr.f32.gmra.mrb[0].mxu0 %v2898
    %v3734 = vpop.f32.mrb[0].mxu0
    %v3735 = vadd.f32 0.0, %v3734
    %v3736 = vpop.f32.mrb[0].mxu0
    %3737 = vmatprep.mubr.f32.mxu0 0.0
    %3738 = vmatmul.mubr.f32.gmra.mrb[0].mxu0 %v2901
    %v3739 = vpop.f32.mrb[0].mxu0
    %v3740 = vadd.f32 0.0, %v3739
    %v3741 = vpop.f32.mrb[0].mxu0
    %3742 = vmatprep.mubr.f32.mxu0 0.0
    %3743 = vmatmul.mubr.f32.gmra.mrb[0].mxu0 %v2904
    %v3744 = vpop.f32.mrb[0].mxu0
    %v3745 = vadd.f32 0.0, %v3744
    %v3746 = vpop.f32.mrb[0].mxu0
    %3747 = vmatprep.mubr.f32.mxu0 0.0
    %3748 = vmatmul.mubr.f32.gmra.mrb[0].mxu0 %v2907
    %v3749 = vpop.f32.mrb[0].mxu0
    %v3750 = vadd.f32 0.0, %v3749
    %v3751 = vpop.f32.mrb[0].mxu0
    %3752 = vmatprep.mubr.f32.mxu0 0.0
    %3753 = vmatmul.mubr.f32.gmra.mrb[0].mxu0 %v2910
    %v3754 = vpop.f32.mrb[0].mxu0
    %v3755 = vadd.f32 0.0, %v3754
    %v3756 = vpop.f32.mrb[0].mxu0
    %3757 = vmatprep.mubr.f32.mxu0 0.0
    %3758 = vmatmul.mubr.f32.gmra.mrb[0].mxu0 %v2913
    %v3759 = vpop.f32.mrb[0].mxu0
    %v3760 = vadd.f32 0.0, %v3759
    %v3761 = vpop.f32.mrb[0].mxu0
    %3762 = vmatprep.mubr.f32.mxu0 0.0
    %3763 = vmatmul.mubr.f32.gmra.mrb[0].mxu0 %v2916
    %v3764 = vpop.f32.mrb[0].mxu0
    %v3765 = vadd.f32 0.0, %v3764
    %v3766 = vpop.f32.mrb[0].mxu0
    %3767 = vmatprep.mubr.f32.mxu0 0.0
    %3768 = vmatmul.mubr.f32.gmra.mrb[0].mxu0 %v2919
    %v3769 = vpop.f32.mrb[0].mxu0
    %v3770 = vadd.f32 0.0, %v3769
    %v3771 = vpop.f32.mrb[0].mxu0
    %3772 = vmatprep.mubr.f32.mxu0 0.0
    %3773 = vmatmul.mubr.f32.gmra.mrb[0].mxu0 %v2922
    %v3774 = vpop.f32.mrb[0].mxu0
    %v3775 = vadd.f32 0.0, %v3774
    %v3776 = vpop.f32.mrb[0].mxu0
    %3777 = vmatprep.mubr.f32.mxu0 0.0
    %3778 = vmatmul.mubr.f32.gmra.mrb[0].mxu0 %v2925
    %v3779 = vpop.f32.mrb[0].mxu0
    %v3780 = vadd.f32 0.0, %v3779
    %v3781 = vpop.f32.mrb[0].mxu0
    %3782 = vmatprep.mubr.f32.mxu0 0.0
    %3783 = vmatmul.mubr.f32.gmra.mrb[0].mxu0 %v2928
    %v3784 = vpop.f32.mrb[0].mxu0
    %v3785 = vadd.f32 0.0, %v3784
    %v3786 = vpop.f32.mrb[0].mxu0
    %3787 = vdwg.mxu0
    %v3788 = vmul.f32 %v3527, %v3710
    %v3789 = vmul.f32 %v3528, %v3715
    %v3790 = vmul.f32 %v3529, %v3720
    %v3791 = vmul.f32 %v3530, %v3725
    %v3792 = vmul.f32 %v3531, %v3730
    %v3793 = vmul.f32 %v3532, %v3735
    %v3794 = vmul.f32 %v3533, %v3740
    %v3795 = vmul.f32 %v3534, %v3745
    %v3796 = vmul.f32 %v3535, %v3750
    %v3797 = vmul.f32 %v3536, %v3755
    %v3798 = vmul.f32 %v3537, %v3760
    %v3799 = vmul.f32 %v3538, %v3765
    %v3800 = vmul.f32 %v3539, %v3770
    %v3801 = vmul.f32 %v3540, %v3775
    %v3802 = vmul.f32 %v3541, %v3780
    %v3803 = vmul.f32 %v3542, %v3785
    %v3804 = vld [vmem:[%s9] sm:$0x1]
    %v3806 = vlaneseq
    %v3807 = vshrl.u32 %v3806, 7
    %v3808 = vsub.s32 0, %v3807
    %v3809 = vrot.slane %v3804, %v3808
    %v3811 = vmul.f32 %v3788, %v3809
    %v3812 = vmul.f32 %v3789, %v3809
    %v3813 = vmul.f32 %v3790, %v3809
    %v3814 = vmul.f32 %v3791, %v3809
    %v3815 = vmul.f32 %v3792, %v3809
    %v3816 = vmul.f32 %v3793, %v3809
    %v3817 = vmul.f32 %v3794, %v3809
    %v3818 = vmul.f32 %v3795, %v3809
    %v3819 = vmul.f32 %v3796, %v3809
    %v3820 = vmul.f32 %v3797, %v3809
    %v3821 = vmul.f32 %v3798, %v3809
    %v3822 = vmul.f32 %v3799, %v3809
    %v3823 = vmul.f32 %v3800, %v3809
    %v3824 = vmul.f32 %v3801, %v3809
    %v3825 = vmul.f32 %v3802, %v3809
    %v3826 = vmul.f32 %v3803, %v3809
    %v3827 = vld [vmem:[%s10] sm:$0x1]
    %v3829 = vlaneseq
    %v3830 = vshrl.u32 %v3829, 7
    %v3831 = vsub.s32 0, %v3830
    %v3832 = vrot.slane %v3827, %v3831
    %v3834 = vadd.f32 %v3811, %v3832
    %v3835 = vadd.f32 %v3812, %v3832
    %v3836 = vadd.f32 %v3813, %v3832
    %v3837 = vadd.f32 %v3814, %v3832
    %v3838 = vadd.f32 %v3815, %v3832
    %v3839 = vadd.f32 %v3816, %v3832
    %v3840 = vadd.f32 %v3817, %v3832
    %v3841 = vadd.f32 %v3818, %v3832
    %v3842 = vadd.f32 %v3819, %v3832
    %v3843 = vadd.f32 %v3820, %v3832
    %v3844 = vadd.f32 %v3821, %v3832
    %v3845 = vadd.f32 %v3822, %v3832
    %v3846 = vadd.f32 %v3823, %v3832
    %v3847 = vadd.f32 %v3824, %v3832
    %v3848 = vadd.f32 %v3825, %v3832
    %v3849 = vadd.f32 %v3826, %v3832
    %v3850 = vxor.u32 %v3834, 2147483648
    %v3851 = vxor.u32 %v3835, 2147483648
    %v3852 = vxor.u32 %v3836, 2147483648
    %v3853 = vxor.u32 %v3837, 2147483648
    %v3854 = vxor.u32 %v3838, 2147483648
    %v3855 = vxor.u32 %v3839, 2147483648
    %v3856 = vxor.u32 %v3840, 2147483648
    %v3857 = vxor.u32 %v3841, 2147483648
    %v3858 = vxor.u32 %v3842, 2147483648
    %v3859 = vxor.u32 %v3843, 2147483648
    %v3860 = vxor.u32 %v3844, 2147483648
    %v3861 = vxor.u32 %v3845, 2147483648
    %v3862 = vxor.u32 %v3846, 2147483648
    %v3863 = vxor.u32 %v3847, 2147483648
    %v3864 = vxor.u32 %v3848, 2147483648
    %v3865 = vxor.u32 %v3849, 2147483648
    %v3866 = vmul.f32 %v3850, 1.442695
    %v3867 = vpow.pop %v3866
    %v3868 = vmul.f32 %v3851, 1.442695
    %v3869 = vpow.pop %v3868
    %v3870 = vmul.f32 %v3852, 1.442695
    %v3871 = vpow.pop %v3870
    %v3872 = vmul.f32 %v3853, 1.442695
    %v3873 = vpow.pop %v3872
    %v3874 = vmul.f32 %v3854, 1.442695
    %v3875 = vpow.pop %v3874
    %v3876 = vmul.f32 %v3855, 1.442695
    %v3877 = vpow.pop %v3876
    %v3878 = vmul.f32 %v3856, 1.442695
    %v3879 = vpow.pop %v3878
    %v3880 = vmul.f32 %v3857, 1.442695
    %v3881 = vpow.pop %v3880
    %v3882 = vmul.f32 %v3858, 1.442695
    %v3883 = vpow.pop %v3882
    %v3884 = vmul.f32 %v3859, 1.442695
    %v3885 = vpow.pop %v3884
    %v3886 = vmul.f32 %v3860, 1.442695
    %v3887 = vpow.pop %v3886
    %v3888 = vmul.f32 %v3861, 1.442695
    %v3889 = vpow.pop %v3888
    %v3890 = vmul.f32 %v3862, 1.442695
    %v3891 = vpow.pop %v3890
    %v3892 = vmul.f32 %v3863, 1.442695
    %v3893 = vpow.pop %v3892
    %v3894 = vmul.f32 %v3864, 1.442695
    %v3895 = vpow.pop %v3894
    %v3896 = vmul.f32 %v3865, 1.442695
    %v3897 = vpow.pop %v3896
    %v3898 = vadd.f32 %v3867, 1.0
    %v3899 = vadd.f32 %v3869, 1.0
    %v3900 = vadd.f32 %v3871, 1.0
    %v3901 = vadd.f32 %v3873, 1.0
    %v3902 = vadd.f32 %v3875, 1.0
    %v3903 = vadd.f32 %v3877, 1.0
    %v3904 = vadd.f32 %v3879, 1.0
    %v3905 = vadd.f32 %v3881, 1.0
    %v3906 = vadd.f32 %v3883, 1.0
    %v3907 = vadd.f32 %v3885, 1.0
    %v3908 = vadd.f32 %v3887, 1.0
    %v3909 = vadd.f32 %v3889, 1.0
    %v3910 = vadd.f32 %v3891, 1.0
    %v3911 = vadd.f32 %v3893, 1.0
    %v3912 = vadd.f32 %v3895, 1.0
    %v3913 = vadd.f32 %v3897, 1.0
    %v3914 = vrcp.pop %v3898
    %v3915 = vmul.f32 1.0, %v3914
    %v3916 = vrcp.pop %v3899
    %v3917 = vmul.f32 1.0, %v3916
    %v3918 = vrcp.pop %v3900
    %v3919 = vmul.f32 1.0, %v3918
    %v3920 = vrcp.pop %v3901
    %v3921 = vmul.f32 1.0, %v3920
    %v3922 = vrcp.pop %v3902
    %v3923 = vmul.f32 1.0, %v3922
    %v3924 = vrcp.pop %v3903
    %v3925 = vmul.f32 1.0, %v3924
    %v3926 = vrcp.pop %v3904
    %v3927 = vmul.f32 1.0, %v3926
    %v3928 = vrcp.pop %v3905
    %v3929 = vmul.f32 1.0, %v3928
    %v3930 = vrcp.pop %v3906
    %v3931 = vmul.f32 1.0, %v3930
    %v3932 = vrcp.pop %v3907
    %v3933 = vmul.f32 1.0, %v3932
    %v3934 = vrcp.pop %v3908
    %v3935 = vmul.f32 1.0, %v3934
    %v3936 = vrcp.pop %v3909
    %v3937 = vmul.f32 1.0, %v3936
    %v3938 = vrcp.pop %v3910
    %v3939 = vmul.f32 1.0, %v3938
    %v3940 = vrcp.pop %v3911
    %v3941 = vmul.f32 1.0, %v3940
    %v3942 = vrcp.pop %v3912
    %v3943 = vmul.f32 1.0, %v3942
    %v3944 = vrcp.pop %v3913
    %v3945 = vmul.f32 1.0, %v3944
    %v3946 = vld [vmem:[%s12] sm:$0xff]
    %v3947 = vld [vmem:[%s12 + $0x8] sm:$0xff]
    %vm3948 = vcmask 130048
    %v3950 = vsel %vm3948, %v3915, 0
    %v3953 = vsel %vm3948, %v3917, 0
    %v3956 = vsel %vm3948, %v3919, 0
    %v3959 = vsel %vm3948, %v3921, 0
    %v3962 = vsel %vm3948, %v3923, 0
    %v3965 = vsel %vm3948, %v3925, 0
    %v3968 = vsel %vm3948, %v3927, 0
    %v3971 = vsel %vm3948, %v3929, 0
    %v3974 = vsel %vm3948, %v3931, 0
    %v3977 = vsel %vm3948, %v3933, 0
    %v3980 = vsel %vm3948, %v3935, 0
    %v3983 = vsel %vm3948, %v3937, 0
    %v3986 = vsel %vm3948, %v3939, 0
    %v3989 = vsel %vm3948, %v3941, 0
    %v3992 = vsel %vm3948, %v3943, 0
    %v3995 = vsel %vm3948, %v3945, 0
    %3997 = vmatprep.subr.mxu0 0.0
    %3998 = vmatpush1.msra.mxu0 %v3946
    %3999 = vmatprep.subr.mxu0 0.0
    %4000 = vmatpush1.msra.mxu0 %v3947
    %4001 = vmatprep.subr.mxu0 0.0
    %4002 = vmatpush1.msra.mxu0 0.0
    %4003 = vmatprep.subr.mxu0 0.0
    %4004 = vmatpush1.msra.mxu0 0.0
    %4005 = vmatprep.subr.mxu0 0.0
    %4006 = vmatpush1.msra.mxu0 0.0
    %4007 = vmatprep.subr.mxu0 0.0
    %4008 = vmatpush1.msra.mxu0 0.0
    %4009 = vmatprep.subr.mxu0 0.0
    %4010 = vmatpush1.msra.mxu0 0.0
    %4011 = vmatprep.subr.mxu0 0.0
    %4012 = vmatpush1.msra.mxu0 0.0
    %4013 = vmatprep.subr.mxu0 0.0
    %4014 = vmatpush1.msra.mxu0 0.0
    %4015 = vmatprep.subr.mxu0 0.0
    %4016 = vmatpush1.msra.mxu0 0.0
    %4017 = vmatprep.subr.mxu0 0.0
    %4018 = vmatpush1.msra.mxu0 0.0
    %4019 = vmatprep.subr.mxu0 0.0
    %4020 = vmatpush1.msra.mxu0 0.0
    %4021 = vmatprep.subr.mxu0 0.0
    %4022 = vmatpush1.msra.mxu0 0.0
    %4023 = vmatprep.subr.mxu0 0.0
    %4024 = vmatpush1.msra.mxu0 0.0
    %4025 = vmatprep.subr.mxu0 0.0
    %4026 = vmatpush1.msra.mxu0 0.0
    %4027 = vmatprep.subr.mxu0 0.0
    %4028 = vmatpush1.msra.mxu0 0.0
    %4029 = vmatprep.subr.mxu0 0.0
    %4030 = vmatpush1.msra.mxu0 0.0
    %4031 = vmatprep.subr.mxu0 0.0
    %4032 = vmatpush1.msra.mxu0 0.0
    %4033 = vmatprep.subr.mxu0 0.0
    %4034 = vmatpush1.msra.mxu0 0.0
    %4035 = vmatprep.subr.mxu0 0.0
    %4036 = vmatpush1.msra.mxu0 0.0
    %4037 = vmatprep.subr.mxu0 0.0
    %4038 = vmatpush1.msra.mxu0 0.0
    %4039 = vmatprep.subr.mxu0 0.0
    %4040 = vmatpush1.msra.mxu0 0.0
    %4041 = vmatprep.subr.mxu0 0.0
    %4042 = vmatpush1.msra.mxu0 0.0
    %4043 = vmatprep.subr.mxu0 0.0
    %4044 = vmatpush1.msra.mxu0 0.0
    %4045 = vmatprep.subr.mxu0 0.0
    %4046 = vmatpush1.msra.mxu0 0.0
    %4047 = vmatprep.subr.mxu0 0.0
    %4048 = vmatpush1.msra.mxu0 0.0
    %4049 = vmatprep.subr.mxu0 0.0
    %4050 = vmatpush1.msra.mxu0 0.0
    %4051 = vmatprep.subr.mxu0 0.0
    %4052 = vmatpush1.msra.mxu0 0.0
    %4053 = vmatprep.subr.mxu0 0.0
    %4054 = vmatpush1.msra.mxu0 0.0
    %4055 = vmatprep.subr.mxu0 0.0
    %4056 = vmatpush1.msra.mxu0 0.0
    %4057 = vmatprep.subr.mxu0 0.0
    %4058 = vmatpush1.msra.mxu0 0.0
    %4059 = vmatprep.subr.mxu0 0.0
    %4060 = vmatpush1.msra.mxu0 0.0
    %4061 = vmatprep.mubr.f32.mxu0 0.0
    %4062 = vmatmul.mubr.f32.gmra.mrb[0].mxu0 %v3950
    %v4063 = vpop.f32.mrb[0].mxu0
    %v4064 = vadd.f32 0.0, %v4063
    %v4065 = vpop.f32.mrb[0].mxu0
    %4066 = vmatprep.mubr.f32.mxu0 0.0
    %4067 = vmatmul.mubr.f32.gmra.mrb[0].mxu0 %v3953
    %v4068 = vpop.f32.mrb[0].mxu0
    %v4069 = vadd.f32 0.0, %v4068
    %v4070 = vpop.f32.mrb[0].mxu0
    %4071 = vmatprep.mubr.f32.mxu0 0.0
    %4072 = vmatmul.mubr.f32.gmra.mrb[0].mxu0 %v3956
    %v4073 = vpop.f32.mrb[0].mxu0
    %v4074 = vadd.f32 0.0, %v4073
    %v4075 = vpop.f32.mrb[0].mxu0
    %4076 = vmatprep.mubr.f32.mxu0 0.0
    %4077 = vmatmul.mubr.f32.gmra.mrb[0].mxu0 %v3959
    %v4078 = vpop.f32.mrb[0].mxu0
    %v4079 = vadd.f32 0.0, %v4078
    %v4080 = vpop.f32.mrb[0].mxu0
    %4081 = vmatprep.mubr.f32.mxu0 0.0
    %4082 = vmatmul.mubr.f32.gmra.mrb[0].mxu0 %v3962
    %v4083 = vpop.f32.mrb[0].mxu0
    %v4084 = vadd.f32 0.0, %v4083
    %v4085 = vpop.f32.mrb[0].mxu0
    %4086 = vmatprep.mubr.f32.mxu0 0.0
    %4087 = vmatmul.mubr.f32.gmra.mrb[0].mxu0 %v3965
    %v4088 = vpop.f32.mrb[0].mxu0
    %v4089 = vadd.f32 0.0, %v4088
    %v4090 = vpop.f32.mrb[0].mxu0
    %4091 = vmatprep.mubr.f32.mxu0 0.0
    %4092 = vmatmul.mubr.f32.gmra.mrb[0].mxu0 %v3968
    %v4093 = vpop.f32.mrb[0].mxu0
    %v4094 = vadd.f32 0.0, %v4093
    %v4095 = vpop.f32.mrb[0].mxu0
    %4096 = vmatprep.mubr.f32.mxu0 0.0
    %4097 = vmatmul.mubr.f32.gmra.mrb[0].mxu0 %v3971
    %v4098 = vpop.f32.mrb[0].mxu0
    %v4099 = vadd.f32 0.0, %v4098
    %v4100 = vpop.f32.mrb[0].mxu0
    %4101 = vmatprep.mubr.f32.mxu0 0.0
    %4102 = vmatmul.mubr.f32.gmra.mrb[0].mxu0 %v3974
    %v4103 = vpop.f32.mrb[0].mxu0
    %v4104 = vadd.f32 0.0, %v4103
    %v4105 = vpop.f32.mrb[0].mxu0
    %4106 = vmatprep.mubr.f32.mxu0 0.0
    %4107 = vmatmul.mubr.f32.gmra.mrb[0].mxu0 %v3977
    %v4108 = vpop.f32.mrb[0].mxu0
    %v4109 = vadd.f32 0.0, %v4108
    %v4110 = vpop.f32.mrb[0].mxu0
    %4111 = vmatprep.mubr.f32.mxu0 0.0
    %4112 = vmatmul.mubr.f32.gmra.mrb[0].mxu0 %v3980
    %v4113 = vpop.f32.mrb[0].mxu0
    %v4114 = vadd.f32 0.0, %v4113
    %v4115 = vpop.f32.mrb[0].mxu0
    %4116 = vmatprep.mubr.f32.mxu0 0.0
    %4117 = vmatmul.mubr.f32.gmra.mrb[0].mxu0 %v3983
    %v4118 = vpop.f32.mrb[0].mxu0
    %v4119 = vadd.f32 0.0, %v4118
    %v4120 = vpop.f32.mrb[0].mxu0
    %4121 = vmatprep.mubr.f32.mxu0 0.0
    %4122 = vmatmul.mubr.f32.gmra.mrb[0].mxu0 %v3986
    %v4123 = vpop.f32.mrb[0].mxu0
    %v4124 = vadd.f32 0.0, %v4123
    %v4125 = vpop.f32.mrb[0].mxu0
    %4126 = vmatprep.mubr.f32.mxu0 0.0
    %4127 = vmatmul.mubr.f32.gmra.mrb[0].mxu0 %v3989
    %v4128 = vpop.f32.mrb[0].mxu0
    %v4129 = vadd.f32 0.0, %v4128
    %v4130 = vpop.f32.mrb[0].mxu0
    %4131 = vmatprep.mubr.f32.mxu0 0.0
    %4132 = vmatmul.mubr.f32.gmra.mrb[0].mxu0 %v3992
    %v4133 = vpop.f32.mrb[0].mxu0
    %v4134 = vadd.f32 0.0, %v4133
    %v4135 = vpop.f32.mrb[0].mxu0
    %4136 = vmatprep.mubr.f32.mxu0 0.0
    %4137 = vmatmul.mubr.f32.gmra.mrb[0].mxu0 %v3995
    %v4138 = vpop.f32.mrb[0].mxu0
    %v4139 = vadd.f32 0.0, %v4138
    %v4140 = vpop.f32.mrb[0].mxu0
    %4141 = vdwg.mxu0
    %v4142 = vmul.f32 %v2778, %v4064
    %v4143 = vmul.f32 %v2779, %v4069
    %v4144 = vmul.f32 %v2780, %v4074
    %v4145 = vmul.f32 %v2781, %v4079
    %v4146 = vmul.f32 %v2782, %v4084
    %v4147 = vmul.f32 %v2783, %v4089
    %v4148 = vmul.f32 %v2784, %v4094
    %v4149 = vmul.f32 %v2785, %v4099
    %v4150 = vmul.f32 %v2786, %v4104
    %v4151 = vmul.f32 %v2787, %v4109
    %v4152 = vmul.f32 %v2788, %v4114
    %v4153 = vmul.f32 %v2789, %v4119
    %v4154 = vmul.f32 %v2790, %v4124
    %v4155 = vmul.f32 %v2791, %v4129
    %v4156 = vmul.f32 %v2792, %v4134
    %v4157 = vmul.f32 %v2793, %v4139
    %v4158 = vadd.f32 %v4142, %v52
    %v4159 = vadd.f32 %v4143, %v53
    %v4160 = vadd.f32 %v4144, %v54
    %v4161 = vadd.f32 %v4145, %v55
    %v4162 = vadd.f32 %v4146, %v56
    %v4163 = vadd.f32 %v4147, %v57
    %v4164 = vadd.f32 %v4148, %v58
    %v4165 = vadd.f32 %v4149, %v59
    %v4166 = vadd.f32 %v4150, %v60
    %v4167 = vadd.f32 %v4151, %v61
    %v4168 = vadd.f32 %v4152, %v62
    %v4169 = vadd.f32 %v4153, %v63
    %v4170 = vadd.f32 %v4154, %v64
    %v4171 = vadd.f32 %v4155, %v65
    %v4172 = vadd.f32 %v4156, %v66
    %v4173 = vadd.f32 %v4157, %v67
    %v4174 = vmax.f32 %v4158, 0.0
    %v4175 = vmax.f32 %v4159, 0.0
    %v4176 = vmax.f32 %v4160, 0.0
    %v4177 = vmax.f32 %v4161, 0.0
    %v4178 = vmax.f32 %v4162, 0.0
    %v4179 = vmax.f32 %v4163, 0.0
    %v4180 = vmax.f32 %v4164, 0.0
    %v4181 = vmax.f32 %v4165, 0.0
    %v4182 = vmax.f32 %v4166, 0.0
    %v4183 = vmax.f32 %v4167, 0.0
    %v4184 = vmax.f32 %v4168, 0.0
    %v4185 = vmax.f32 %v4169, 0.0
    %v4186 = vmax.f32 %v4170, 0.0
    %v4187 = vmax.f32 %v4171, 0.0
    %v4188 = vmax.f32 %v4172, 0.0
    %v4189 = vmax.f32 %v4173, 0.0
    %4190 = vst.msk [vmem:[#allocation2] sm:$0xff] %vm1072, %v4174
    %4191 = vst.msk [vmem:[#allocation2 + $0x8] sm:$0xff] %vm1072, %v4175
    %4192 = vst.msk [vmem:[#allocation2 + $0x10] sm:$0xff] %vm1072, %v4176
    %4193 = vst.msk [vmem:[#allocation2 + $0x18] sm:$0xff] %vm1072, %v4177
    %4194 = vst.msk [vmem:[#allocation2 + $0x20] sm:$0xff] %vm1072, %v4178
    %4195 = vst.msk [vmem:[#allocation2 + $0x28] sm:$0xff] %vm1072, %v4179
    %4196 = vst.msk [vmem:[#allocation2 + $0x30] sm:$0xff] %vm1072, %v4180
    %4197 = vst.msk [vmem:[#allocation2 + $0x38] sm:$0xff] %vm1072, %v4181
    %4198 = vst.msk [vmem:[#allocation2 + $0x40] sm:$0xff] %vm1072, %v4182
    %4199 = vst.msk [vmem:[#allocation2 + $0x48] sm:$0xff] %vm1072, %v4183
    %4200 = vst.msk [vmem:[#allocation2 + $0x50] sm:$0xff] %vm1072, %v4184
    %4201 = vst.msk [vmem:[#allocation2 + $0x58] sm:$0xff] %vm1072, %v4185
    %4202 = vst.msk [vmem:[#allocation2 + $0x60] sm:$0xff] %vm1072, %v4186
    %4203 = vst.msk [vmem:[#allocation2 + $0x68] sm:$0xff] %vm1072, %v4187
    %4204 = vst.msk [vmem:[#allocation2 + $0x70] sm:$0xff] %vm1072, %v4188
    %4205 = vst.msk [vmem:[#allocation2 + $0x78] sm:$0xff] %vm1072, %v4189
    // Predicated region
    $region62: #{basic_block_forward.1} parent=1 // pred_check
      _
    $region63: #{basic_block_forward.1} parent=1 // pred_check_branch
      %4207 = sbr.rel (0) target = $region65
    $region64: #{basic_block_forward.1} parent=1 // pred_region
      %s4209 = ssub.s32 2048, 2048
      %4210 = vsyncadd [#allocation3], %s4209
      %s4211 = sshll.u32 [#allocation2], 4
      %s4212 = int_to_ptr.vmem [resolvable:$true] %s4211
      %4217 = dma.vmem_to_hbm [thread:$0]  %s4212, 2048, %s15, [#allocation3], 128, 128, 8
    $region65: #{basic_block_forward.1} parent=1 // pred_fallthru
      _
    // Predicated region
    $region66: #{basic_block_forward.1} parent=1 // pred_check
      _
    $region67: #{basic_block_forward.1} parent=1 // pred_check_branch
      %4219 = sbr.rel (0) target = $region69
    $region68: #{basic_block_forward.1} parent=1 // pred_region
      %4220 = dma.done [#allocation3], 2048
    $region69: #{basic_block_forward.1} parent=1 // pred_fallthru
      _
    %4221 = vsyncpa [#allocation3], 1

</llo_original>
